<compile_context>
chip_gen: v7x
topology: tpu7x:2x2x1
jax: 0.10.0
libtpu: 0.0.40
codegen_flags: <defaults>
</compile_context>

<pallas_src>
import math
import jax
import jax.numpy as jnp
from jax.experimental import pallas as pl
from jax.experimental.pallas import tpu as pltpu  # noqa: F401  (TPU backend)


def _round_up(n, m):
    return ((n + m - 1) // m) * m


def _pad2d(a, rows, cols, value=0.0):
    r, c = a.shape
    return jnp.pad(a, ((0, rows - r), (0, cols - c)), constant_values=value)


def _make_fused_kan_kernel(layer_dims, batch, n_acc=2):
    """layer_dims: tuple of (fin, fout, out_pad) per layer (static)."""

    def kernel(*refs):
        x_ref, out_ref = refs[0], refs[-1]
        pref = refs[1:-1]  # 5 refs per layer: t_T, c1_T, c2_T, gamma, beta

        act = x_ref[...].astype(jnp.float32)               # (B, fin0_pad)
        for l, (fin, fout, out_pad) in enumerate(layer_dims):
            t_ref, c1_ref, c2_ref, g_ref, b_ref = pref[5 * l: 5 * l + 5]

            # Out-features on lanes; accumulate over `in` with plain VPU adds.
            # Two interleaved accumulators break the serial dependency chain.
            accs = [jnp.zeros((batch, out_pad), jnp.float32)
                    for _ in range(n_acc)]
            for i in range(fin):                            # static unroll
                xi = act[:, i:i + 1]                        # (B, 1)
                d = xi - t_ref[i:i + 1, :]                  # (B, out_pad)
                term = (c1_ref[i:i + 1, :] * d) * jnp.exp(
                    c2_ref[i:i + 1, :] * (d * d))
                accs[i % n_acc] = accs[i % n_acc] + term
            acc = accs[0]
            for a in accs[1:]:
                acc = acc + a

            # BatchNorm1d, training mode (batch statistics, biased variance).
            # The full, unpadded batch is resident, so the stats are exact.
            mean = jnp.mean(acc, axis=0, keepdims=True)             # (1, out_pad)
            var = jnp.mean((acc - mean) ** 2, axis=0, keepdims=True)
            act = (acc - mean) * jax.lax.rsqrt(var + 1e-5) * g_ref[...] \
                + b_ref[...]

        out_ref[...] = act.astype(out_ref.dtype)

    return kernel


def kan_forward(x, params):
    """Fused forward pass over all KANLinear layers in a single pallas_call."""
    B, fin0 = x.shape
    lane = 128

    fin0_pad = _round_up(fin0, lane)
    x_p = jnp.pad(x.astype(jnp.float32), ((0, 0), (0, fin0_pad - fin0)))

    layer_dims = []
    flat_args = []
    fin = fin0
    for p in params:
        fout, fin_l = p["scale"].shape
        assert fin_l == fin, (fin_l, fin)
        in_pad = _round_up(fin, 8)
        out_pad = _round_up(fout, lane)

        inv_scale = 1.0 / p["scale"]
        # Fold the divide / negation / 0.5 into precomputed coefficients:
        #   w * (-z * exp(-0.5 z^2)) == (c1 * d) * exp(c2 * d^2),  d = x - t
        c1 = -(p["wavelet_weights"] * inv_scale)            # zero pads -> 0
        c2 = -0.5 * inv_scale * inv_scale                   # zero pads -> 0

        def pad_t(a):
            # (fout, fin) -> transposed, zero-padded (in_pad, out_pad):
            # row i of the padded array is the lane-dense per-`out` vector.
            return _pad2d(a.T.astype(jnp.float32), in_pad, out_pad)

        flat_args += [
            pad_t(p["translation"]),
            pad_t(c1),
            pad_t(c2),
            _pad2d(p["bn_gamma"].reshape(1, fout).astype(jnp.float32),
                   1, out_pad, 1.0),
            _pad2d(p["bn_beta"].reshape(1, fout).astype(jnp.float32),
                   1, out_pad, 0.0),
        ]
        layer_dims.append((fin, fout, out_pad))
        fin = fout

    fout_last, out_pad_last = layer_dims[-1][1], layer_dims[-1][2]

    y = pl.pallas_call(
        _make_fused_kan_kernel(tuple(layer_dims), B),
        out_shape=jax.ShapeDtypeStruct((B, out_pad_last), jnp.float32),
    )(x_p, *flat_args)
    return y[:, :fout_last]


def init_kan_params(key, layers_hidden):
    """Deterministic parameter init matching the PyTorch __init__ shapes."""
    params = []
    for in_f, out_f in zip(layers_hidden[:-1], layers_hidden[1:]):
        key, k_wav, k_w1 = jax.random.split(key, 3)
        # kaiming_uniform_(a=sqrt(5)) -> U(-1/sqrt(fan_in), 1/sqrt(fan_in))
        bound = 1.0 / math.sqrt(in_f)
        wavelet_weights = jax.random.uniform(
            k_wav, (out_f, in_f), jnp.float32, minval=-bound, maxval=bound)
        weight1 = jax.random.uniform(   # unused in forward, kept for parity
            k_w1, (out_f, in_f), jnp.float32, minval=-bound, maxval=bound)
        params.append(dict(
            scale=jnp.ones((out_f, in_f), jnp.float32),
            translation=jnp.zeros((out_f, in_f), jnp.float32),
            wavelet_weights=wavelet_weights,
            weight1=weight1,
            bn_gamma=jnp.ones((out_f,), jnp.float32),
            bn_beta=jnp.zeros((out_f,), jnp.float32),
        ))
    return params


def kan_forward_ref(x, params):
    """Pure-JAX reference for sanity checking."""
    for p in params:
        z = (x[:, None, :] - p["translation"][None]) / p["scale"][None]
        dog = -z * jnp.exp(-0.5 * z * z)
        wo = jnp.sum(dog * p["wavelet_weights"][None], axis=2)
        mean = jnp.mean(wo, axis=0, keepdims=True)
        var = jnp.mean((wo - mean) ** 2, axis=0, keepdims=True)
        x = (wo - mean) * jax.lax.rsqrt(var + 1e-5) * p["bn_gamma"][None] \
            + p["bn_beta"][None]
    return x


if __name__ == "__main__":
    layers_hidden = [32, 64, 16]   # KAN([32, 64, 16])
    batch = 8

    key = jax.random.PRNGKey(0)
    key, kx = jax.random.split(key)
    x = jax.random.normal(kx, (batch, layers_hidden[0]), jnp.float32)

    params = init_kan_params(key, layers_hidden)

    out = jax.block_until_ready(kan_forward(x, params))
    ref = jax.block_until_ready(kan_forward_ref(x, params))

    assert out.shape == (batch, layers_hidden[-1]), out.shape
    assert jnp.allclose(out, ref, atol=1e-4, rtol=1e-4), \
        float(jnp.max(jnp.abs(out - ref)))
    print("KERNEL_OK")
</pallas_src>

<mosaic_0001>
module attributes {stable_mosaic.version = 11 : i64} {
  func.func @kernel(%arg0: memref<8x128xf32, #tpu.memory_space<vmem>>, %arg1: memref<32x128xf32, #tpu.memory_space<vmem>>, %arg2: memref<32x128xf32, #tpu.memory_space<vmem>>, %arg3: memref<32x128xf32, #tpu.memory_space<vmem>>, %arg4: memref<1x128xf32, #tpu.memory_space<vmem>>, %arg5: memref<1x128xf32, #tpu.memory_space<vmem>>, %arg6: memref<64x128xf32, #tpu.memory_space<vmem>>, %arg7: memref<64x128xf32, #tpu.memory_space<vmem>>, %arg8: memref<64x128xf32, #tpu.memory_space<vmem>>, %arg9: memref<1x128xf32, #tpu.memory_space<vmem>>, %arg10: memref<1x128xf32, #tpu.memory_space<vmem>>, %arg11: memref<8x128xf32, #tpu.memory_space<vmem>>) attributes {dimension_semantics = [], scalar_prefetch = 0 : i64, scratch_operands = 0 : i64, tpu.core_type = #tpu.core_type<tc>} {
    %c0 = arith.constant 0 : index
    %c0_0 = arith.constant 0 : index
    %0 = vector.load %arg0[%c0, %c0_0] : memref<8x128xf32, #tpu.memory_space<vmem>>, vector<8x128xf32>
    %cst = arith.constant 0.000000e+00 : f32
    %1 = vector.broadcast %cst : f32 to vector<8x128xf32>
    %cst_1 = arith.constant 0.000000e+00 : f32
    %2 = vector.broadcast %cst_1 : f32 to vector<8x128xf32>
    %3 = vector.extract_strided_slice %0 {offsets = [0, 0], sizes = [8, 1], strides = [1, 1]} : vector<8x128xf32> to vector<8x1xf32>
    %c0_2 = arith.constant 0 : index
    %c0_3 = arith.constant 0 : index
    %4 = vector.load %arg1[%c0_2, %c0_3] : memref<32x128xf32, #tpu.memory_space<vmem>>, vector<1x128xf32>
    %5 = vector.broadcast %3 : vector<8x1xf32> to vector<8x128xf32>
    %6 = vector.broadcast %4 : vector<1x128xf32> to vector<8x128xf32>
    %7 = arith.subf %5, %6 : vector<8x128xf32>
    %c0_4 = arith.constant 0 : index
    %c0_5 = arith.constant 0 : index
    %8 = vector.load %arg2[%c0_4, %c0_5] : memref<32x128xf32, #tpu.memory_space<vmem>>, vector<1x128xf32>
    %9 = vector.broadcast %8 : vector<1x128xf32> to vector<8x128xf32>
    %10 = arith.mulf %9, %7 : vector<8x128xf32>
    %c0_6 = arith.constant 0 : index
    %c0_7 = arith.constant 0 : index
    %11 = vector.load %arg3[%c0_6, %c0_7] : memref<32x128xf32, #tpu.memory_space<vmem>>, vector<1x128xf32>
    %12 = arith.mulf %7, %7 : vector<8x128xf32>
    %13 = vector.broadcast %11 : vector<1x128xf32> to vector<8x128xf32>
    %14 = arith.mulf %13, %12 : vector<8x128xf32>
    %15 = math.exp %14 : vector<8x128xf32>
    %16 = arith.mulf %10, %15 : vector<8x128xf32>
    %17 = arith.addf %1, %16 : vector<8x128xf32>
    %18 = vector.extract_strided_slice %0 {offsets = [0, 1], sizes = [8, 1], strides = [1, 1]} : vector<8x128xf32> to vector<8x1xf32>
    %c1 = arith.constant 1 : index
    %c0_8 = arith.constant 0 : index
    %19 = vector.load %arg1[%c1, %c0_8] : memref<32x128xf32, #tpu.memory_space<vmem>>, vector<1x128xf32>
    %20 = vector.broadcast %18 : vector<8x1xf32> to vector<8x128xf32>
    %21 = vector.broadcast %19 : vector<1x128xf32> to vector<8x128xf32>
    %22 = arith.subf %20, %21 : vector<8x128xf32>
    %c1_9 = arith.constant 1 : index
    %c0_10 = arith.constant 0 : index
    %23 = vector.load %arg2[%c1_9, %c0_10] : memref<32x128xf32, #tpu.memory_space<vmem>>, vector<1x128xf32>
    %24 = vector.broadcast %23 : vector<1x128xf32> to vector<8x128xf32>
    %25 = arith.mulf %24, %22 : vector<8x128xf32>
    %c1_11 = arith.constant 1 : index
    %c0_12 = arith.constant 0 : index
    %26 = vector.load %arg3[%c1_11, %c0_12] : memref<32x128xf32, #tpu.memory_space<vmem>>, vector<1x128xf32>
    %27 = arith.mulf %22, %22 : vector<8x128xf32>
    %28 = vector.broadcast %26 : vector<1x128xf32> to vector<8x128xf32>
    %29 = arith.mulf %28, %27 : vector<8x128xf32>
    %30 = math.exp %29 : vector<8x128xf32>
    %31 = arith.mulf %25, %30 : vector<8x128xf32>
    %32 = arith.addf %2, %31 : vector<8x128xf32>
    %33 = vector.extract_strided_slice %0 {offsets = [0, 2], sizes = [8, 1], strides = [1, 1]} : vector<8x128xf32> to vector<8x1xf32>
    %c2 = arith.constant 2 : index
    %c0_13 = arith.constant 0 : index
    %34 = vector.load %arg1[%c2, %c0_13] : memref<32x128xf32, #tpu.memory_space<vmem>>, vector<1x128xf32>
    %35 = vector.broadcast %33 : vector<8x1xf32> to vector<8x128xf32>
    %36 = vector.broadcast %34 : vector<1x128xf32> to vector<8x128xf32>
    %37 = arith.subf %35, %36 : vector<8x128xf32>
    %c2_14 = arith.constant 2 : index
    %c0_15 = arith.constant 0 : index
    %38 = vector.load %arg2[%c2_14, %c0_15] : memref<32x128xf32, #tpu.memory_space<vmem>>, vector<1x128xf32>
    %39 = vector.broadcast %38 : vector<1x128xf32> to vector<8x128xf32>
    %40 = arith.mulf %39, %37 : vector<8x128xf32>
    %c2_16 = arith.constant 2 : index
    %c0_17 = arith.constant 0 : index
    %41 = vector.load %arg3[%c2_16, %c0_17] : memref<32x128xf32, #tpu.memory_space<vmem>>, vector<1x128xf32>
    %42 = arith.mulf %37, %37 : vector<8x128xf32>
    %43 = vector.broadcast %41 : vector<1x128xf32> to vector<8x128xf32>
    %44 = arith.mulf %43, %42 : vector<8x128xf32>
    %45 = math.exp %44 : vector<8x128xf32>
    %46 = arith.mulf %40, %45 : vector<8x128xf32>
    %47 = arith.addf %17, %46 : vector<8x128xf32>
    %48 = vector.extract_strided_slice %0 {offsets = [0, 3], sizes = [8, 1], strides = [1, 1]} : vector<8x128xf32> to vector<8x1xf32>
    %c3 = arith.constant 3 : index
    %c0_18 = arith.constant 0 : index
    %49 = vector.load %arg1[%c3, %c0_18] : memref<32x128xf32, #tpu.memory_space<vmem>>, vector<1x128xf32>
    %50 = vector.broadcast %48 : vector<8x1xf32> to vector<8x128xf32>
    %51 = vector.broadcast %49 : vector<1x128xf32> to vector<8x128xf32>
    %52 = arith.subf %50, %51 : vector<8x128xf32>
    %c3_19 = arith.constant 3 : index
    %c0_20 = arith.constant 0 : index
    %53 = vector.load %arg2[%c3_19, %c0_20] : memref<32x128xf32, #tpu.memory_space<vmem>>, vector<1x128xf32>
    %54 = vector.broadcast %53 : vector<1x128xf32> to vector<8x128xf32>
    %55 = arith.mulf %54, %52 : vector<8x128xf32>
    %c3_21 = arith.constant 3 : index
    %c0_22 = arith.constant 0 : index
    %56 = vector.load %arg3[%c3_21, %c0_22] : memref<32x128xf32, #tpu.memory_space<vmem>>, vector<1x128xf32>
    %57 = arith.mulf %52, %52 : vector<8x128xf32>
    %58 = vector.broadcast %56 : vector<1x128xf32> to vector<8x128xf32>
    %59 = arith.mulf %58, %57 : vector<8x128xf32>
    %60 = math.exp %59 : vector<8x128xf32>
    %61 = arith.mulf %55, %60 : vector<8x128xf32>
    %62 = arith.addf %32, %61 : vector<8x128xf32>
    %63 = vector.extract_strided_slice %0 {offsets = [0, 4], sizes = [8, 1], strides = [1, 1]} : vector<8x128xf32> to vector<8x1xf32>
    %c4 = arith.constant 4 : index
    %c0_23 = arith.constant 0 : index
    %64 = vector.load %arg1[%c4, %c0_23] : memref<32x128xf32, #tpu.memory_space<vmem>>, vector<1x128xf32>
    %65 = vector.broadcast %63 : vector<8x1xf32> to vector<8x128xf32>
    %66 = vector.broadcast %64 : vector<1x128xf32> to vector<8x128xf32>
    %67 = arith.subf %65, %66 : vector<8x128xf32>
    %c4_24 = arith.constant 4 : index
    %c0_25 = arith.constant 0 : index
    %68 = vector.load %arg2[%c4_24, %c0_25] : memref<32x128xf32, #tpu.memory_space<vmem>>, vector<1x128xf32>
    %69 = vector.broadcast %68 : vector<1x128xf32> to vector<8x128xf32>
    %70 = arith.mulf %69, %67 : vector<8x128xf32>
    %c4_26 = arith.constant 4 : index
    %c0_27 = arith.constant 0 : index
    %71 = vector.load %arg3[%c4_26, %c0_27] : memref<32x128xf32, #tpu.memory_space<vmem>>, vector<1x128xf32>
    %72 = arith.mulf %67, %67 : vector<8x128xf32>
    %73 = vector.broadcast %71 : vector<1x128xf32> to vector<8x128xf32>
    %74 = arith.mulf %73, %72 : vector<8x128xf32>
    %75 = math.exp %74 : vector<8x128xf32>
    %76 = arith.mulf %70, %75 : vector<8x128xf32>
    %77 = arith.addf %47, %76 : vector<8x128xf32>
    %78 = vector.extract_strided_slice %0 {offsets = [0, 5], sizes = [8, 1], strides = [1, 1]} : vector<8x128xf32> to vector<8x1xf32>
    %c5 = arith.constant 5 : index
    %c0_28 = arith.constant 0 : index
    %79 = vector.load %arg1[%c5, %c0_28] : memref<32x128xf32, #tpu.memory_space<vmem>>, vector<1x128xf32>
    %80 = vector.broadcast %78 : vector<8x1xf32> to vector<8x128xf32>
    %81 = vector.broadcast %79 : vector<1x128xf32> to vector<8x128xf32>
    %82 = arith.subf %80, %81 : vector<8x128xf32>
    %c5_29 = arith.constant 5 : index
    %c0_30 = arith.constant 0 : index
    %83 = vector.load %arg2[%c5_29, %c0_30] : memref<32x128xf32, #tpu.memory_space<vmem>>, vector<1x128xf32>
    %84 = vector.broadcast %83 : vector<1x128xf32> to vector<8x128xf32>
    %85 = arith.mulf %84, %82 : vector<8x128xf32>
    %c5_31 = arith.constant 5 : index
    %c0_32 = arith.constant 0 : index
    %86 = vector.load %arg3[%c5_31, %c0_32] : memref<32x128xf32, #tpu.memory_space<vmem>>, vector<1x128xf32>
    %87 = arith.mulf %82, %82 : vector<8x128xf32>
    %88 = vector.broadcast %86 : vector<1x128xf32> to vector<8x128xf32>
    %89 = arith.mulf %88, %87 : vector<8x128xf32>
    %90 = math.exp %89 : vector<8x128xf32>
    %91 = arith.mulf %85, %90 : vector<8x128xf32>
    %92 = arith.addf %62, %91 : vector<8x128xf32>
    %93 = vector.extract_strided_slice %0 {offsets = [0, 6], sizes = [8, 1], strides = [1, 1]} : vector<8x128xf32> to vector<8x1xf32>
    %c6 = arith.constant 6 : index
    %c0_33 = arith.constant 0 : index
    %94 = vector.load %arg1[%c6, %c0_33] : memref<32x128xf32, #tpu.memory_space<vmem>>, vector<1x128xf32>
    %95 = vector.broadcast %93 : vector<8x1xf32> to vector<8x128xf32>
    %96 = vector.broadcast %94 : vector<1x128xf32> to vector<8x128xf32>
    %97 = arith.subf %95, %96 : vector<8x128xf32>
    %c6_34 = arith.constant 6 : index
    %c0_35 = arith.constant 0 : index
    %98 = vector.load %arg2[%c6_34, %c0_35] : memref<32x128xf32, #tpu.memory_space<vmem>>, vector<1x128xf32>
    %99 = vector.broadcast %98 : vector<1x128xf32> to vector<8x128xf32>
    %100 = arith.mulf %99, %97 : vector<8x128xf32>
    %c6_36 = arith.constant 6 : index
    %c0_37 = arith.constant 0 : index
    %101 = vector.load %arg3[%c6_36, %c0_37] : memref<32x128xf32, #tpu.memory_space<vmem>>, vector<1x128xf32>
    %102 = arith.mulf %97, %97 : vector<8x128xf32>
    %103 = vector.broadcast %101 : vector<1x128xf32> to vector<8x128xf32>
    %104 = arith.mulf %103, %102 : vector<8x128xf32>
    %105 = math.exp %104 : vector<8x128xf32>
    %106 = arith.mulf %100, %105 : vector<8x128xf32>
    %107 = arith.addf %77, %106 : vector<8x128xf32>
    %108 = vector.extract_strided_slice %0 {offsets = [0, 7], sizes = [8, 1], strides = [1, 1]} : vector<8x128xf32> to vector<8x1xf32>
    %c7 = arith.constant 7 : index
    %c0_38 = arith.constant 0 : index
    %109 = vector.load %arg1[%c7, %c0_38] : memref<32x128xf32, #tpu.memory_space<vmem>>, vector<1x128xf32>
    %110 = vector.broadcast %108 : vector<8x1xf32> to vector<8x128xf32>
    %111 = vector.broadcast %109 : vector<1x128xf32> to vector<8x128xf32>
    %112 = arith.subf %110, %111 : vector<8x128xf32>
    %c7_39 = arith.constant 7 : index
    %c0_40 = arith.constant 0 : index
    %113 = vector.load %arg2[%c7_39, %c0_40] : memref<32x128xf32, #tpu.memory_space<vmem>>, vector<1x128xf32>
    %114 = vector.broadcast %113 : vector<1x128xf32> to vector<8x128xf32>
    %115 = arith.mulf %114, %112 : vector<8x128xf32>
    %c7_41 = arith.constant 7 : index
    %c0_42 = arith.constant 0 : index
    %116 = vector.load %arg3[%c7_41, %c0_42] : memref<32x128xf32, #tpu.memory_space<vmem>>, vector<1x128xf32>
    %117 = arith.mulf %112, %112 : vector<8x128xf32>
    %118 = vector.broadcast %116 : vector<1x128xf32> to vector<8x128xf32>
    %119 = arith.mulf %118, %117 : vector<8x128xf32>
    %120 = math.exp %119 : vector<8x128xf32>
    %121 = arith.mulf %115, %120 : vector<8x128xf32>
    %122 = arith.addf %92, %121 : vector<8x128xf32>
    %123 = vector.extract_strided_slice %0 {offsets = [0, 8], sizes = [8, 1], strides = [1, 1]} : vector<8x128xf32> to vector<8x1xf32>
    %c8 = arith.constant 8 : index
    %c0_43 = arith.constant 0 : index
    %124 = vector.load %arg1[%c8, %c0_43] : memref<32x128xf32, #tpu.memory_space<vmem>>, vector<1x128xf32>
    %125 = vector.broadcast %123 : vector<8x1xf32> to vector<8x128xf32>
    %126 = vector.broadcast %124 : vector<1x128xf32> to vector<8x128xf32>
    %127 = arith.subf %125, %126 : vector<8x128xf32>
    %c8_44 = arith.constant 8 : index
    %c0_45 = arith.constant 0 : index
    %128 = vector.load %arg2[%c8_44, %c0_45] : memref<32x128xf32, #tpu.memory_space<vmem>>, vector<1x128xf32>
    %129 = vector.broadcast %128 : vector<1x128xf32> to vector<8x128xf32>
    %130 = arith.mulf %129, %127 : vector<8x128xf32>
    %c8_46 = arith.constant 8 : index
    %c0_47 = arith.constant 0 : index
    %131 = vector.load %arg3[%c8_46, %c0_47] : memref<32x128xf32, #tpu.memory_space<vmem>>, vector<1x128xf32>
    %132 = arith.mulf %127, %127 : vector<8x128xf32>
    %133 = vector.broadcast %131 : vector<1x128xf32> to vector<8x128xf32>
    %134 = arith.mulf %133, %132 : vector<8x128xf32>
    %135 = math.exp %134 : vector<8x128xf32>
    %136 = arith.mulf %130, %135 : vector<8x128xf32>
    %137 = arith.addf %107, %136 : vector<8x128xf32>
    %138 = vector.extract_strided_slice %0 {offsets = [0, 9], sizes = [8, 1], strides = [1, 1]} : vector<8x128xf32> to vector<8x1xf32>
    %c9 = arith.constant 9 : index
    %c0_48 = arith.constant 0 : index
    %139 = vector.load %arg1[%c9, %c0_48] : memref<32x128xf32, #tpu.memory_space<vmem>>, vector<1x128xf32>
    %140 = vector.broadcast %138 : vector<8x1xf32> to vector<8x128xf32>
    %141 = vector.broadcast %139 : vector<1x128xf32> to vector<8x128xf32>
    %142 = arith.subf %140, %141 : vector<8x128xf32>
    %c9_49 = arith.constant 9 : index
    %c0_50 = arith.constant 0 : index
    %143 = vector.load %arg2[%c9_49, %c0_50] : memref<32x128xf32, #tpu.memory_space<vmem>>, vector<1x128xf32>
    %144 = vector.broadcast %143 : vector<1x128xf32> to vector<8x128xf32>
    %145 = arith.mulf %144, %142 : vector<8x128xf32>
    %c9_51 = arith.constant 9 : index
    %c0_52 = arith.constant 0 : index
    %146 = vector.load %arg3[%c9_51, %c0_52] : memref<32x128xf32, #tpu.memory_space<vmem>>, vector<1x128xf32>
    %147 = arith.mulf %142, %142 : vector<8x128xf32>
    %148 = vector.broadcast %146 : vector<1x128xf32> to vector<8x128xf32>
    %149 = arith.mulf %148, %147 : vector<8x128xf32>
    %150 = math.exp %149 : vector<8x128xf32>
    %151 = arith.mulf %145, %150 : vector<8x128xf32>
    %152 = arith.addf %122, %151 : vector<8x128xf32>
    %153 = vector.extract_strided_slice %0 {offsets = [0, 10], sizes = [8, 1], strides = [1, 1]} : vector<8x128xf32> to vector<8x1xf32>
    %c10 = arith.constant 10 : index
    %c0_53 = arith.constant 0 : index
    %154 = vector.load %arg1[%c10, %c0_53] : memref<32x128xf32, #tpu.memory_space<vmem>>, vector<1x128xf32>
    %155 = vector.broadcast %153 : vector<8x1xf32> to vector<8x128xf32>
    %156 = vector.broadcast %154 : vector<1x128xf32> to vector<8x128xf32>
    %157 = arith.subf %155, %156 : vector<8x128xf32>
    %c10_54 = arith.constant 10 : index
    %c0_55 = arith.constant 0 : index
    %158 = vector.load %arg2[%c10_54, %c0_55] : memref<32x128xf32, #tpu.memory_space<vmem>>, vector<1x128xf32>
    %159 = vector.broadcast %158 : vector<1x128xf32> to vector<8x128xf32>
    %160 = arith.mulf %159, %157 : vector<8x128xf32>
    %c10_56 = arith.constant 10 : index
    %c0_57 = arith.constant 0 : index
    %161 = vector.load %arg3[%c10_56, %c0_57] : memref<32x128xf32, #tpu.memory_space<vmem>>, vector<1x128xf32>
    %162 = arith.mulf %157, %157 : vector<8x128xf32>
    %163 = vector.broadcast %161 : vector<1x128xf32> to vector<8x128xf32>
    %164 = arith.mulf %163, %162 : vector<8x128xf32>
    %165 = math.exp %164 : vector<8x128xf32>
    %166 = arith.mulf %160, %165 : vector<8x128xf32>
    %167 = arith.addf %137, %166 : vector<8x128xf32>
    %168 = vector.extract_strided_slice %0 {offsets = [0, 11], sizes = [8, 1], strides = [1, 1]} : vector<8x128xf32> to vector<8x1xf32>
    %c11 = arith.constant 11 : index
    %c0_58 = arith.constant 0 : index
    %169 = vector.load %arg1[%c11, %c0_58] : memref<32x128xf32, #tpu.memory_space<vmem>>, vector<1x128xf32>
    %170 = vector.broadcast %168 : vector<8x1xf32> to vector<8x128xf32>
    %171 = vector.broadcast %169 : vector<1x128xf32> to vector<8x128xf32>
    %172 = arith.subf %170, %171 : vector<8x128xf32>
    %c11_59 = arith.constant 11 : index
    %c0_60 = arith.constant 0 : index
    %173 = vector.load %arg2[%c11_59, %c0_60] : memref<32x128xf32, #tpu.memory_space<vmem>>, vector<1x128xf32>
    %174 = vector.broadcast %173 : vector<1x128xf32> to vector<8x128xf32>
    %175 = arith.mulf %174, %172 : vector<8x128xf32>
    %c11_61 = arith.constant 11 : index
    %c0_62 = arith.constant 0 : index
    %176 = vector.load %arg3[%c11_61, %c0_62] : memref<32x128xf32, #tpu.memory_space<vmem>>, vector<1x128xf32>
    %177 = arith.mulf %172, %172 : vector<8x128xf32>
    %178 = vector.broadcast %176 : vector<1x128xf32> to vector<8x128xf32>
    %179 = arith.mulf %178, %177 : vector<8x128xf32>
    %180 = math.exp %179 : vector<8x128xf32>
    %181 = arith.mulf %175, %180 : vector<8x128xf32>
    %182 = arith.addf %152, %181 : vector<8x128xf32>
    %183 = vector.extract_strided_slice %0 {offsets = [0, 12], sizes = [8, 1], strides = [1, 1]} : vector<8x128xf32> to vector<8x1xf32>
    %c12 = arith.constant 12 : index
    %c0_63 = arith.constant 0 : index
    %184 = vector.load %arg1[%c12, %c0_63] : memref<32x128xf32, #tpu.memory_space<vmem>>, vector<1x128xf32>
    %185 = vector.broadcast %183 : vector<8x1xf32> to vector<8x128xf32>
    %186 = vector.broadcast %184 : vector<1x128xf32> to vector<8x128xf32>
    %187 = arith.subf %185, %186 : vector<8x128xf32>
    %c12_64 = arith.constant 12 : index
    %c0_65 = arith.constant 0 : index
    %188 = vector.load %arg2[%c12_64, %c0_65] : memref<32x128xf32, #tpu.memory_space<vmem>>, vector<1x128xf32>
    %189 = vector.broadcast %188 : vector<1x128xf32> to vector<8x128xf32>
    %190 = arith.mulf %189, %187 : vector<8x128xf32>
    %c12_66 = arith.constant 12 : index
    %c0_67 = arith.constant 0 : index
    %191 = vector.load %arg3[%c12_66, %c0_67] : memref<32x128xf32, #tpu.memory_space<vmem>>, vector<1x128xf32>
    %192 = arith.mulf %187, %187 : vector<8x128xf32>
    %193 = vector.broadcast %191 : vector<1x128xf32> to vector<8x128xf32>
    %194 = arith.mulf %193, %192 : vector<8x128xf32>
    %195 = math.exp %194 : vector<8x128xf32>
    %196 = arith.mulf %190, %195 : vector<8x128xf32>
    %197 = arith.addf %167, %196 : vector<8x128xf32>
    %198 = vector.extract_strided_slice %0 {offsets = [0, 13], sizes = [8, 1], strides = [1, 1]} : vector<8x128xf32> to vector<8x1xf32>
    %c13 = arith.constant 13 : index
    %c0_68 = arith.constant 0 : index
    %199 = vector.load %arg1[%c13, %c0_68] : memref<32x128xf32, #tpu.memory_space<vmem>>, vector<1x128xf32>
    %200 = vector.broadcast %198 : vector<8x1xf32> to vector<8x128xf32>
    %201 = vector.broadcast %199 : vector<1x128xf32> to vector<8x128xf32>
    %202 = arith.subf %200, %201 : vector<8x128xf32>
    %c13_69 = arith.constant 13 : index
    %c0_70 = arith.constant 0 : index
    %203 = vector.load %arg2[%c13_69, %c0_70] : memref<32x128xf32, #tpu.memory_space<vmem>>, vector<1x128xf32>
    %204 = vector.broadcast %203 : vector<1x128xf32> to vector<8x128xf32>
    %205 = arith.mulf %204, %202 : vector<8x128xf32>
    %c13_71 = arith.constant 13 : index
    %c0_72 = arith.constant 0 : index
    %206 = vector.load %arg3[%c13_71, %c0_72] : memref<32x128xf32, #tpu.memory_space<vmem>>, vector<1x128xf32>
    %207 = arith.mulf %202, %202 : vector<8x128xf32>
    %208 = vector.broadcast %206 : vector<1x128xf32> to vector<8x128xf32>
    %209 = arith.mulf %208, %207 : vector<8x128xf32>
    %210 = math.exp %209 : vector<8x128xf32>
    %211 = arith.mulf %205, %210 : vector<8x128xf32>
    %212 = arith.addf %182, %211 : vector<8x128xf32>
    %213 = vector.extract_strided_slice %0 {offsets = [0, 14], sizes = [8, 1], strides = [1, 1]} : vector<8x128xf32> to vector<8x1xf32>
    %c14 = arith.constant 14 : index
    %c0_73 = arith.constant 0 : index
    %214 = vector.load %arg1[%c14, %c0_73] : memref<32x128xf32, #tpu.memory_space<vmem>>, vector<1x128xf32>
    %215 = vector.broadcast %213 : vector<8x1xf32> to vector<8x128xf32>
    %216 = vector.broadcast %214 : vector<1x128xf32> to vector<8x128xf32>
    %217 = arith.subf %215, %216 : vector<8x128xf32>
    %c14_74 = arith.constant 14 : index
    %c0_75 = arith.constant 0 : index
    %218 = vector.load %arg2[%c14_74, %c0_75] : memref<32x128xf32, #tpu.memory_space<vmem>>, vector<1x128xf32>
    %219 = vector.broadcast %218 : vector<1x128xf32> to vector<8x128xf32>
    %220 = arith.mulf %219, %217 : vector<8x128xf32>
    %c14_76 = arith.constant 14 : index
    %c0_77 = arith.constant 0 : index
    %221 = vector.load %arg3[%c14_76, %c0_77] : memref<32x128xf32, #tpu.memory_space<vmem>>, vector<1x128xf32>
    %222 = arith.mulf %217, %217 : vector<8x128xf32>
    %223 = vector.broadcast %221 : vector<1x128xf32> to vector<8x128xf32>
    %224 = arith.mulf %223, %222 : vector<8x128xf32>
    %225 = math.exp %224 : vector<8x128xf32>
    %226 = arith.mulf %220, %225 : vector<8x128xf32>
    %227 = arith.addf %197, %226 : vector<8x128xf32>
    %228 = vector.extract_strided_slice %0 {offsets = [0, 15], sizes = [8, 1], strides = [1, 1]} : vector<8x128xf32> to vector<8x1xf32>
    %c15 = arith.constant 15 : index
    %c0_78 = arith.constant 0 : index
    %229 = vector.load %arg1[%c15, %c0_78] : memref<32x128xf32, #tpu.memory_space<vmem>>, vector<1x128xf32>
    %230 = vector.broadcast %228 : vector<8x1xf32> to vector<8x128xf32>
    %231 = vector.broadcast %229 : vector<1x128xf32> to vector<8x128xf32>
    %232 = arith.subf %230, %231 : vector<8x128xf32>
    %c15_79 = arith.constant 15 : index
    %c0_80 = arith.constant 0 : index
    %233 = vector.load %arg2[%c15_79, %c0_80] : memref<32x128xf32, #tpu.memory_space<vmem>>, vector<1x128xf32>
    %234 = vector.broadcast %233 : vector<1x128xf32> to vector<8x128xf32>
    %235 = arith.mulf %234, %232 : vector<8x128xf32>
    %c15_81 = arith.constant 15 : index
    %c0_82 = arith.constant 0 : index
    %236 = vector.load %arg3[%c15_81, %c0_82] : memref<32x128xf32, #tpu.memory_space<vmem>>, vector<1x128xf32>
    %237 = arith.mulf %232, %232 : vector<8x128xf32>
    %238 = vector.broadcast %236 : vector<1x128xf32> to vector<8x128xf32>
    %239 = arith.mulf %238, %237 : vector<8x128xf32>
    %240 = math.exp %239 : vector<8x128xf32>
    %241 = arith.mulf %235, %240 : vector<8x128xf32>
    %242 = arith.addf %212, %241 : vector<8x128xf32>
    %243 = vector.extract_strided_slice %0 {offsets = [0, 16], sizes = [8, 1], strides = [1, 1]} : vector<8x128xf32> to vector<8x1xf32>
    %c16 = arith.constant 16 : index
    %c0_83 = arith.constant 0 : index
    %244 = vector.load %arg1[%c16, %c0_83] : memref<32x128xf32, #tpu.memory_space<vmem>>, vector<1x128xf32>
    %245 = vector.broadcast %243 : vector<8x1xf32> to vector<8x128xf32>
    %246 = vector.broadcast %244 : vector<1x128xf32> to vector<8x128xf32>
    %247 = arith.subf %245, %246 : vector<8x128xf32>
    %c16_84 = arith.constant 16 : index
    %c0_85 = arith.constant 0 : index
    %248 = vector.load %arg2[%c16_84, %c0_85] : memref<32x128xf32, #tpu.memory_space<vmem>>, vector<1x128xf32>
    %249 = vector.broadcast %248 : vector<1x128xf32> to vector<8x128xf32>
    %250 = arith.mulf %249, %247 : vector<8x128xf32>
    %c16_86 = arith.constant 16 : index
    %c0_87 = arith.constant 0 : index
    %251 = vector.load %arg3[%c16_86, %c0_87] : memref<32x128xf32, #tpu.memory_space<vmem>>, vector<1x128xf32>
    %252 = arith.mulf %247, %247 : vector<8x128xf32>
    %253 = vector.broadcast %251 : vector<1x128xf32> to vector<8x128xf32>
    %254 = arith.mulf %253, %252 : vector<8x128xf32>
    %255 = math.exp %254 : vector<8x128xf32>
    %256 = arith.mulf %250, %255 : vector<8x128xf32>
    %257 = arith.addf %227, %256 : vector<8x128xf32>
    %258 = vector.extract_strided_slice %0 {offsets = [0, 17], sizes = [8, 1], strides = [1, 1]} : vector<8x128xf32> to vector<8x1xf32>
    %c17 = arith.constant 17 : index
    %c0_88 = arith.constant 0 : index
    %259 = vector.load %arg1[%c17, %c0_88] : memref<32x128xf32, #tpu.memory_space<vmem>>, vector<1x128xf32>
    %260 = vector.broadcast %258 : vector<8x1xf32> to vector<8x128xf32>
    %261 = vector.broadcast %259 : vector<1x128xf32> to vector<8x128xf32>
    %262 = arith.subf %260, %261 : vector<8x128xf32>
    %c17_89 = arith.constant 17 : index
    %c0_90 = arith.constant 0 : index
    %263 = vector.load %arg2[%c17_89, %c0_90] : memref<32x128xf32, #tpu.memory_space<vmem>>, vector<1x128xf32>
    %264 = vector.broadcast %263 : vector<1x128xf32> to vector<8x128xf32>
    %265 = arith.mulf %264, %262 : vector<8x128xf32>
    %c17_91 = arith.constant 17 : index
    %c0_92 = arith.constant 0 : index
    %266 = vector.load %arg3[%c17_91, %c0_92] : memref<32x128xf32, #tpu.memory_space<vmem>>, vector<1x128xf32>
    %267 = arith.mulf %262, %262 : vector<8x128xf32>
    %268 = vector.broadcast %266 : vector<1x128xf32> to vector<8x128xf32>
    %269 = arith.mulf %268, %267 : vector<8x128xf32>
    %270 = math.exp %269 : vector<8x128xf32>
    %271 = arith.mulf %265, %270 : vector<8x128xf32>
    %272 = arith.addf %242, %271 : vector<8x128xf32>
    %273 = vector.extract_strided_slice %0 {offsets = [0, 18], sizes = [8, 1], strides = [1, 1]} : vector<8x128xf32> to vector<8x1xf32>
    %c18 = arith.constant 18 : index
    %c0_93 = arith.constant 0 : index
    %274 = vector.load %arg1[%c18, %c0_93] : memref<32x128xf32, #tpu.memory_space<vmem>>, vector<1x128xf32>
    %275 = vector.broadcast %273 : vector<8x1xf32> to vector<8x128xf32>
    %276 = vector.broadcast %274 : vector<1x128xf32> to vector<8x128xf32>
    %277 = arith.subf %275, %276 : vector<8x128xf32>
    %c18_94 = arith.constant 18 : index
    %c0_95 = arith.constant 0 : index
    %278 = vector.load %arg2[%c18_94, %c0_95] : memref<32x128xf32, #tpu.memory_space<vmem>>, vector<1x128xf32>
    %279 = vector.broadcast %278 : vector<1x128xf32> to vector<8x128xf32>
    %280 = arith.mulf %279, %277 : vector<8x128xf32>
    %c18_96 = arith.constant 18 : index
    %c0_97 = arith.constant 0 : index
    %281 = vector.load %arg3[%c18_96, %c0_97] : memref<32x128xf32, #tpu.memory_space<vmem>>, vector<1x128xf32>
    %282 = arith.mulf %277, %277 : vector<8x128xf32>
    %283 = vector.broadcast %281 : vector<1x128xf32> to vector<8x128xf32>
    %284 = arith.mulf %283, %282 : vector<8x128xf32>
    %285 = math.exp %284 : vector<8x128xf32>
    %286 = arith.mulf %280, %285 : vector<8x128xf32>
    %287 = arith.addf %257, %286 : vector<8x128xf32>
    %288 = vector.extract_strided_slice %0 {offsets = [0, 19], sizes = [8, 1], strides = [1, 1]} : vector<8x128xf32> to vector<8x1xf32>
    %c19 = arith.constant 19 : index
    %c0_98 = arith.constant 0 : index
    %289 = vector.load %arg1[%c19, %c0_98] : memref<32x128xf32, #tpu.memory_space<vmem>>, vector<1x128xf32>
    %290 = vector.broadcast %288 : vector<8x1xf32> to vector<8x128xf32>
    %291 = vector.broadcast %289 : vector<1x128xf32> to vector<8x128xf32>
    %292 = arith.subf %290, %291 : vector<8x128xf32>
    %c19_99 = arith.constant 19 : index
    %c0_100 = arith.constant 0 : index
    %293 = vector.load %arg2[%c19_99, %c0_100] : memref<32x128xf32, #tpu.memory_space<vmem>>, vector<1x128xf32>
    %294 = vector.broadcast %293 : vector<1x128xf32> to vector<8x128xf32>
    %295 = arith.mulf %294, %292 : vector<8x128xf32>
    %c19_101 = arith.constant 19 : index
    %c0_102 = arith.constant 0 : index
    %296 = vector.load %arg3[%c19_101, %c0_102] : memref<32x128xf32, #tpu.memory_space<vmem>>, vector<1x128xf32>
    %297 = arith.mulf %292, %292 : vector<8x128xf32>
    %298 = vector.broadcast %296 : vector<1x128xf32> to vector<8x128xf32>
    %299 = arith.mulf %298, %297 : vector<8x128xf32>
    %300 = math.exp %299 : vector<8x128xf32>
    %301 = arith.mulf %295, %300 : vector<8x128xf32>
    %302 = arith.addf %272, %301 : vector<8x128xf32>
    %303 = vector.extract_strided_slice %0 {offsets = [0, 20], sizes = [8, 1], strides = [1, 1]} : vector<8x128xf32> to vector<8x1xf32>
    %c20 = arith.constant 20 : index
    %c0_103 = arith.constant 0 : index
    %304 = vector.load %arg1[%c20, %c0_103] : memref<32x128xf32, #tpu.memory_space<vmem>>, vector<1x128xf32>
    %305 = vector.broadcast %303 : vector<8x1xf32> to vector<8x128xf32>
    %306 = vector.broadcast %304 : vector<1x128xf32> to vector<8x128xf32>
    %307 = arith.subf %305, %306 : vector<8x128xf32>
    %c20_104 = arith.constant 20 : index
    %c0_105 = arith.constant 0 : index
    %308 = vector.load %arg2[%c20_104, %c0_105] : memref<32x128xf32, #tpu.memory_space<vmem>>, vector<1x128xf32>
    %309 = vector.broadcast %308 : vector<1x128xf32> to vector<8x128xf32>
    %310 = arith.mulf %309, %307 : vector<8x128xf32>
    %c20_106 = arith.constant 20 : index
    %c0_107 = arith.constant 0 : index
    %311 = vector.load %arg3[%c20_106, %c0_107] : memref<32x128xf32, #tpu.memory_space<vmem>>, vector<1x128xf32>
    %312 = arith.mulf %307, %307 : vector<8x128xf32>
    %313 = vector.broadcast %311 : vector<1x128xf32> to vector<8x128xf32>
    %314 = arith.mulf %313, %312 : vector<8x128xf32>
    %315 = math.exp %314 : vector<8x128xf32>
    %316 = arith.mulf %310, %315 : vector<8x128xf32>
    %317 = arith.addf %287, %316 : vector<8x128xf32>
    %318 = vector.extract_strided_slice %0 {offsets = [0, 21], sizes = [8, 1], strides = [1, 1]} : vector<8x128xf32> to vector<8x1xf32>
    %c21 = arith.constant 21 : index
    %c0_108 = arith.constant 0 : index
    %319 = vector.load %arg1[%c21, %c0_108] : memref<32x128xf32, #tpu.memory_space<vmem>>, vector<1x128xf32>
    %320 = vector.broadcast %318 : vector<8x1xf32> to vector<8x128xf32>
    %321 = vector.broadcast %319 : vector<1x128xf32> to vector<8x128xf32>
    %322 = arith.subf %320, %321 : vector<8x128xf32>
    %c21_109 = arith.constant 21 : index
    %c0_110 = arith.constant 0 : index
    %323 = vector.load %arg2[%c21_109, %c0_110] : memref<32x128xf32, #tpu.memory_space<vmem>>, vector<1x128xf32>
    %324 = vector.broadcast %323 : vector<1x128xf32> to vector<8x128xf32>
    %325 = arith.mulf %324, %322 : vector<8x128xf32>
    %c21_111 = arith.constant 21 : index
    %c0_112 = arith.constant 0 : index
    %326 = vector.load %arg3[%c21_111, %c0_112] : memref<32x128xf32, #tpu.memory_space<vmem>>, vector<1x128xf32>
    %327 = arith.mulf %322, %322 : vector<8x128xf32>
    %328 = vector.broadcast %326 : vector<1x128xf32> to vector<8x128xf32>
    %329 = arith.mulf %328, %327 : vector<8x128xf32>
    %330 = math.exp %329 : vector<8x128xf32>
    %331 = arith.mulf %325, %330 : vector<8x128xf32>
    %332 = arith.addf %302, %331 : vector<8x128xf32>
    %333 = vector.extract_strided_slice %0 {offsets = [0, 22], sizes = [8, 1], strides = [1, 1]} : vector<8x128xf32> to vector<8x1xf32>
    %c22 = arith.constant 22 : index
    %c0_113 = arith.constant 0 : index
    %334 = vector.load %arg1[%c22, %c0_113] : memref<32x128xf32, #tpu.memory_space<vmem>>, vector<1x128xf32>
    %335 = vector.broadcast %333 : vector<8x1xf32> to vector<8x128xf32>
    %336 = vector.broadcast %334 : vector<1x128xf32> to vector<8x128xf32>
    %337 = arith.subf %335, %336 : vector<8x128xf32>
    %c22_114 = arith.constant 22 : index
    %c0_115 = arith.constant 0 : index
    %338 = vector.load %arg2[%c22_114, %c0_115] : memref<32x128xf32, #tpu.memory_space<vmem>>, vector<1x128xf32>
    %339 = vector.broadcast %338 : vector<1x128xf32> to vector<8x128xf32>
    %340 = arith.mulf %339, %337 : vector<8x128xf32>
    %c22_116 = arith.constant 22 : index
    %c0_117 = arith.constant 0 : index
    %341 = vector.load %arg3[%c22_116, %c0_117] : memref<32x128xf32, #tpu.memory_space<vmem>>, vector<1x128xf32>
    %342 = arith.mulf %337, %337 : vector<8x128xf32>
    %343 = vector.broadcast %341 : vector<1x128xf32> to vector<8x128xf32>
    %344 = arith.mulf %343, %342 : vector<8x128xf32>
    %345 = math.exp %344 : vector<8x128xf32>
    %346 = arith.mulf %340, %345 : vector<8x128xf32>
    %347 = arith.addf %317, %346 : vector<8x128xf32>
    %348 = vector.extract_strided_slice %0 {offsets = [0, 23], sizes = [8, 1], strides = [1, 1]} : vector<8x128xf32> to vector<8x1xf32>
    %c23 = arith.constant 23 : index
    %c0_118 = arith.constant 0 : index
    %349 = vector.load %arg1[%c23, %c0_118] : memref<32x128xf32, #tpu.memory_space<vmem>>, vector<1x128xf32>
    %350 = vector.broadcast %348 : vector<8x1xf32> to vector<8x128xf32>
    %351 = vector.broadcast %349 : vector<1x128xf32> to vector<8x128xf32>
    %352 = arith.subf %350, %351 : vector<8x128xf32>
    %c23_119 = arith.constant 23 : index
    %c0_120 = arith.constant 0 : index
    %353 = vector.load %arg2[%c23_119, %c0_120] : memref<32x128xf32, #tpu.memory_space<vmem>>, vector<1x128xf32>
    %354 = vector.broadcast %353 : vector<1x128xf32> to vector<8x128xf32>
    %355 = arith.mulf %354, %352 : vector<8x128xf32>
    %c23_121 = arith.constant 23 : index
    %c0_122 = arith.constant 0 : index
    %356 = vector.load %arg3[%c23_121, %c0_122] : memref<32x128xf32, #tpu.memory_space<vmem>>, vector<1x128xf32>
    %357 = arith.mulf %352, %352 : vector<8x128xf32>
    %358 = vector.broadcast %356 : vector<1x128xf32> to vector<8x128xf32>
    %359 = arith.mulf %358, %357 : vector<8x128xf32>
    %360 = math.exp %359 : vector<8x128xf32>
    %361 = arith.mulf %355, %360 : vector<8x128xf32>
    %362 = arith.addf %332, %361 : vector<8x128xf32>
    %363 = vector.extract_strided_slice %0 {offsets = [0, 24], sizes = [8, 1], strides = [1, 1]} : vector<8x128xf32> to vector<8x1xf32>
    %c24 = arith.constant 24 : index
    %c0_123 = arith.constant 0 : index
    %364 = vector.load %arg1[%c24, %c0_123] : memref<32x128xf32, #tpu.memory_space<vmem>>, vector<1x128xf32>
    %365 = vector.broadcast %363 : vector<8x1xf32> to vector<8x128xf32>
    %366 = vector.broadcast %364 : vector<1x128xf32> to vector<8x128xf32>
    %367 = arith.subf %365, %366 : vector<8x128xf32>
    %c24_124 = arith.constant 24 : index
    %c0_125 = arith.constant 0 : index
    %368 = vector.load %arg2[%c24_124, %c0_125] : memref<32x128xf32, #tpu.memory_space<vmem>>, vector<1x128xf32>
    %369 = vector.broadcast %368 : vector<1x128xf32> to vector<8x128xf32>
    %370 = arith.mulf %369, %367 : vector<8x128xf32>
    %c24_126 = arith.constant 24 : index
    %c0_127 = arith.constant 0 : index
    %371 = vector.load %arg3[%c24_126, %c0_127] : memref<32x128xf32, #tpu.memory_space<vmem>>, vector<1x128xf32>
    %372 = arith.mulf %367, %367 : vector<8x128xf32>
    %373 = vector.broadcast %371 : vector<1x128xf32> to vector<8x128xf32>
    %374 = arith.mulf %373, %372 : vector<8x128xf32>
    %375 = math.exp %374 : vector<8x128xf32>
    %376 = arith.mulf %370, %375 : vector<8x128xf32>
    %377 = arith.addf %347, %376 : vector<8x128xf32>
    %378 = vector.extract_strided_slice %0 {offsets = [0, 25], sizes = [8, 1], strides = [1, 1]} : vector<8x128xf32> to vector<8x1xf32>
    %c25 = arith.constant 25 : index
    %c0_128 = arith.constant 0 : index
    %379 = vector.load %arg1[%c25, %c0_128] : memref<32x128xf32, #tpu.memory_space<vmem>>, vector<1x128xf32>
    %380 = vector.broadcast %378 : vector<8x1xf32> to vector<8x128xf32>
    %381 = vector.broadcast %379 : vector<1x128xf32> to vector<8x128xf32>
    %382 = arith.subf %380, %381 : vector<8x128xf32>
    %c25_129 = arith.constant 25 : index
    %c0_130 = arith.constant 0 : index
    %383 = vector.load %arg2[%c25_129, %c0_130] : memref<32x128xf32, #tpu.memory_space<vmem>>, vector<1x128xf32>
    %384 = vector.broadcast %383 : vector<1x128xf32> to vector<8x128xf32>
    %385 = arith.mulf %384, %382 : vector<8x128xf32>
    %c25_131 = arith.constant 25 : index
    %c0_132 = arith.constant 0 : index
    %386 = vector.load %arg3[%c25_131, %c0_132] : memref<32x128xf32, #tpu.memory_space<vmem>>, vector<1x128xf32>
    %387 = arith.mulf %382, %382 : vector<8x128xf32>
    %388 = vector.broadcast %386 : vector<1x128xf32> to vector<8x128xf32>
    %389 = arith.mulf %388, %387 : vector<8x128xf32>
    %390 = math.exp %389 : vector<8x128xf32>
    %391 = arith.mulf %385, %390 : vector<8x128xf32>
    %392 = arith.addf %362, %391 : vector<8x128xf32>
    %393 = vector.extract_strided_slice %0 {offsets = [0, 26], sizes = [8, 1], strides = [1, 1]} : vector<8x128xf32> to vector<8x1xf32>
    %c26 = arith.constant 26 : index
    %c0_133 = arith.constant 0 : index
    %394 = vector.load %arg1[%c26, %c0_133] : memref<32x128xf32, #tpu.memory_space<vmem>>, vector<1x128xf32>
    %395 = vector.broadcast %393 : vector<8x1xf32> to vector<8x128xf32>
    %396 = vector.broadcast %394 : vector<1x128xf32> to vector<8x128xf32>
    %397 = arith.subf %395, %396 : vector<8x128xf32>
    %c26_134 = arith.constant 26 : index
    %c0_135 = arith.constant 0 : index
    %398 = vector.load %arg2[%c26_134, %c0_135] : memref<32x128xf32, #tpu.memory_space<vmem>>, vector<1x128xf32>
    %399 = vector.broadcast %398 : vector<1x128xf32> to vector<8x128xf32>
    %400 = arith.mulf %399, %397 : vector<8x128xf32>
    %c26_136 = arith.constant 26 : index
    %c0_137 = arith.constant 0 : index
    %401 = vector.load %arg3[%c26_136, %c0_137] : memref<32x128xf32, #tpu.memory_space<vmem>>, vector<1x128xf32>
    %402 = arith.mulf %397, %397 : vector<8x128xf32>
    %403 = vector.broadcast %401 : vector<1x128xf32> to vector<8x128xf32>
    %404 = arith.mulf %403, %402 : vector<8x128xf32>
    %405 = math.exp %404 : vector<8x128xf32>
    %406 = arith.mulf %400, %405 : vector<8x128xf32>
    %407 = arith.addf %377, %406 : vector<8x128xf32>
    %408 = vector.extract_strided_slice %0 {offsets = [0, 27], sizes = [8, 1], strides = [1, 1]} : vector<8x128xf32> to vector<8x1xf32>
    %c27 = arith.constant 27 : index
    %c0_138 = arith.constant 0 : index
    %409 = vector.load %arg1[%c27, %c0_138] : memref<32x128xf32, #tpu.memory_space<vmem>>, vector<1x128xf32>
    %410 = vector.broadcast %408 : vector<8x1xf32> to vector<8x128xf32>
    %411 = vector.broadcast %409 : vector<1x128xf32> to vector<8x128xf32>
    %412 = arith.subf %410, %411 : vector<8x128xf32>
    %c27_139 = arith.constant 27 : index
    %c0_140 = arith.constant 0 : index
    %413 = vector.load %arg2[%c27_139, %c0_140] : memref<32x128xf32, #tpu.memory_space<vmem>>, vector<1x128xf32>
    %414 = vector.broadcast %413 : vector<1x128xf32> to vector<8x128xf32>
    %415 = arith.mulf %414, %412 : vector<8x128xf32>
    %c27_141 = arith.constant 27 : index
    %c0_142 = arith.constant 0 : index
    %416 = vector.load %arg3[%c27_141, %c0_142] : memref<32x128xf32, #tpu.memory_space<vmem>>, vector<1x128xf32>
    %417 = arith.mulf %412, %412 : vector<8x128xf32>
    %418 = vector.broadcast %416 : vector<1x128xf32> to vector<8x128xf32>
    %419 = arith.mulf %418, %417 : vector<8x128xf32>
    %420 = math.exp %419 : vector<8x128xf32>
    %421 = arith.mulf %415, %420 : vector<8x128xf32>
    %422 = arith.addf %392, %421 : vector<8x128xf32>
    %423 = vector.extract_strided_slice %0 {offsets = [0, 28], sizes = [8, 1], strides = [1, 1]} : vector<8x128xf32> to vector<8x1xf32>
    %c28 = arith.constant 28 : index
    %c0_143 = arith.constant 0 : index
    %424 = vector.load %arg1[%c28, %c0_143] : memref<32x128xf32, #tpu.memory_space<vmem>>, vector<1x128xf32>
    %425 = vector.broadcast %423 : vector<8x1xf32> to vector<8x128xf32>
    %426 = vector.broadcast %424 : vector<1x128xf32> to vector<8x128xf32>
    %427 = arith.subf %425, %426 : vector<8x128xf32>
    %c28_144 = arith.constant 28 : index
    %c0_145 = arith.constant 0 : index
    %428 = vector.load %arg2[%c28_144, %c0_145] : memref<32x128xf32, #tpu.memory_space<vmem>>, vector<1x128xf32>
    %429 = vector.broadcast %428 : vector<1x128xf32> to vector<8x128xf32>
    %430 = arith.mulf %429, %427 : vector<8x128xf32>
    %c28_146 = arith.constant 28 : index
    %c0_147 = arith.constant 0 : index
    %431 = vector.load %arg3[%c28_146, %c0_147] : memref<32x128xf32, #tpu.memory_space<vmem>>, vector<1x128xf32>
    %432 = arith.mulf %427, %427 : vector<8x128xf32>
    %433 = vector.broadcast %431 : vector<1x128xf32> to vector<8x128xf32>
    %434 = arith.mulf %433, %432 : vector<8x128xf32>
    %435 = math.exp %434 : vector<8x128xf32>
    %436 = arith.mulf %430, %435 : vector<8x128xf32>
    %437 = arith.addf %407, %436 : vector<8x128xf32>
    %438 = vector.extract_strided_slice %0 {offsets = [0, 29], sizes = [8, 1], strides = [1, 1]} : vector<8x128xf32> to vector<8x1xf32>
    %c29 = arith.constant 29 : index
    %c0_148 = arith.constant 0 : index
    %439 = vector.load %arg1[%c29, %c0_148] : memref<32x128xf32, #tpu.memory_space<vmem>>, vector<1x128xf32>
    %440 = vector.broadcast %438 : vector<8x1xf32> to vector<8x128xf32>
    %441 = vector.broadcast %439 : vector<1x128xf32> to vector<8x128xf32>
    %442 = arith.subf %440, %441 : vector<8x128xf32>
    %c29_149 = arith.constant 29 : index
    %c0_150 = arith.constant 0 : index
    %443 = vector.load %arg2[%c29_149, %c0_150] : memref<32x128xf32, #tpu.memory_space<vmem>>, vector<1x128xf32>
    %444 = vector.broadcast %443 : vector<1x128xf32> to vector<8x128xf32>
    %445 = arith.mulf %444, %442 : vector<8x128xf32>
    %c29_151 = arith.constant 29 : index
    %c0_152 = arith.constant 0 : index
    %446 = vector.load %arg3[%c29_151, %c0_152] : memref<32x128xf32, #tpu.memory_space<vmem>>, vector<1x128xf32>
    %447 = arith.mulf %442, %442 : vector<8x128xf32>
    %448 = vector.broadcast %446 : vector<1x128xf32> to vector<8x128xf32>
    %449 = arith.mulf %448, %447 : vector<8x128xf32>
    %450 = math.exp %449 : vector<8x128xf32>
    %451 = arith.mulf %445, %450 : vector<8x128xf32>
    %452 = arith.addf %422, %451 : vector<8x128xf32>
    %453 = vector.extract_strided_slice %0 {offsets = [0, 30], sizes = [8, 1], strides = [1, 1]} : vector<8x128xf32> to vector<8x1xf32>
    %c30 = arith.constant 30 : index
    %c0_153 = arith.constant 0 : index
    %454 = vector.load %arg1[%c30, %c0_153] : memref<32x128xf32, #tpu.memory_space<vmem>>, vector<1x128xf32>
    %455 = vector.broadcast %453 : vector<8x1xf32> to vector<8x128xf32>
    %456 = vector.broadcast %454 : vector<1x128xf32> to vector<8x128xf32>
    %457 = arith.subf %455, %456 : vector<8x128xf32>
    %c30_154 = arith.constant 30 : index
    %c0_155 = arith.constant 0 : index
    %458 = vector.load %arg2[%c30_154, %c0_155] : memref<32x128xf32, #tpu.memory_space<vmem>>, vector<1x128xf32>
    %459 = vector.broadcast %458 : vector<1x128xf32> to vector<8x128xf32>
    %460 = arith.mulf %459, %457 : vector<8x128xf32>
    %c30_156 = arith.constant 30 : index
    %c0_157 = arith.constant 0 : index
    %461 = vector.load %arg3[%c30_156, %c0_157] : memref<32x128xf32, #tpu.memory_space<vmem>>, vector<1x128xf32>
    %462 = arith.mulf %457, %457 : vector<8x128xf32>
    %463 = vector.broadcast %461 : vector<1x128xf32> to vector<8x128xf32>
    %464 = arith.mulf %463, %462 : vector<8x128xf32>
    %465 = math.exp %464 : vector<8x128xf32>
    %466 = arith.mulf %460, %465 : vector<8x128xf32>
    %467 = arith.addf %437, %466 : vector<8x128xf32>
    %468 = vector.extract_strided_slice %0 {offsets = [0, 31], sizes = [8, 1], strides = [1, 1]} : vector<8x128xf32> to vector<8x1xf32>
    %c31 = arith.constant 31 : index
    %c0_158 = arith.constant 0 : index
    %469 = vector.load %arg1[%c31, %c0_158] : memref<32x128xf32, #tpu.memory_space<vmem>>, vector<1x128xf32>
    %470 = vector.broadcast %468 : vector<8x1xf32> to vector<8x128xf32>
    %471 = vector.broadcast %469 : vector<1x128xf32> to vector<8x128xf32>
    %472 = arith.subf %470, %471 : vector<8x128xf32>
    %c31_159 = arith.constant 31 : index
    %c0_160 = arith.constant 0 : index
    %473 = vector.load %arg2[%c31_159, %c0_160] : memref<32x128xf32, #tpu.memory_space<vmem>>, vector<1x128xf32>
    %474 = vector.broadcast %473 : vector<1x128xf32> to vector<8x128xf32>
    %475 = arith.mulf %474, %472 : vector<8x128xf32>
    %c31_161 = arith.constant 31 : index
    %c0_162 = arith.constant 0 : index
    %476 = vector.load %arg3[%c31_161, %c0_162] : memref<32x128xf32, #tpu.memory_space<vmem>>, vector<1x128xf32>
    %477 = arith.mulf %472, %472 : vector<8x128xf32>
    %478 = vector.broadcast %476 : vector<1x128xf32> to vector<8x128xf32>
    %479 = arith.mulf %478, %477 : vector<8x128xf32>
    %480 = math.exp %479 : vector<8x128xf32>
    %481 = arith.mulf %475, %480 : vector<8x128xf32>
    %482 = arith.addf %452, %481 : vector<8x128xf32>
    %483 = arith.addf %467, %482 : vector<8x128xf32>
    %cst_163 = arith.constant dense<0.000000e+00> : vector<128xf32>
    %484 = vector.multi_reduction <add>, %483, %cst_163 [0] : vector<8x128xf32> to vector<128xf32>
    %485 = vector.shape_cast %484 : vector<128xf32> to vector<1x128xf32>
    %cst_164 = arith.constant 8.000000e+00 : f32
    %486 = vector.broadcast %cst_164 : f32 to vector<1x128xf32>
    %487 = arith.divf %485, %486 : vector<1x128xf32>
    %488 = vector.broadcast %487 : vector<1x128xf32> to vector<8x128xf32>
    %489 = arith.subf %483, %488 : vector<8x128xf32>
    %490 = arith.mulf %489, %489 : vector<8x128xf32>
    %cst_165 = arith.constant dense<0.000000e+00> : vector<128xf32>
    %491 = vector.multi_reduction <add>, %490, %cst_165 [0] : vector<8x128xf32> to vector<128xf32>
    %492 = vector.shape_cast %491 : vector<128xf32> to vector<1x128xf32>
    %cst_166 = arith.constant 8.000000e+00 : f32
    %493 = vector.broadcast %cst_166 : f32 to vector<1x128xf32>
    %494 = arith.divf %492, %493 : vector<1x128xf32>
    %495 = vector.broadcast %487 : vector<1x128xf32> to vector<8x128xf32>
    %496 = arith.subf %483, %495 : vector<8x128xf32>
    %cst_167 = arith.constant 9.99999974E-6 : f32
    %497 = vector.broadcast %cst_167 : f32 to vector<1x128xf32>
    %498 = arith.addf %494, %497 : vector<1x128xf32>
    %499 = math.rsqrt %498 : vector<1x128xf32>
    %500 = vector.broadcast %499 : vector<1x128xf32> to vector<8x128xf32>
    %501 = arith.mulf %496, %500 : vector<8x128xf32>
    %c0_168 = arith.constant 0 : index
    %c0_169 = arith.constant 0 : index
    %502 = vector.load %arg4[%c0_168, %c0_169] : memref<1x128xf32, #tpu.memory_space<vmem>>, vector<1x128xf32>
    %503 = vector.broadcast %502 : vector<1x128xf32> to vector<8x128xf32>
    %504 = arith.mulf %501, %503 : vector<8x128xf32>
    %c0_170 = arith.constant 0 : index
    %c0_171 = arith.constant 0 : index
    %505 = vector.load %arg5[%c0_170, %c0_171] : memref<1x128xf32, #tpu.memory_space<vmem>>, vector<1x128xf32>
    %506 = vector.broadcast %505 : vector<1x128xf32> to vector<8x128xf32>
    %507 = arith.addf %504, %506 : vector<8x128xf32>
    %cst_172 = arith.constant 0.000000e+00 : f32
    %508 = vector.broadcast %cst_172 : f32 to vector<8x128xf32>
    %cst_173 = arith.constant 0.000000e+00 : f32
    %509 = vector.broadcast %cst_173 : f32 to vector<8x128xf32>
    %510 = vector.extract_strided_slice %507 {offsets = [0, 0], sizes = [8, 1], strides = [1, 1]} : vector<8x128xf32> to vector<8x1xf32>
    %c0_174 = arith.constant 0 : index
    %c0_175 = arith.constant 0 : index
    %511 = vector.load %arg6[%c0_174, %c0_175] : memref<64x128xf32, #tpu.memory_space<vmem>>, vector<1x128xf32>
    %512 = vector.broadcast %510 : vector<8x1xf32> to vector<8x128xf32>
    %513 = vector.broadcast %511 : vector<1x128xf32> to vector<8x128xf32>
    %514 = arith.subf %512, %513 : vector<8x128xf32>
    %c0_176 = arith.constant 0 : index
    %c0_177 = arith.constant 0 : index
    %515 = vector.load %arg7[%c0_176, %c0_177] : memref<64x128xf32, #tpu.memory_space<vmem>>, vector<1x128xf32>
    %516 = vector.broadcast %515 : vector<1x128xf32> to vector<8x128xf32>
    %517 = arith.mulf %516, %514 : vector<8x128xf32>
    %c0_178 = arith.constant 0 : index
    %c0_179 = arith.constant 0 : index
    %518 = vector.load %arg8[%c0_178, %c0_179] : memref<64x128xf32, #tpu.memory_space<vmem>>, vector<1x128xf32>
    %519 = arith.mulf %514, %514 : vector<8x128xf32>
    %520 = vector.broadcast %518 : vector<1x128xf32> to vector<8x128xf32>
    %521 = arith.mulf %520, %519 : vector<8x128xf32>
    %522 = math.exp %521 : vector<8x128xf32>
    %523 = arith.mulf %517, %522 : vector<8x128xf32>
    %524 = arith.addf %508, %523 : vector<8x128xf32>
    %525 = vector.extract_strided_slice %507 {offsets = [0, 1], sizes = [8, 1], strides = [1, 1]} : vector<8x128xf32> to vector<8x1xf32>
    %c1_180 = arith.constant 1 : index
    %c0_181 = arith.constant 0 : index
    %526 = vector.load %arg6[%c1_180, %c0_181] : memref<64x128xf32, #tpu.memory_space<vmem>>, vector<1x128xf32>
    %527 = vector.broadcast %525 : vector<8x1xf32> to vector<8x128xf32>
    %528 = vector.broadcast %526 : vector<1x128xf32> to vector<8x128xf32>
    %529 = arith.subf %527, %528 : vector<8x128xf32>
    %c1_182 = arith.constant 1 : index
    %c0_183 = arith.constant 0 : index
    %530 = vector.load %arg7[%c1_182, %c0_183] : memref<64x128xf32, #tpu.memory_space<vmem>>, vector<1x128xf32>
    %531 = vector.broadcast %530 : vector<1x128xf32> to vector<8x128xf32>
    %532 = arith.mulf %531, %529 : vector<8x128xf32>
    %c1_184 = arith.constant 1 : index
    %c0_185 = arith.constant 0 : index
    %533 = vector.load %arg8[%c1_184, %c0_185] : memref<64x128xf32, #tpu.memory_space<vmem>>, vector<1x128xf32>
    %534 = arith.mulf %529, %529 : vector<8x128xf32>
    %535 = vector.broadcast %533 : vector<1x128xf32> to vector<8x128xf32>
    %536 = arith.mulf %535, %534 : vector<8x128xf32>
    %537 = math.exp %536 : vector<8x128xf32>
    %538 = arith.mulf %532, %537 : vector<8x128xf32>
    %539 = arith.addf %509, %538 : vector<8x128xf32>
    %540 = vector.extract_strided_slice %507 {offsets = [0, 2], sizes = [8, 1], strides = [1, 1]} : vector<8x128xf32> to vector<8x1xf32>
    %c2_186 = arith.constant 2 : index
    %c0_187 = arith.constant 0 : index
    %541 = vector.load %arg6[%c2_186, %c0_187] : memref<64x128xf32, #tpu.memory_space<vmem>>, vector<1x128xf32>
    %542 = vector.broadcast %540 : vector<8x1xf32> to vector<8x128xf32>
    %543 = vector.broadcast %541 : vector<1x128xf32> to vector<8x128xf32>
    %544 = arith.subf %542, %543 : vector<8x128xf32>
    %c2_188 = arith.constant 2 : index
    %c0_189 = arith.constant 0 : index
    %545 = vector.load %arg7[%c2_188, %c0_189] : memref<64x128xf32, #tpu.memory_space<vmem>>, vector<1x128xf32>
    %546 = vector.broadcast %545 : vector<1x128xf32> to vector<8x128xf32>
    %547 = arith.mulf %546, %544 : vector<8x128xf32>
    %c2_190 = arith.constant 2 : index
    %c0_191 = arith.constant 0 : index
    %548 = vector.load %arg8[%c2_190, %c0_191] : memref<64x128xf32, #tpu.memory_space<vmem>>, vector<1x128xf32>
    %549 = arith.mulf %544, %544 : vector<8x128xf32>
    %550 = vector.broadcast %548 : vector<1x128xf32> to vector<8x128xf32>
    %551 = arith.mulf %550, %549 : vector<8x128xf32>
    %552 = math.exp %551 : vector<8x128xf32>
    %553 = arith.mulf %547, %552 : vector<8x128xf32>
    %554 = arith.addf %524, %553 : vector<8x128xf32>
    %555 = vector.extract_strided_slice %507 {offsets = [0, 3], sizes = [8, 1], strides = [1, 1]} : vector<8x128xf32> to vector<8x1xf32>
    %c3_192 = arith.constant 3 : index
    %c0_193 = arith.constant 0 : index
    %556 = vector.load %arg6[%c3_192, %c0_193] : memref<64x128xf32, #tpu.memory_space<vmem>>, vector<1x128xf32>
    %557 = vector.broadcast %555 : vector<8x1xf32> to vector<8x128xf32>
    %558 = vector.broadcast %556 : vector<1x128xf32> to vector<8x128xf32>
    %559 = arith.subf %557, %558 : vector<8x128xf32>
    %c3_194 = arith.constant 3 : index
    %c0_195 = arith.constant 0 : index
    %560 = vector.load %arg7[%c3_194, %c0_195] : memref<64x128xf32, #tpu.memory_space<vmem>>, vector<1x128xf32>
    %561 = vector.broadcast %560 : vector<1x128xf32> to vector<8x128xf32>
    %562 = arith.mulf %561, %559 : vector<8x128xf32>
    %c3_196 = arith.constant 3 : index
    %c0_197 = arith.constant 0 : index
    %563 = vector.load %arg8[%c3_196, %c0_197] : memref<64x128xf32, #tpu.memory_space<vmem>>, vector<1x128xf32>
    %564 = arith.mulf %559, %559 : vector<8x128xf32>
    %565 = vector.broadcast %563 : vector<1x128xf32> to vector<8x128xf32>
    %566 = arith.mulf %565, %564 : vector<8x128xf32>
    %567 = math.exp %566 : vector<8x128xf32>
    %568 = arith.mulf %562, %567 : vector<8x128xf32>
    %569 = arith.addf %539, %568 : vector<8x128xf32>
    %570 = vector.extract_strided_slice %507 {offsets = [0, 4], sizes = [8, 1], strides = [1, 1]} : vector<8x128xf32> to vector<8x1xf32>
    %c4_198 = arith.constant 4 : index
    %c0_199 = arith.constant 0 : index
    %571 = vector.load %arg6[%c4_198, %c0_199] : memref<64x128xf32, #tpu.memory_space<vmem>>, vector<1x128xf32>
    %572 = vector.broadcast %570 : vector<8x1xf32> to vector<8x128xf32>
    %573 = vector.broadcast %571 : vector<1x128xf32> to vector<8x128xf32>
    %574 = arith.subf %572, %573 : vector<8x128xf32>
    %c4_200 = arith.constant 4 : index
    %c0_201 = arith.constant 0 : index
    %575 = vector.load %arg7[%c4_200, %c0_201] : memref<64x128xf32, #tpu.memory_space<vmem>>, vector<1x128xf32>
    %576 = vector.broadcast %575 : vector<1x128xf32> to vector<8x128xf32>
    %577 = arith.mulf %576, %574 : vector<8x128xf32>
    %c4_202 = arith.constant 4 : index
    %c0_203 = arith.constant 0 : index
    %578 = vector.load %arg8[%c4_202, %c0_203] : memref<64x128xf32, #tpu.memory_space<vmem>>, vector<1x128xf32>
    %579 = arith.mulf %574, %574 : vector<8x128xf32>
    %580 = vector.broadcast %578 : vector<1x128xf32> to vector<8x128xf32>
    %581 = arith.mulf %580, %579 : vector<8x128xf32>
    %582 = math.exp %581 : vector<8x128xf32>
    %583 = arith.mulf %577, %582 : vector<8x128xf32>
    %584 = arith.addf %554, %583 : vector<8x128xf32>
    %585 = vector.extract_strided_slice %507 {offsets = [0, 5], sizes = [8, 1], strides = [1, 1]} : vector<8x128xf32> to vector<8x1xf32>
    %c5_204 = arith.constant 5 : index
    %c0_205 = arith.constant 0 : index
    %586 = vector.load %arg6[%c5_204, %c0_205] : memref<64x128xf32, #tpu.memory_space<vmem>>, vector<1x128xf32>
    %587 = vector.broadcast %585 : vector<8x1xf32> to vector<8x128xf32>
    %588 = vector.broadcast %586 : vector<1x128xf32> to vector<8x128xf32>
    %589 = arith.subf %587, %588 : vector<8x128xf32>
    %c5_206 = arith.constant 5 : index
    %c0_207 = arith.constant 0 : index
    %590 = vector.load %arg7[%c5_206, %c0_207] : memref<64x128xf32, #tpu.memory_space<vmem>>, vector<1x128xf32>
    %591 = vector.broadcast %590 : vector<1x128xf32> to vector<8x128xf32>
    %592 = arith.mulf %591, %589 : vector<8x128xf32>
    %c5_208 = arith.constant 5 : index
    %c0_209 = arith.constant 0 : index
    %593 = vector.load %arg8[%c5_208, %c0_209] : memref<64x128xf32, #tpu.memory_space<vmem>>, vector<1x128xf32>
    %594 = arith.mulf %589, %589 : vector<8x128xf32>
    %595 = vector.broadcast %593 : vector<1x128xf32> to vector<8x128xf32>
    %596 = arith.mulf %595, %594 : vector<8x128xf32>
    %597 = math.exp %596 : vector<8x128xf32>
    %598 = arith.mulf %592, %597 : vector<8x128xf32>
    %599 = arith.addf %569, %598 : vector<8x128xf32>
    %600 = vector.extract_strided_slice %507 {offsets = [0, 6], sizes = [8, 1], strides = [1, 1]} : vector<8x128xf32> to vector<8x1xf32>
    %c6_210 = arith.constant 6 : index
    %c0_211 = arith.constant 0 : index
    %601 = vector.load %arg6[%c6_210, %c0_211] : memref<64x128xf32, #tpu.memory_space<vmem>>, vector<1x128xf32>
    %602 = vector.broadcast %600 : vector<8x1xf32> to vector<8x128xf32>
    %603 = vector.broadcast %601 : vector<1x128xf32> to vector<8x128xf32>
    %604 = arith.subf %602, %603 : vector<8x128xf32>
    %c6_212 = arith.constant 6 : index
    %c0_213 = arith.constant 0 : index
    %605 = vector.load %arg7[%c6_212, %c0_213] : memref<64x128xf32, #tpu.memory_space<vmem>>, vector<1x128xf32>
    %606 = vector.broadcast %605 : vector<1x128xf32> to vector<8x128xf32>
    %607 = arith.mulf %606, %604 : vector<8x128xf32>
    %c6_214 = arith.constant 6 : index
    %c0_215 = arith.constant 0 : index
    %608 = vector.load %arg8[%c6_214, %c0_215] : memref<64x128xf32, #tpu.memory_space<vmem>>, vector<1x128xf32>
    %609 = arith.mulf %604, %604 : vector<8x128xf32>
    %610 = vector.broadcast %608 : vector<1x128xf32> to vector<8x128xf32>
    %611 = arith.mulf %610, %609 : vector<8x128xf32>
    %612 = math.exp %611 : vector<8x128xf32>
    %613 = arith.mulf %607, %612 : vector<8x128xf32>
    %614 = arith.addf %584, %613 : vector<8x128xf32>
    %615 = vector.extract_strided_slice %507 {offsets = [0, 7], sizes = [8, 1], strides = [1, 1]} : vector<8x128xf32> to vector<8x1xf32>
    %c7_216 = arith.constant 7 : index
    %c0_217 = arith.constant 0 : index
    %616 = vector.load %arg6[%c7_216, %c0_217] : memref<64x128xf32, #tpu.memory_space<vmem>>, vector<1x128xf32>
    %617 = vector.broadcast %615 : vector<8x1xf32> to vector<8x128xf32>
    %618 = vector.broadcast %616 : vector<1x128xf32> to vector<8x128xf32>
    %619 = arith.subf %617, %618 : vector<8x128xf32>
    %c7_218 = arith.constant 7 : index
    %c0_219 = arith.constant 0 : index
    %620 = vector.load %arg7[%c7_218, %c0_219] : memref<64x128xf32, #tpu.memory_space<vmem>>, vector<1x128xf32>
    %621 = vector.broadcast %620 : vector<1x128xf32> to vector<8x128xf32>
    %622 = arith.mulf %621, %619 : vector<8x128xf32>
    %c7_220 = arith.constant 7 : index
    %c0_221 = arith.constant 0 : index
    %623 = vector.load %arg8[%c7_220, %c0_221] : memref<64x128xf32, #tpu.memory_space<vmem>>, vector<1x128xf32>
    %624 = arith.mulf %619, %619 : vector<8x128xf32>
    %625 = vector.broadcast %623 : vector<1x128xf32> to vector<8x128xf32>
    %626 = arith.mulf %625, %624 : vector<8x128xf32>
    %627 = math.exp %626 : vector<8x128xf32>
    %628 = arith.mulf %622, %627 : vector<8x128xf32>
    %629 = arith.addf %599, %628 : vector<8x128xf32>
    %630 = vector.extract_strided_slice %507 {offsets = [0, 8], sizes = [8, 1], strides = [1, 1]} : vector<8x128xf32> to vector<8x1xf32>
    %c8_222 = arith.constant 8 : index
    %c0_223 = arith.constant 0 : index
    %631 = vector.load %arg6[%c8_222, %c0_223] : memref<64x128xf32, #tpu.memory_space<vmem>>, vector<1x128xf32>
    %632 = vector.broadcast %630 : vector<8x1xf32> to vector<8x128xf32>
    %633 = vector.broadcast %631 : vector<1x128xf32> to vector<8x128xf32>
    %634 = arith.subf %632, %633 : vector<8x128xf32>
    %c8_224 = arith.constant 8 : index
    %c0_225 = arith.constant 0 : index
    %635 = vector.load %arg7[%c8_224, %c0_225] : memref<64x128xf32, #tpu.memory_space<vmem>>, vector<1x128xf32>
    %636 = vector.broadcast %635 : vector<1x128xf32> to vector<8x128xf32>
    %637 = arith.mulf %636, %634 : vector<8x128xf32>
    %c8_226 = arith.constant 8 : index
    %c0_227 = arith.constant 0 : index
    %638 = vector.load %arg8[%c8_226, %c0_227] : memref<64x128xf32, #tpu.memory_space<vmem>>, vector<1x128xf32>
    %639 = arith.mulf %634, %634 : vector<8x128xf32>
    %640 = vector.broadcast %638 : vector<1x128xf32> to vector<8x128xf32>
    %641 = arith.mulf %640, %639 : vector<8x128xf32>
    %642 = math.exp %641 : vector<8x128xf32>
    %643 = arith.mulf %637, %642 : vector<8x128xf32>
    %644 = arith.addf %614, %643 : vector<8x128xf32>
    %645 = vector.extract_strided_slice %507 {offsets = [0, 9], sizes = [8, 1], strides = [1, 1]} : vector<8x128xf32> to vector<8x1xf32>
    %c9_228 = arith.constant 9 : index
    %c0_229 = arith.constant 0 : index
    %646 = vector.load %arg6[%c9_228, %c0_229] : memref<64x128xf32, #tpu.memory_space<vmem>>, vector<1x128xf32>
    %647 = vector.broadcast %645 : vector<8x1xf32> to vector<8x128xf32>
    %648 = vector.broadcast %646 : vector<1x128xf32> to vector<8x128xf32>
    %649 = arith.subf %647, %648 : vector<8x128xf32>
    %c9_230 = arith.constant 9 : index
    %c0_231 = arith.constant 0 : index
    %650 = vector.load %arg7[%c9_230, %c0_231] : memref<64x128xf32, #tpu.memory_space<vmem>>, vector<1x128xf32>
    %651 = vector.broadcast %650 : vector<1x128xf32> to vector<8x128xf32>
    %652 = arith.mulf %651, %649 : vector<8x128xf32>
    %c9_232 = arith.constant 9 : index
    %c0_233 = arith.constant 0 : index
    %653 = vector.load %arg8[%c9_232, %c0_233] : memref<64x128xf32, #tpu.memory_space<vmem>>, vector<1x128xf32>
    %654 = arith.mulf %649, %649 : vector<8x128xf32>
    %655 = vector.broadcast %653 : vector<1x128xf32> to vector<8x128xf32>
    %656 = arith.mulf %655, %654 : vector<8x128xf32>
    %657 = math.exp %656 : vector<8x128xf32>
    %658 = arith.mulf %652, %657 : vector<8x128xf32>
    %659 = arith.addf %629, %658 : vector<8x128xf32>
    %660 = vector.extract_strided_slice %507 {offsets = [0, 10], sizes = [8, 1], strides = [1, 1]} : vector<8x128xf32> to vector<8x1xf32>
    %c10_234 = arith.constant 10 : index
    %c0_235 = arith.constant 0 : index
    %661 = vector.load %arg6[%c10_234, %c0_235] : memref<64x128xf32, #tpu.memory_space<vmem>>, vector<1x128xf32>
    %662 = vector.broadcast %660 : vector<8x1xf32> to vector<8x128xf32>
    %663 = vector.broadcast %661 : vector<1x128xf32> to vector<8x128xf32>
    %664 = arith.subf %662, %663 : vector<8x128xf32>
    %c10_236 = arith.constant 10 : index
    %c0_237 = arith.constant 0 : index
    %665 = vector.load %arg7[%c10_236, %c0_237] : memref<64x128xf32, #tpu.memory_space<vmem>>, vector<1x128xf32>
    %666 = vector.broadcast %665 : vector<1x128xf32> to vector<8x128xf32>
    %667 = arith.mulf %666, %664 : vector<8x128xf32>
    %c10_238 = arith.constant 10 : index
    %c0_239 = arith.constant 0 : index
    %668 = vector.load %arg8[%c10_238, %c0_239] : memref<64x128xf32, #tpu.memory_space<vmem>>, vector<1x128xf32>
    %669 = arith.mulf %664, %664 : vector<8x128xf32>
    %670 = vector.broadcast %668 : vector<1x128xf32> to vector<8x128xf32>
    %671 = arith.mulf %670, %669 : vector<8x128xf32>
    %672 = math.exp %671 : vector<8x128xf32>
    %673 = arith.mulf %667, %672 : vector<8x128xf32>
    %674 = arith.addf %644, %673 : vector<8x128xf32>
    %675 = vector.extract_strided_slice %507 {offsets = [0, 11], sizes = [8, 1], strides = [1, 1]} : vector<8x128xf32> to vector<8x1xf32>
    %c11_240 = arith.constant 11 : index
    %c0_241 = arith.constant 0 : index
    %676 = vector.load %arg6[%c11_240, %c0_241] : memref<64x128xf32, #tpu.memory_space<vmem>>, vector<1x128xf32>
    %677 = vector.broadcast %675 : vector<8x1xf32> to vector<8x128xf32>
    %678 = vector.broadcast %676 : vector<1x128xf32> to vector<8x128xf32>
    %679 = arith.subf %677, %678 : vector<8x128xf32>
    %c11_242 = arith.constant 11 : index
    %c0_243 = arith.constant 0 : index
    %680 = vector.load %arg7[%c11_242, %c0_243] : memref<64x128xf32, #tpu.memory_space<vmem>>, vector<1x128xf32>
    %681 = vector.broadcast %680 : vector<1x128xf32> to vector<8x128xf32>
    %682 = arith.mulf %681, %679 : vector<8x128xf32>
    %c11_244 = arith.constant 11 : index
    %c0_245 = arith.constant 0 : index
    %683 = vector.load %arg8[%c11_244, %c0_245] : memref<64x128xf32, #tpu.memory_space<vmem>>, vector<1x128xf32>
    %684 = arith.mulf %679, %679 : vector<8x128xf32>
    %685 = vector.broadcast %683 : vector<1x128xf32> to vector<8x128xf32>
    %686 = arith.mulf %685, %684 : vector<8x128xf32>
    %687 = math.exp %686 : vector<8x128xf32>
    %688 = arith.mulf %682, %687 : vector<8x128xf32>
    %689 = arith.addf %659, %688 : vector<8x128xf32>
    %690 = vector.extract_strided_slice %507 {offsets = [0, 12], sizes = [8, 1], strides = [1, 1]} : vector<8x128xf32> to vector<8x1xf32>
    %c12_246 = arith.constant 12 : index
    %c0_247 = arith.constant 0 : index
    %691 = vector.load %arg6[%c12_246, %c0_247] : memref<64x128xf32, #tpu.memory_space<vmem>>, vector<1x128xf32>
    %692 = vector.broadcast %690 : vector<8x1xf32> to vector<8x128xf32>
    %693 = vector.broadcast %691 : vector<1x128xf32> to vector<8x128xf32>
    %694 = arith.subf %692, %693 : vector<8x128xf32>
    %c12_248 = arith.constant 12 : index
    %c0_249 = arith.constant 0 : index
    %695 = vector.load %arg7[%c12_248, %c0_249] : memref<64x128xf32, #tpu.memory_space<vmem>>, vector<1x128xf32>
    %696 = vector.broadcast %695 : vector<1x128xf32> to vector<8x128xf32>
    %697 = arith.mulf %696, %694 : vector<8x128xf32>
    %c12_250 = arith.constant 12 : index
    %c0_251 = arith.constant 0 : index
    %698 = vector.load %arg8[%c12_250, %c0_251] : memref<64x128xf32, #tpu.memory_space<vmem>>, vector<1x128xf32>
    %699 = arith.mulf %694, %694 : vector<8x128xf32>
    %700 = vector.broadcast %698 : vector<1x128xf32> to vector<8x128xf32>
    %701 = arith.mulf %700, %699 : vector<8x128xf32>
    %702 = math.exp %701 : vector<8x128xf32>
    %703 = arith.mulf %697, %702 : vector<8x128xf32>
    %704 = arith.addf %674, %703 : vector<8x128xf32>
    %705 = vector.extract_strided_slice %507 {offsets = [0, 13], sizes = [8, 1], strides = [1, 1]} : vector<8x128xf32> to vector<8x1xf32>
    %c13_252 = arith.constant 13 : index
    %c0_253 = arith.constant 0 : index
    %706 = vector.load %arg6[%c13_252, %c0_253] : memref<64x128xf32, #tpu.memory_space<vmem>>, vector<1x128xf32>
    %707 = vector.broadcast %705 : vector<8x1xf32> to vector<8x128xf32>
    %708 = vector.broadcast %706 : vector<1x128xf32> to vector<8x128xf32>
    %709 = arith.subf %707, %708 : vector<8x128xf32>
    %c13_254 = arith.constant 13 : index
    %c0_255 = arith.constant 0 : index
    %710 = vector.load %arg7[%c13_254, %c0_255] : memref<64x128xf32, #tpu.memory_space<vmem>>, vector<1x128xf32>
    %711 = vector.broadcast %710 : vector<1x128xf32> to vector<8x128xf32>
    %712 = arith.mulf %711, %709 : vector<8x128xf32>
    %c13_256 = arith.constant 13 : index
    %c0_257 = arith.constant 0 : index
    %713 = vector.load %arg8[%c13_256, %c0_257] : memref<64x128xf32, #tpu.memory_space<vmem>>, vector<1x128xf32>
    %714 = arith.mulf %709, %709 : vector<8x128xf32>
    %715 = vector.broadcast %713 : vector<1x128xf32> to vector<8x128xf32>
    %716 = arith.mulf %715, %714 : vector<8x128xf32>
    %717 = math.exp %716 : vector<8x128xf32>
    %718 = arith.mulf %712, %717 : vector<8x128xf32>
    %719 = arith.addf %689, %718 : vector<8x128xf32>
    %720 = vector.extract_strided_slice %507 {offsets = [0, 14], sizes = [8, 1], strides = [1, 1]} : vector<8x128xf32> to vector<8x1xf32>
    %c14_258 = arith.constant 14 : index
    %c0_259 = arith.constant 0 : index
    %721 = vector.load %arg6[%c14_258, %c0_259] : memref<64x128xf32, #tpu.memory_space<vmem>>, vector<1x128xf32>
    %722 = vector.broadcast %720 : vector<8x1xf32> to vector<8x128xf32>
    %723 = vector.broadcast %721 : vector<1x128xf32> to vector<8x128xf32>
    %724 = arith.subf %722, %723 : vector<8x128xf32>
    %c14_260 = arith.constant 14 : index
    %c0_261 = arith.constant 0 : index
    %725 = vector.load %arg7[%c14_260, %c0_261] : memref<64x128xf32, #tpu.memory_space<vmem>>, vector<1x128xf32>
    %726 = vector.broadcast %725 : vector<1x128xf32> to vector<8x128xf32>
    %727 = arith.mulf %726, %724 : vector<8x128xf32>
    %c14_262 = arith.constant 14 : index
    %c0_263 = arith.constant 0 : index
    %728 = vector.load %arg8[%c14_262, %c0_263] : memref<64x128xf32, #tpu.memory_space<vmem>>, vector<1x128xf32>
    %729 = arith.mulf %724, %724 : vector<8x128xf32>
    %730 = vector.broadcast %728 : vector<1x128xf32> to vector<8x128xf32>
    %731 = arith.mulf %730, %729 : vector<8x128xf32>
    %732 = math.exp %731 : vector<8x128xf32>
    %733 = arith.mulf %727, %732 : vector<8x128xf32>
    %734 = arith.addf %704, %733 : vector<8x128xf32>
    %735 = vector.extract_strided_slice %507 {offsets = [0, 15], sizes = [8, 1], strides = [1, 1]} : vector<8x128xf32> to vector<8x1xf32>
    %c15_264 = arith.constant 15 : index
    %c0_265 = arith.constant 0 : index
    %736 = vector.load %arg6[%c15_264, %c0_265] : memref<64x128xf32, #tpu.memory_space<vmem>>, vector<1x128xf32>
    %737 = vector.broadcast %735 : vector<8x1xf32> to vector<8x128xf32>
    %738 = vector.broadcast %736 : vector<1x128xf32> to vector<8x128xf32>
    %739 = arith.subf %737, %738 : vector<8x128xf32>
    %c15_266 = arith.constant 15 : index
    %c0_267 = arith.constant 0 : index
    %740 = vector.load %arg7[%c15_266, %c0_267] : memref<64x128xf32, #tpu.memory_space<vmem>>, vector<1x128xf32>
    %741 = vector.broadcast %740 : vector<1x128xf32> to vector<8x128xf32>
    %742 = arith.mulf %741, %739 : vector<8x128xf32>
    %c15_268 = arith.constant 15 : index
    %c0_269 = arith.constant 0 : index
    %743 = vector.load %arg8[%c15_268, %c0_269] : memref<64x128xf32, #tpu.memory_space<vmem>>, vector<1x128xf32>
    %744 = arith.mulf %739, %739 : vector<8x128xf32>
    %745 = vector.broadcast %743 : vector<1x128xf32> to vector<8x128xf32>
    %746 = arith.mulf %745, %744 : vector<8x128xf32>
    %747 = math.exp %746 : vector<8x128xf32>
    %748 = arith.mulf %742, %747 : vector<8x128xf32>
    %749 = arith.addf %719, %748 : vector<8x128xf32>
    %750 = vector.extract_strided_slice %507 {offsets = [0, 16], sizes = [8, 1], strides = [1, 1]} : vector<8x128xf32> to vector<8x1xf32>
    %c16_270 = arith.constant 16 : index
    %c0_271 = arith.constant 0 : index
    %751 = vector.load %arg6[%c16_270, %c0_271] : memref<64x128xf32, #tpu.memory_space<vmem>>, vector<1x128xf32>
    %752 = vector.broadcast %750 : vector<8x1xf32> to vector<8x128xf32>
    %753 = vector.broadcast %751 : vector<1x128xf32> to vector<8x128xf32>
    %754 = arith.subf %752, %753 : vector<8x128xf32>
    %c16_272 = arith.constant 16 : index
    %c0_273 = arith.constant 0 : index
    %755 = vector.load %arg7[%c16_272, %c0_273] : memref<64x128xf32, #tpu.memory_space<vmem>>, vector<1x128xf32>
    %756 = vector.broadcast %755 : vector<1x128xf32> to vector<8x128xf32>
    %757 = arith.mulf %756, %754 : vector<8x128xf32>
    %c16_274 = arith.constant 16 : index
    %c0_275 = arith.constant 0 : index
    %758 = vector.load %arg8[%c16_274, %c0_275] : memref<64x128xf32, #tpu.memory_space<vmem>>, vector<1x128xf32>
    %759 = arith.mulf %754, %754 : vector<8x128xf32>
    %760 = vector.broadcast %758 : vector<1x128xf32> to vector<8x128xf32>
    %761 = arith.mulf %760, %759 : vector<8x128xf32>
    %762 = math.exp %761 : vector<8x128xf32>
    %763 = arith.mulf %757, %762 : vector<8x128xf32>
    %764 = arith.addf %734, %763 : vector<8x128xf32>
    %765 = vector.extract_strided_slice %507 {offsets = [0, 17], sizes = [8, 1], strides = [1, 1]} : vector<8x128xf32> to vector<8x1xf32>
    %c17_276 = arith.constant 17 : index
    %c0_277 = arith.constant 0 : index
    %766 = vector.load %arg6[%c17_276, %c0_277] : memref<64x128xf32, #tpu.memory_space<vmem>>, vector<1x128xf32>
    %767 = vector.broadcast %765 : vector<8x1xf32> to vector<8x128xf32>
    %768 = vector.broadcast %766 : vector<1x128xf32> to vector<8x128xf32>
    %769 = arith.subf %767, %768 : vector<8x128xf32>
    %c17_278 = arith.constant 17 : index
    %c0_279 = arith.constant 0 : index
    %770 = vector.load %arg7[%c17_278, %c0_279] : memref<64x128xf32, #tpu.memory_space<vmem>>, vector<1x128xf32>
    %771 = vector.broadcast %770 : vector<1x128xf32> to vector<8x128xf32>
    %772 = arith.mulf %771, %769 : vector<8x128xf32>
    %c17_280 = arith.constant 17 : index
    %c0_281 = arith.constant 0 : index
    %773 = vector.load %arg8[%c17_280, %c0_281] : memref<64x128xf32, #tpu.memory_space<vmem>>, vector<1x128xf32>
    %774 = arith.mulf %769, %769 : vector<8x128xf32>
    %775 = vector.broadcast %773 : vector<1x128xf32> to vector<8x128xf32>
    %776 = arith.mulf %775, %774 : vector<8x128xf32>
    %777 = math.exp %776 : vector<8x128xf32>
    %778 = arith.mulf %772, %777 : vector<8x128xf32>
    %779 = arith.addf %749, %778 : vector<8x128xf32>
    %780 = vector.extract_strided_slice %507 {offsets = [0, 18], sizes = [8, 1], strides = [1, 1]} : vector<8x128xf32> to vector<8x1xf32>
    %c18_282 = arith.constant 18 : index
    %c0_283 = arith.constant 0 : index
    %781 = vector.load %arg6[%c18_282, %c0_283] : memref<64x128xf32, #tpu.memory_space<vmem>>, vector<1x128xf32>
    %782 = vector.broadcast %780 : vector<8x1xf32> to vector<8x128xf32>
    %783 = vector.broadcast %781 : vector<1x128xf32> to vector<8x128xf32>
    %784 = arith.subf %782, %783 : vector<8x128xf32>
    %c18_284 = arith.constant 18 : index
    %c0_285 = arith.constant 0 : index
    %785 = vector.load %arg7[%c18_284, %c0_285] : memref<64x128xf32, #tpu.memory_space<vmem>>, vector<1x128xf32>
    %786 = vector.broadcast %785 : vector<1x128xf32> to vector<8x128xf32>
    %787 = arith.mulf %786, %784 : vector<8x128xf32>
    %c18_286 = arith.constant 18 : index
    %c0_287 = arith.constant 0 : index
    %788 = vector.load %arg8[%c18_286, %c0_287] : memref<64x128xf32, #tpu.memory_space<vmem>>, vector<1x128xf32>
    %789 = arith.mulf %784, %784 : vector<8x128xf32>
    %790 = vector.broadcast %788 : vector<1x128xf32> to vector<8x128xf32>
    %791 = arith.mulf %790, %789 : vector<8x128xf32>
    %792 = math.exp %791 : vector<8x128xf32>
    %793 = arith.mulf %787, %792 : vector<8x128xf32>
    %794 = arith.addf %764, %793 : vector<8x128xf32>
    %795 = vector.extract_strided_slice %507 {offsets = [0, 19], sizes = [8, 1], strides = [1, 1]} : vector<8x128xf32> to vector<8x1xf32>
    %c19_288 = arith.constant 19 : index
    %c0_289 = arith.constant 0 : index
    %796 = vector.load %arg6[%c19_288, %c0_289] : memref<64x128xf32, #tpu.memory_space<vmem>>, vector<1x128xf32>
    %797 = vector.broadcast %795 : vector<8x1xf32> to vector<8x128xf32>
    %798 = vector.broadcast %796 : vector<1x128xf32> to vector<8x128xf32>
    %799 = arith.subf %797, %798 : vector<8x128xf32>
    %c19_290 = arith.constant 19 : index
    %c0_291 = arith.constant 0 : index
    %800 = vector.load %arg7[%c19_290, %c0_291] : memref<64x128xf32, #tpu.memory_space<vmem>>, vector<1x128xf32>
    %801 = vector.broadcast %800 : vector<1x128xf32> to vector<8x128xf32>
    %802 = arith.mulf %801, %799 : vector<8x128xf32>
    %c19_292 = arith.constant 19 : index
    %c0_293 = arith.constant 0 : index
    %803 = vector.load %arg8[%c19_292, %c0_293] : memref<64x128xf32, #tpu.memory_space<vmem>>, vector<1x128xf32>
    %804 = arith.mulf %799, %799 : vector<8x128xf32>
    %805 = vector.broadcast %803 : vector<1x128xf32> to vector<8x128xf32>
    %806 = arith.mulf %805, %804 : vector<8x128xf32>
    %807 = math.exp %806 : vector<8x128xf32>
    %808 = arith.mulf %802, %807 : vector<8x128xf32>
    %809 = arith.addf %779, %808 : vector<8x128xf32>
    %810 = vector.extract_strided_slice %507 {offsets = [0, 20], sizes = [8, 1], strides = [1, 1]} : vector<8x128xf32> to vector<8x1xf32>
    %c20_294 = arith.constant 20 : index
    %c0_295 = arith.constant 0 : index
    %811 = vector.load %arg6[%c20_294, %c0_295] : memref<64x128xf32, #tpu.memory_space<vmem>>, vector<1x128xf32>
    %812 = vector.broadcast %810 : vector<8x1xf32> to vector<8x128xf32>
    %813 = vector.broadcast %811 : vector<1x128xf32> to vector<8x128xf32>
    %814 = arith.subf %812, %813 : vector<8x128xf32>
    %c20_296 = arith.constant 20 : index
    %c0_297 = arith.constant 0 : index
    %815 = vector.load %arg7[%c20_296, %c0_297] : memref<64x128xf32, #tpu.memory_space<vmem>>, vector<1x128xf32>
    %816 = vector.broadcast %815 : vector<1x128xf32> to vector<8x128xf32>
    %817 = arith.mulf %816, %814 : vector<8x128xf32>
    %c20_298 = arith.constant 20 : index
    %c0_299 = arith.constant 0 : index
    %818 = vector.load %arg8[%c20_298, %c0_299] : memref<64x128xf32, #tpu.memory_space<vmem>>, vector<1x128xf32>
    %819 = arith.mulf %814, %814 : vector<8x128xf32>
    %820 = vector.broadcast %818 : vector<1x128xf32> to vector<8x128xf32>
    %821 = arith.mulf %820, %819 : vector<8x128xf32>
    %822 = math.exp %821 : vector<8x128xf32>
    %823 = arith.mulf %817, %822 : vector<8x128xf32>
    %824 = arith.addf %794, %823 : vector<8x128xf32>
    %825 = vector.extract_strided_slice %507 {offsets = [0, 21], sizes = [8, 1], strides = [1, 1]} : vector<8x128xf32> to vector<8x1xf32>
    %c21_300 = arith.constant 21 : index
    %c0_301 = arith.constant 0 : index
    %826 = vector.load %arg6[%c21_300, %c0_301] : memref<64x128xf32, #tpu.memory_space<vmem>>, vector<1x128xf32>
    %827 = vector.broadcast %825 : vector<8x1xf32> to vector<8x128xf32>
    %828 = vector.broadcast %826 : vector<1x128xf32> to vector<8x128xf32>
    %829 = arith.subf %827, %828 : vector<8x128xf32>
    %c21_302 = arith.constant 21 : index
    %c0_303 = arith.constant 0 : index
    %830 = vector.load %arg7[%c21_302, %c0_303] : memref<64x128xf32, #tpu.memory_space<vmem>>, vector<1x128xf32>
    %831 = vector.broadcast %830 : vector<1x128xf32> to vector<8x128xf32>
    %832 = arith.mulf %831, %829 : vector<8x128xf32>
    %c21_304 = arith.constant 21 : index
    %c0_305 = arith.constant 0 : index
    %833 = vector.load %arg8[%c21_304, %c0_305] : memref<64x128xf32, #tpu.memory_space<vmem>>, vector<1x128xf32>
    %834 = arith.mulf %829, %829 : vector<8x128xf32>
    %835 = vector.broadcast %833 : vector<1x128xf32> to vector<8x128xf32>
    %836 = arith.mulf %835, %834 : vector<8x128xf32>
    %837 = math.exp %836 : vector<8x128xf32>
    %838 = arith.mulf %832, %837 : vector<8x128xf32>
    %839 = arith.addf %809, %838 : vector<8x128xf32>
    %840 = vector.extract_strided_slice %507 {offsets = [0, 22], sizes = [8, 1], strides = [1, 1]} : vector<8x128xf32> to vector<8x1xf32>
    %c22_306 = arith.constant 22 : index
    %c0_307 = arith.constant 0 : index
    %841 = vector.load %arg6[%c22_306, %c0_307] : memref<64x128xf32, #tpu.memory_space<vmem>>, vector<1x128xf32>
    %842 = vector.broadcast %840 : vector<8x1xf32> to vector<8x128xf32>
    %843 = vector.broadcast %841 : vector<1x128xf32> to vector<8x128xf32>
    %844 = arith.subf %842, %843 : vector<8x128xf32>
    %c22_308 = arith.constant 22 : index
    %c0_309 = arith.constant 0 : index
    %845 = vector.load %arg7[%c22_308, %c0_309] : memref<64x128xf32, #tpu.memory_space<vmem>>, vector<1x128xf32>
    %846 = vector.broadcast %845 : vector<1x128xf32> to vector<8x128xf32>
    %847 = arith.mulf %846, %844 : vector<8x128xf32>
    %c22_310 = arith.constant 22 : index
    %c0_311 = arith.constant 0 : index
    %848 = vector.load %arg8[%c22_310, %c0_311] : memref<64x128xf32, #tpu.memory_space<vmem>>, vector<1x128xf32>
    %849 = arith.mulf %844, %844 : vector<8x128xf32>
    %850 = vector.broadcast %848 : vector<1x128xf32> to vector<8x128xf32>
    %851 = arith.mulf %850, %849 : vector<8x128xf32>
    %852 = math.exp %851 : vector<8x128xf32>
    %853 = arith.mulf %847, %852 : vector<8x128xf32>
    %854 = arith.addf %824, %853 : vector<8x128xf32>
    %855 = vector.extract_strided_slice %507 {offsets = [0, 23], sizes = [8, 1], strides = [1, 1]} : vector<8x128xf32> to vector<8x1xf32>
    %c23_312 = arith.constant 23 : index
    %c0_313 = arith.constant 0 : index
    %856 = vector.load %arg6[%c23_312, %c0_313] : memref<64x128xf32, #tpu.memory_space<vmem>>, vector<1x128xf32>
    %857 = vector.broadcast %855 : vector<8x1xf32> to vector<8x128xf32>
    %858 = vector.broadcast %856 : vector<1x128xf32> to vector<8x128xf32>
    %859 = arith.subf %857, %858 : vector<8x128xf32>
    %c23_314 = arith.constant 23 : index
    %c0_315 = arith.constant 0 : index
    %860 = vector.load %arg7[%c23_314, %c0_315] : memref<64x128xf32, #tpu.memory_space<vmem>>, vector<1x128xf32>
    %861 = vector.broadcast %860 : vector<1x128xf32> to vector<8x128xf32>
    %862 = arith.mulf %861, %859 : vector<8x128xf32>
    %c23_316 = arith.constant 23 : index
    %c0_317 = arith.constant 0 : index
    %863 = vector.load %arg8[%c23_316, %c0_317] : memref<64x128xf32, #tpu.memory_space<vmem>>, vector<1x128xf32>
    %864 = arith.mulf %859, %859 : vector<8x128xf32>
    %865 = vector.broadcast %863 : vector<1x128xf32> to vector<8x128xf32>
    %866 = arith.mulf %865, %864 : vector<8x128xf32>
    %867 = math.exp %866 : vector<8x128xf32>
    %868 = arith.mulf %862, %867 : vector<8x128xf32>
    %869 = arith.addf %839, %868 : vector<8x128xf32>
    %870 = vector.extract_strided_slice %507 {offsets = [0, 24], sizes = [8, 1], strides = [1, 1]} : vector<8x128xf32> to vector<8x1xf32>
    %c24_318 = arith.constant 24 : index
    %c0_319 = arith.constant 0 : index
    %871 = vector.load %arg6[%c24_318, %c0_319] : memref<64x128xf32, #tpu.memory_space<vmem>>, vector<1x128xf32>
    %872 = vector.broadcast %870 : vector<8x1xf32> to vector<8x128xf32>
    %873 = vector.broadcast %871 : vector<1x128xf32> to vector<8x128xf32>
    %874 = arith.subf %872, %873 : vector<8x128xf32>
    %c24_320 = arith.constant 24 : index
    %c0_321 = arith.constant 0 : index
    %875 = vector.load %arg7[%c24_320, %c0_321] : memref<64x128xf32, #tpu.memory_space<vmem>>, vector<1x128xf32>
    %876 = vector.broadcast %875 : vector<1x128xf32> to vector<8x128xf32>
    %877 = arith.mulf %876, %874 : vector<8x128xf32>
    %c24_322 = arith.constant 24 : index
    %c0_323 = arith.constant 0 : index
    %878 = vector.load %arg8[%c24_322, %c0_323] : memref<64x128xf32, #tpu.memory_space<vmem>>, vector<1x128xf32>
    %879 = arith.mulf %874, %874 : vector<8x128xf32>
    %880 = vector.broadcast %878 : vector<1x128xf32> to vector<8x128xf32>
    %881 = arith.mulf %880, %879 : vector<8x128xf32>
    %882 = math.exp %881 : vector<8x128xf32>
    %883 = arith.mulf %877, %882 : vector<8x128xf32>
    %884 = arith.addf %854, %883 : vector<8x128xf32>
    %885 = vector.extract_strided_slice %507 {offsets = [0, 25], sizes = [8, 1], strides = [1, 1]} : vector<8x128xf32> to vector<8x1xf32>
    %c25_324 = arith.constant 25 : index
    %c0_325 = arith.constant 0 : index
    %886 = vector.load %arg6[%c25_324, %c0_325] : memref<64x128xf32, #tpu.memory_space<vmem>>, vector<1x128xf32>
    %887 = vector.broadcast %885 : vector<8x1xf32> to vector<8x128xf32>
    %888 = vector.broadcast %886 : vector<1x128xf32> to vector<8x128xf32>
    %889 = arith.subf %887, %888 : vector<8x128xf32>
    %c25_326 = arith.constant 25 : index
    %c0_327 = arith.constant 0 : index
    %890 = vector.load %arg7[%c25_326, %c0_327] : memref<64x128xf32, #tpu.memory_space<vmem>>, vector<1x128xf32>
    %891 = vector.broadcast %890 : vector<1x128xf32> to vector<8x128xf32>
    %892 = arith.mulf %891, %889 : vector<8x128xf32>
    %c25_328 = arith.constant 25 : index
    %c0_329 = arith.constant 0 : index
    %893 = vector.load %arg8[%c25_328, %c0_329] : memref<64x128xf32, #tpu.memory_space<vmem>>, vector<1x128xf32>
    %894 = arith.mulf %889, %889 : vector<8x128xf32>
    %895 = vector.broadcast %893 : vector<1x128xf32> to vector<8x128xf32>
    %896 = arith.mulf %895, %894 : vector<8x128xf32>
    %897 = math.exp %896 : vector<8x128xf32>
    %898 = arith.mulf %892, %897 : vector<8x128xf32>
    %899 = arith.addf %869, %898 : vector<8x128xf32>
    %900 = vector.extract_strided_slice %507 {offsets = [0, 26], sizes = [8, 1], strides = [1, 1]} : vector<8x128xf32> to vector<8x1xf32>
    %c26_330 = arith.constant 26 : index
    %c0_331 = arith.constant 0 : index
    %901 = vector.load %arg6[%c26_330, %c0_331] : memref<64x128xf32, #tpu.memory_space<vmem>>, vector<1x128xf32>
    %902 = vector.broadcast %900 : vector<8x1xf32> to vector<8x128xf32>
    %903 = vector.broadcast %901 : vector<1x128xf32> to vector<8x128xf32>
    %904 = arith.subf %902, %903 : vector<8x128xf32>
    %c26_332 = arith.constant 26 : index
    %c0_333 = arith.constant 0 : index
    %905 = vector.load %arg7[%c26_332, %c0_333] : memref<64x128xf32, #tpu.memory_space<vmem>>, vector<1x128xf32>
    %906 = vector.broadcast %905 : vector<1x128xf32> to vector<8x128xf32>
    %907 = arith.mulf %906, %904 : vector<8x128xf32>
    %c26_334 = arith.constant 26 : index
    %c0_335 = arith.constant 0 : index
    %908 = vector.load %arg8[%c26_334, %c0_335] : memref<64x128xf32, #tpu.memory_space<vmem>>, vector<1x128xf32>
    %909 = arith.mulf %904, %904 : vector<8x128xf32>
    %910 = vector.broadcast %908 : vector<1x128xf32> to vector<8x128xf32>
    %911 = arith.mulf %910, %909 : vector<8x128xf32>
    %912 = math.exp %911 : vector<8x128xf32>
    %913 = arith.mulf %907, %912 : vector<8x128xf32>
    %914 = arith.addf %884, %913 : vector<8x128xf32>
    %915 = vector.extract_strided_slice %507 {offsets = [0, 27], sizes = [8, 1], strides = [1, 1]} : vector<8x128xf32> to vector<8x1xf32>
    %c27_336 = arith.constant 27 : index
    %c0_337 = arith.constant 0 : index
    %916 = vector.load %arg6[%c27_336, %c0_337] : memref<64x128xf32, #tpu.memory_space<vmem>>, vector<1x128xf32>
    %917 = vector.broadcast %915 : vector<8x1xf32> to vector<8x128xf32>
    %918 = vector.broadcast %916 : vector<1x128xf32> to vector<8x128xf32>
    %919 = arith.subf %917, %918 : vector<8x128xf32>
    %c27_338 = arith.constant 27 : index
    %c0_339 = arith.constant 0 : index
    %920 = vector.load %arg7[%c27_338, %c0_339] : memref<64x128xf32, #tpu.memory_space<vmem>>, vector<1x128xf32>
    %921 = vector.broadcast %920 : vector<1x128xf32> to vector<8x128xf32>
    %922 = arith.mulf %921, %919 : vector<8x128xf32>
    %c27_340 = arith.constant 27 : index
    %c0_341 = arith.constant 0 : index
    %923 = vector.load %arg8[%c27_340, %c0_341] : memref<64x128xf32, #tpu.memory_space<vmem>>, vector<1x128xf32>
    %924 = arith.mulf %919, %919 : vector<8x128xf32>
    %925 = vector.broadcast %923 : vector<1x128xf32> to vector<8x128xf32>
    %926 = arith.mulf %925, %924 : vector<8x128xf32>
    %927 = math.exp %926 : vector<8x128xf32>
    %928 = arith.mulf %922, %927 : vector<8x128xf32>
    %929 = arith.addf %899, %928 : vector<8x128xf32>
    %930 = vector.extract_strided_slice %507 {offsets = [0, 28], sizes = [8, 1], strides = [1, 1]} : vector<8x128xf32> to vector<8x1xf32>
    %c28_342 = arith.constant 28 : index
    %c0_343 = arith.constant 0 : index
    %931 = vector.load %arg6[%c28_342, %c0_343] : memref<64x128xf32, #tpu.memory_space<vmem>>, vector<1x128xf32>
    %932 = vector.broadcast %930 : vector<8x1xf32> to vector<8x128xf32>
    %933 = vector.broadcast %931 : vector<1x128xf32> to vector<8x128xf32>
    %934 = arith.subf %932, %933 : vector<8x128xf32>
    %c28_344 = arith.constant 28 : index
    %c0_345 = arith.constant 0 : index
    %935 = vector.load %arg7[%c28_344, %c0_345] : memref<64x128xf32, #tpu.memory_space<vmem>>, vector<1x128xf32>
    %936 = vector.broadcast %935 : vector<1x128xf32> to vector<8x128xf32>
    %937 = arith.mulf %936, %934 : vector<8x128xf32>
    %c28_346 = arith.constant 28 : index
    %c0_347 = arith.constant 0 : index
    %938 = vector.load %arg8[%c28_346, %c0_347] : memref<64x128xf32, #tpu.memory_space<vmem>>, vector<1x128xf32>
    %939 = arith.mulf %934, %934 : vector<8x128xf32>
    %940 = vector.broadcast %938 : vector<1x128xf32> to vector<8x128xf32>
    %941 = arith.mulf %940, %939 : vector<8x128xf32>
    %942 = math.exp %941 : vector<8x128xf32>
    %943 = arith.mulf %937, %942 : vector<8x128xf32>
    %944 = arith.addf %914, %943 : vector<8x128xf32>
    %945 = vector.extract_strided_slice %507 {offsets = [0, 29], sizes = [8, 1], strides = [1, 1]} : vector<8x128xf32> to vector<8x1xf32>
    %c29_348 = arith.constant 29 : index
    %c0_349 = arith.constant 0 : index
    %946 = vector.load %arg6[%c29_348, %c0_349] : memref<64x128xf32, #tpu.memory_space<vmem>>, vector<1x128xf32>
    %947 = vector.broadcast %945 : vector<8x1xf32> to vector<8x128xf32>
    %948 = vector.broadcast %946 : vector<1x128xf32> to vector<8x128xf32>
    %949 = arith.subf %947, %948 : vector<8x128xf32>
    %c29_350 = arith.constant 29 : index
    %c0_351 = arith.constant 0 : index
    %950 = vector.load %arg7[%c29_350, %c0_351] : memref<64x128xf32, #tpu.memory_space<vmem>>, vector<1x128xf32>
    %951 = vector.broadcast %950 : vector<1x128xf32> to vector<8x128xf32>
    %952 = arith.mulf %951, %949 : vector<8x128xf32>
    %c29_352 = arith.constant 29 : index
    %c0_353 = arith.constant 0 : index
    %953 = vector.load %arg8[%c29_352, %c0_353] : memref<64x128xf32, #tpu.memory_space<vmem>>, vector<1x128xf32>
    %954 = arith.mulf %949, %949 : vector<8x128xf32>
    %955 = vector.broadcast %953 : vector<1x128xf32> to vector<8x128xf32>
    %956 = arith.mulf %955, %954 : vector<8x128xf32>
    %957 = math.exp %956 : vector<8x128xf32>
    %958 = arith.mulf %952, %957 : vector<8x128xf32>
    %959 = arith.addf %929, %958 : vector<8x128xf32>
    %960 = vector.extract_strided_slice %507 {offsets = [0, 30], sizes = [8, 1], strides = [1, 1]} : vector<8x128xf32> to vector<8x1xf32>
    %c30_354 = arith.constant 30 : index
    %c0_355 = arith.constant 0 : index
    %961 = vector.load %arg6[%c30_354, %c0_355] : memref<64x128xf32, #tpu.memory_space<vmem>>, vector<1x128xf32>
    %962 = vector.broadcast %960 : vector<8x1xf32> to vector<8x128xf32>
    %963 = vector.broadcast %961 : vector<1x128xf32> to vector<8x128xf32>
    %964 = arith.subf %962, %963 : vector<8x128xf32>
    %c30_356 = arith.constant 30 : index
    %c0_357 = arith.constant 0 : index
    %965 = vector.load %arg7[%c30_356, %c0_357] : memref<64x128xf32, #tpu.memory_space<vmem>>, vector<1x128xf32>
    %966 = vector.broadcast %965 : vector<1x128xf32> to vector<8x128xf32>
    %967 = arith.mulf %966, %964 : vector<8x128xf32>
    %c30_358 = arith.constant 30 : index
    %c0_359 = arith.constant 0 : index
    %968 = vector.load %arg8[%c30_358, %c0_359] : memref<64x128xf32, #tpu.memory_space<vmem>>, vector<1x128xf32>
    %969 = arith.mulf %964, %964 : vector<8x128xf32>
    %970 = vector.broadcast %968 : vector<1x128xf32> to vector<8x128xf32>
    %971 = arith.mulf %970, %969 : vector<8x128xf32>
    %972 = math.exp %971 : vector<8x128xf32>
    %973 = arith.mulf %967, %972 : vector<8x128xf32>
    %974 = arith.addf %944, %973 : vector<8x128xf32>
    %975 = vector.extract_strided_slice %507 {offsets = [0, 31], sizes = [8, 1], strides = [1, 1]} : vector<8x128xf32> to vector<8x1xf32>
    %c31_360 = arith.constant 31 : index
    %c0_361 = arith.constant 0 : index
    %976 = vector.load %arg6[%c31_360, %c0_361] : memref<64x128xf32, #tpu.memory_space<vmem>>, vector<1x128xf32>
    %977 = vector.broadcast %975 : vector<8x1xf32> to vector<8x128xf32>
    %978 = vector.broadcast %976 : vector<1x128xf32> to vector<8x128xf32>
    %979 = arith.subf %977, %978 : vector<8x128xf32>
    %c31_362 = arith.constant 31 : index
    %c0_363 = arith.constant 0 : index
    %980 = vector.load %arg7[%c31_362, %c0_363] : memref<64x128xf32, #tpu.memory_space<vmem>>, vector<1x128xf32>
    %981 = vector.broadcast %980 : vector<1x128xf32> to vector<8x128xf32>
    %982 = arith.mulf %981, %979 : vector<8x128xf32>
    %c31_364 = arith.constant 31 : index
    %c0_365 = arith.constant 0 : index
    %983 = vector.load %arg8[%c31_364, %c0_365] : memref<64x128xf32, #tpu.memory_space<vmem>>, vector<1x128xf32>
    %984 = arith.mulf %979, %979 : vector<8x128xf32>
    %985 = vector.broadcast %983 : vector<1x128xf32> to vector<8x128xf32>
    %986 = arith.mulf %985, %984 : vector<8x128xf32>
    %987 = math.exp %986 : vector<8x128xf32>
    %988 = arith.mulf %982, %987 : vector<8x128xf32>
    %989 = arith.addf %959, %988 : vector<8x128xf32>
    %990 = vector.extract_strided_slice %507 {offsets = [0, 32], sizes = [8, 1], strides = [1, 1]} : vector<8x128xf32> to vector<8x1xf32>
    %c32 = arith.constant 32 : index
    %c0_366 = arith.constant 0 : index
    %991 = vector.load %arg6[%c32, %c0_366] : memref<64x128xf32, #tpu.memory_space<vmem>>, vector<1x128xf32>
    %992 = vector.broadcast %990 : vector<8x1xf32> to vector<8x128xf32>
    %993 = vector.broadcast %991 : vector<1x128xf32> to vector<8x128xf32>
    %994 = arith.subf %992, %993 : vector<8x128xf32>
    %c32_367 = arith.constant 32 : index
    %c0_368 = arith.constant 0 : index
    %995 = vector.load %arg7[%c32_367, %c0_368] : memref<64x128xf32, #tpu.memory_space<vmem>>, vector<1x128xf32>
    %996 = vector.broadcast %995 : vector<1x128xf32> to vector<8x128xf32>
    %997 = arith.mulf %996, %994 : vector<8x128xf32>
    %c32_369 = arith.constant 32 : index
    %c0_370 = arith.constant 0 : index
    %998 = vector.load %arg8[%c32_369, %c0_370] : memref<64x128xf32, #tpu.memory_space<vmem>>, vector<1x128xf32>
    %999 = arith.mulf %994, %994 : vector<8x128xf32>
    %1000 = vector.broadcast %998 : vector<1x128xf32> to vector<8x128xf32>
    %1001 = arith.mulf %1000, %999 : vector<8x128xf32>
    %1002 = math.exp %1001 : vector<8x128xf32>
    %1003 = arith.mulf %997, %1002 : vector<8x128xf32>
    %1004 = arith.addf %974, %1003 : vector<8x128xf32>
    %1005 = vector.extract_strided_slice %507 {offsets = [0, 33], sizes = [8, 1], strides = [1, 1]} : vector<8x128xf32> to vector<8x1xf32>
    %c33 = arith.constant 33 : index
    %c0_371 = arith.constant 0 : index
    %1006 = vector.load %arg6[%c33, %c0_371] : memref<64x128xf32, #tpu.memory_space<vmem>>, vector<1x128xf32>
    %1007 = vector.broadcast %1005 : vector<8x1xf32> to vector<8x128xf32>
    %1008 = vector.broadcast %1006 : vector<1x128xf32> to vector<8x128xf32>
    %1009 = arith.subf %1007, %1008 : vector<8x128xf32>
    %c33_372 = arith.constant 33 : index
    %c0_373 = arith.constant 0 : index
    %1010 = vector.load %arg7[%c33_372, %c0_373] : memref<64x128xf32, #tpu.memory_space<vmem>>, vector<1x128xf32>
    %1011 = vector.broadcast %1010 : vector<1x128xf32> to vector<8x128xf32>
    %1012 = arith.mulf %1011, %1009 : vector<8x128xf32>
    %c33_374 = arith.constant 33 : index
    %c0_375 = arith.constant 0 : index
    %1013 = vector.load %arg8[%c33_374, %c0_375] : memref<64x128xf32, #tpu.memory_space<vmem>>, vector<1x128xf32>
    %1014 = arith.mulf %1009, %1009 : vector<8x128xf32>
    %1015 = vector.broadcast %1013 : vector<1x128xf32> to vector<8x128xf32>
    %1016 = arith.mulf %1015, %1014 : vector<8x128xf32>
    %1017 = math.exp %1016 : vector<8x128xf32>
    %1018 = arith.mulf %1012, %1017 : vector<8x128xf32>
    %1019 = arith.addf %989, %1018 : vector<8x128xf32>
    %1020 = vector.extract_strided_slice %507 {offsets = [0, 34], sizes = [8, 1], strides = [1, 1]} : vector<8x128xf32> to vector<8x1xf32>
    %c34 = arith.constant 34 : index
    %c0_376 = arith.constant 0 : index
    %1021 = vector.load %arg6[%c34, %c0_376] : memref<64x128xf32, #tpu.memory_space<vmem>>, vector<1x128xf32>
    %1022 = vector.broadcast %1020 : vector<8x1xf32> to vector<8x128xf32>
    %1023 = vector.broadcast %1021 : vector<1x128xf32> to vector<8x128xf32>
    %1024 = arith.subf %1022, %1023 : vector<8x128xf32>
    %c34_377 = arith.constant 34 : index
    %c0_378 = arith.constant 0 : index
    %1025 = vector.load %arg7[%c34_377, %c0_378] : memref<64x128xf32, #tpu.memory_space<vmem>>, vector<1x128xf32>
    %1026 = vector.broadcast %1025 : vector<1x128xf32> to vector<8x128xf32>
    %1027 = arith.mulf %1026, %1024 : vector<8x128xf32>
    %c34_379 = arith.constant 34 : index
    %c0_380 = arith.constant 0 : index
    %1028 = vector.load %arg8[%c34_379, %c0_380] : memref<64x128xf32, #tpu.memory_space<vmem>>, vector<1x128xf32>
    %1029 = arith.mulf %1024, %1024 : vector<8x128xf32>
    %1030 = vector.broadcast %1028 : vector<1x128xf32> to vector<8x128xf32>
    %1031 = arith.mulf %1030, %1029 : vector<8x128xf32>
    %1032 = math.exp %1031 : vector<8x128xf32>
    %1033 = arith.mulf %1027, %1032 : vector<8x128xf32>
    %1034 = arith.addf %1004, %1033 : vector<8x128xf32>
    %1035 = vector.extract_strided_slice %507 {offsets = [0, 35], sizes = [8, 1], strides = [1, 1]} : vector<8x128xf32> to vector<8x1xf32>
    %c35 = arith.constant 35 : index
    %c0_381 = arith.constant 0 : index
    %1036 = vector.load %arg6[%c35, %c0_381] : memref<64x128xf32, #tpu.memory_space<vmem>>, vector<1x128xf32>
    %1037 = vector.broadcast %1035 : vector<8x1xf32> to vector<8x128xf32>
    %1038 = vector.broadcast %1036 : vector<1x128xf32> to vector<8x128xf32>
    %1039 = arith.subf %1037, %1038 : vector<8x128xf32>
    %c35_382 = arith.constant 35 : index
    %c0_383 = arith.constant 0 : index
    %1040 = vector.load %arg7[%c35_382, %c0_383] : memref<64x128xf32, #tpu.memory_space<vmem>>, vector<1x128xf32>
    %1041 = vector.broadcast %1040 : vector<1x128xf32> to vector<8x128xf32>
    %1042 = arith.mulf %1041, %1039 : vector<8x128xf32>
    %c35_384 = arith.constant 35 : index
    %c0_385 = arith.constant 0 : index
    %1043 = vector.load %arg8[%c35_384, %c0_385] : memref<64x128xf32, #tpu.memory_space<vmem>>, vector<1x128xf32>
    %1044 = arith.mulf %1039, %1039 : vector<8x128xf32>
    %1045 = vector.broadcast %1043 : vector<1x128xf32> to vector<8x128xf32>
    %1046 = arith.mulf %1045, %1044 : vector<8x128xf32>
    %1047 = math.exp %1046 : vector<8x128xf32>
    %1048 = arith.mulf %1042, %1047 : vector<8x128xf32>
    %1049 = arith.addf %1019, %1048 : vector<8x128xf32>
    %1050 = vector.extract_strided_slice %507 {offsets = [0, 36], sizes = [8, 1], strides = [1, 1]} : vector<8x128xf32> to vector<8x1xf32>
    %c36 = arith.constant 36 : index
    %c0_386 = arith.constant 0 : index
    %1051 = vector.load %arg6[%c36, %c0_386] : memref<64x128xf32, #tpu.memory_space<vmem>>, vector<1x128xf32>
    %1052 = vector.broadcast %1050 : vector<8x1xf32> to vector<8x128xf32>
    %1053 = vector.broadcast %1051 : vector<1x128xf32> to vector<8x128xf32>
    %1054 = arith.subf %1052, %1053 : vector<8x128xf32>
    %c36_387 = arith.constant 36 : index
    %c0_388 = arith.constant 0 : index
    %1055 = vector.load %arg7[%c36_387, %c0_388] : memref<64x128xf32, #tpu.memory_space<vmem>>, vector<1x128xf32>
    %1056 = vector.broadcast %1055 : vector<1x128xf32> to vector<8x128xf32>
    %1057 = arith.mulf %1056, %1054 : vector<8x128xf32>
    %c36_389 = arith.constant 36 : index
    %c0_390 = arith.constant 0 : index
    %1058 = vector.load %arg8[%c36_389, %c0_390] : memref<64x128xf32, #tpu.memory_space<vmem>>, vector<1x128xf32>
    %1059 = arith.mulf %1054, %1054 : vector<8x128xf32>
    %1060 = vector.broadcast %1058 : vector<1x128xf32> to vector<8x128xf32>
    %1061 = arith.mulf %1060, %1059 : vector<8x128xf32>
    %1062 = math.exp %1061 : vector<8x128xf32>
    %1063 = arith.mulf %1057, %1062 : vector<8x128xf32>
    %1064 = arith.addf %1034, %1063 : vector<8x128xf32>
    %1065 = vector.extract_strided_slice %507 {offsets = [0, 37], sizes = [8, 1], strides = [1, 1]} : vector<8x128xf32> to vector<8x1xf32>
    %c37 = arith.constant 37 : index
    %c0_391 = arith.constant 0 : index
    %1066 = vector.load %arg6[%c37, %c0_391] : memref<64x128xf32, #tpu.memory_space<vmem>>, vector<1x128xf32>
    %1067 = vector.broadcast %1065 : vector<8x1xf32> to vector<8x128xf32>
    %1068 = vector.broadcast %1066 : vector<1x128xf32> to vector<8x128xf32>
    %1069 = arith.subf %1067, %1068 : vector<8x128xf32>
    %c37_392 = arith.constant 37 : index
    %c0_393 = arith.constant 0 : index
    %1070 = vector.load %arg7[%c37_392, %c0_393] : memref<64x128xf32, #tpu.memory_space<vmem>>, vector<1x128xf32>
    %1071 = vector.broadcast %1070 : vector<1x128xf32> to vector<8x128xf32>
    %1072 = arith.mulf %1071, %1069 : vector<8x128xf32>
    %c37_394 = arith.constant 37 : index
    %c0_395 = arith.constant 0 : index
    %1073 = vector.load %arg8[%c37_394, %c0_395] : memref<64x128xf32, #tpu.memory_space<vmem>>, vector<1x128xf32>
    %1074 = arith.mulf %1069, %1069 : vector<8x128xf32>
    %1075 = vector.broadcast %1073 : vector<1x128xf32> to vector<8x128xf32>
    %1076 = arith.mulf %1075, %1074 : vector<8x128xf32>
    %1077 = math.exp %1076 : vector<8x128xf32>
    %1078 = arith.mulf %1072, %1077 : vector<8x128xf32>
    %1079 = arith.addf %1049, %1078 : vector<8x128xf32>
    %1080 = vector.extract_strided_slice %507 {offsets = [0, 38], sizes = [8, 1], strides = [1, 1]} : vector<8x128xf32> to vector<8x1xf32>
    %c38 = arith.constant 38 : index
    %c0_396 = arith.constant 0 : index
    %1081 = vector.load %arg6[%c38, %c0_396] : memref<64x128xf32, #tpu.memory_space<vmem>>, vector<1x128xf32>
    %1082 = vector.broadcast %1080 : vector<8x1xf32> to vector<8x128xf32>
    %1083 = vector.broadcast %1081 : vector<1x128xf32> to vector<8x128xf32>
    %1084 = arith.subf %1082, %1083 : vector<8x128xf32>
    %c38_397 = arith.constant 38 : index
    %c0_398 = arith.constant 0 : index
    %1085 = vector.load %arg7[%c38_397, %c0_398] : memref<64x128xf32, #tpu.memory_space<vmem>>, vector<1x128xf32>
    %1086 = vector.broadcast %1085 : vector<1x128xf32> to vector<8x128xf32>
    %1087 = arith.mulf %1086, %1084 : vector<8x128xf32>
    %c38_399 = arith.constant 38 : index
    %c0_400 = arith.constant 0 : index
    %1088 = vector.load %arg8[%c38_399, %c0_400] : memref<64x128xf32, #tpu.memory_space<vmem>>, vector<1x128xf32>
    %1089 = arith.mulf %1084, %1084 : vector<8x128xf32>
    %1090 = vector.broadcast %1088 : vector<1x128xf32> to vector<8x128xf32>
    %1091 = arith.mulf %1090, %1089 : vector<8x128xf32>
    %1092 = math.exp %1091 : vector<8x128xf32>
    %1093 = arith.mulf %1087, %1092 : vector<8x128xf32>
    %1094 = arith.addf %1064, %1093 : vector<8x128xf32>
    %1095 = vector.extract_strided_slice %507 {offsets = [0, 39], sizes = [8, 1], strides = [1, 1]} : vector<8x128xf32> to vector<8x1xf32>
    %c39 = arith.constant 39 : index
    %c0_401 = arith.constant 0 : index
    %1096 = vector.load %arg6[%c39, %c0_401] : memref<64x128xf32, #tpu.memory_space<vmem>>, vector<1x128xf32>
    %1097 = vector.broadcast %1095 : vector<8x1xf32> to vector<8x128xf32>
    %1098 = vector.broadcast %1096 : vector<1x128xf32> to vector<8x128xf32>
    %1099 = arith.subf %1097, %1098 : vector<8x128xf32>
    %c39_402 = arith.constant 39 : index
    %c0_403 = arith.constant 0 : index
    %1100 = vector.load %arg7[%c39_402, %c0_403] : memref<64x128xf32, #tpu.memory_space<vmem>>, vector<1x128xf32>
    %1101 = vector.broadcast %1100 : vector<1x128xf32> to vector<8x128xf32>
    %1102 = arith.mulf %1101, %1099 : vector<8x128xf32>
    %c39_404 = arith.constant 39 : index
    %c0_405 = arith.constant 0 : index
    %1103 = vector.load %arg8[%c39_404, %c0_405] : memref<64x128xf32, #tpu.memory_space<vmem>>, vector<1x128xf32>
    %1104 = arith.mulf %1099, %1099 : vector<8x128xf32>
    %1105 = vector.broadcast %1103 : vector<1x128xf32> to vector<8x128xf32>
    %1106 = arith.mulf %1105, %1104 : vector<8x128xf32>
    %1107 = math.exp %1106 : vector<8x128xf32>
    %1108 = arith.mulf %1102, %1107 : vector<8x128xf32>
    %1109 = arith.addf %1079, %1108 : vector<8x128xf32>
    %1110 = vector.extract_strided_slice %507 {offsets = [0, 40], sizes = [8, 1], strides = [1, 1]} : vector<8x128xf32> to vector<8x1xf32>
    %c40 = arith.constant 40 : index
    %c0_406 = arith.constant 0 : index
    %1111 = vector.load %arg6[%c40, %c0_406] : memref<64x128xf32, #tpu.memory_space<vmem>>, vector<1x128xf32>
    %1112 = vector.broadcast %1110 : vector<8x1xf32> to vector<8x128xf32>
    %1113 = vector.broadcast %1111 : vector<1x128xf32> to vector<8x128xf32>
    %1114 = arith.subf %1112, %1113 : vector<8x128xf32>
    %c40_407 = arith.constant 40 : index
    %c0_408 = arith.constant 0 : index
    %1115 = vector.load %arg7[%c40_407, %c0_408] : memref<64x128xf32, #tpu.memory_space<vmem>>, vector<1x128xf32>
    %1116 = vector.broadcast %1115 : vector<1x128xf32> to vector<8x128xf32>
    %1117 = arith.mulf %1116, %1114 : vector<8x128xf32>
    %c40_409 = arith.constant 40 : index
    %c0_410 = arith.constant 0 : index
    %1118 = vector.load %arg8[%c40_409, %c0_410] : memref<64x128xf32, #tpu.memory_space<vmem>>, vector<1x128xf32>
    %1119 = arith.mulf %1114, %1114 : vector<8x128xf32>
    %1120 = vector.broadcast %1118 : vector<1x128xf32> to vector<8x128xf32>
    %1121 = arith.mulf %1120, %1119 : vector<8x128xf32>
    %1122 = math.exp %1121 : vector<8x128xf32>
    %1123 = arith.mulf %1117, %1122 : vector<8x128xf32>
    %1124 = arith.addf %1094, %1123 : vector<8x128xf32>
    %1125 = vector.extract_strided_slice %507 {offsets = [0, 41], sizes = [8, 1], strides = [1, 1]} : vector<8x128xf32> to vector<8x1xf32>
    %c41 = arith.constant 41 : index
    %c0_411 = arith.constant 0 : index
    %1126 = vector.load %arg6[%c41, %c0_411] : memref<64x128xf32, #tpu.memory_space<vmem>>, vector<1x128xf32>
    %1127 = vector.broadcast %1125 : vector<8x1xf32> to vector<8x128xf32>
    %1128 = vector.broadcast %1126 : vector<1x128xf32> to vector<8x128xf32>
    %1129 = arith.subf %1127, %1128 : vector<8x128xf32>
    %c41_412 = arith.constant 41 : index
    %c0_413 = arith.constant 0 : index
    %1130 = vector.load %arg7[%c41_412, %c0_413] : memref<64x128xf32, #tpu.memory_space<vmem>>, vector<1x128xf32>
    %1131 = vector.broadcast %1130 : vector<1x128xf32> to vector<8x128xf32>
    %1132 = arith.mulf %1131, %1129 : vector<8x128xf32>
    %c41_414 = arith.constant 41 : index
    %c0_415 = arith.constant 0 : index
    %1133 = vector.load %arg8[%c41_414, %c0_415] : memref<64x128xf32, #tpu.memory_space<vmem>>, vector<1x128xf32>
    %1134 = arith.mulf %1129, %1129 : vector<8x128xf32>
    %1135 = vector.broadcast %1133 : vector<1x128xf32> to vector<8x128xf32>
    %1136 = arith.mulf %1135, %1134 : vector<8x128xf32>
    %1137 = math.exp %1136 : vector<8x128xf32>
    %1138 = arith.mulf %1132, %1137 : vector<8x128xf32>
    %1139 = arith.addf %1109, %1138 : vector<8x128xf32>
    %1140 = vector.extract_strided_slice %507 {offsets = [0, 42], sizes = [8, 1], strides = [1, 1]} : vector<8x128xf32> to vector<8x1xf32>
    %c42 = arith.constant 42 : index
    %c0_416 = arith.constant 0 : index
    %1141 = vector.load %arg6[%c42, %c0_416] : memref<64x128xf32, #tpu.memory_space<vmem>>, vector<1x128xf32>
    %1142 = vector.broadcast %1140 : vector<8x1xf32> to vector<8x128xf32>
    %1143 = vector.broadcast %1141 : vector<1x128xf32> to vector<8x128xf32>
    %1144 = arith.subf %1142, %1143 : vector<8x128xf32>
    %c42_417 = arith.constant 42 : index
    %c0_418 = arith.constant 0 : index
    %1145 = vector.load %arg7[%c42_417, %c0_418] : memref<64x128xf32, #tpu.memory_space<vmem>>, vector<1x128xf32>
    %1146 = vector.broadcast %1145 : vector<1x128xf32> to vector<8x128xf32>
    %1147 = arith.mulf %1146, %1144 : vector<8x128xf32>
    %c42_419 = arith.constant 42 : index
    %c0_420 = arith.constant 0 : index
    %1148 = vector.load %arg8[%c42_419, %c0_420] : memref<64x128xf32, #tpu.memory_space<vmem>>, vector<1x128xf32>
    %1149 = arith.mulf %1144, %1144 : vector<8x128xf32>
    %1150 = vector.broadcast %1148 : vector<1x128xf32> to vector<8x128xf32>
    %1151 = arith.mulf %1150, %1149 : vector<8x128xf32>
    %1152 = math.exp %1151 : vector<8x128xf32>
    %1153 = arith.mulf %1147, %1152 : vector<8x128xf32>
    %1154 = arith.addf %1124, %1153 : vector<8x128xf32>
    %1155 = vector.extract_strided_slice %507 {offsets = [0, 43], sizes = [8, 1], strides = [1, 1]} : vector<8x128xf32> to vector<8x1xf32>
    %c43 = arith.constant 43 : index
    %c0_421 = arith.constant 0 : index
    %1156 = vector.load %arg6[%c43, %c0_421] : memref<64x128xf32, #tpu.memory_space<vmem>>, vector<1x128xf32>
    %1157 = vector.broadcast %1155 : vector<8x1xf32> to vector<8x128xf32>
    %1158 = vector.broadcast %1156 : vector<1x128xf32> to vector<8x128xf32>
    %1159 = arith.subf %1157, %1158 : vector<8x128xf32>
    %c43_422 = arith.constant 43 : index
    %c0_423 = arith.constant 0 : index
    %1160 = vector.load %arg7[%c43_422, %c0_423] : memref<64x128xf32, #tpu.memory_space<vmem>>, vector<1x128xf32>
    %1161 = vector.broadcast %1160 : vector<1x128xf32> to vector<8x128xf32>
    %1162 = arith.mulf %1161, %1159 : vector<8x128xf32>
    %c43_424 = arith.constant 43 : index
    %c0_425 = arith.constant 0 : index
    %1163 = vector.load %arg8[%c43_424, %c0_425] : memref<64x128xf32, #tpu.memory_space<vmem>>, vector<1x128xf32>
    %1164 = arith.mulf %1159, %1159 : vector<8x128xf32>
    %1165 = vector.broadcast %1163 : vector<1x128xf32> to vector<8x128xf32>
    %1166 = arith.mulf %1165, %1164 : vector<8x128xf32>
    %1167 = math.exp %1166 : vector<8x128xf32>
    %1168 = arith.mulf %1162, %1167 : vector<8x128xf32>
    %1169 = arith.addf %1139, %1168 : vector<8x128xf32>
    %1170 = vector.extract_strided_slice %507 {offsets = [0, 44], sizes = [8, 1], strides = [1, 1]} : vector<8x128xf32> to vector<8x1xf32>
    %c44 = arith.constant 44 : index
    %c0_426 = arith.constant 0 : index
    %1171 = vector.load %arg6[%c44, %c0_426] : memref<64x128xf32, #tpu.memory_space<vmem>>, vector<1x128xf32>
    %1172 = vector.broadcast %1170 : vector<8x1xf32> to vector<8x128xf32>
    %1173 = vector.broadcast %1171 : vector<1x128xf32> to vector<8x128xf32>
    %1174 = arith.subf %1172, %1173 : vector<8x128xf32>
    %c44_427 = arith.constant 44 : index
    %c0_428 = arith.constant 0 : index
    %1175 = vector.load %arg7[%c44_427, %c0_428] : memref<64x128xf32, #tpu.memory_space<vmem>>, vector<1x128xf32>
    %1176 = vector.broadcast %1175 : vector<1x128xf32> to vector<8x128xf32>
    %1177 = arith.mulf %1176, %1174 : vector<8x128xf32>
    %c44_429 = arith.constant 44 : index
    %c0_430 = arith.constant 0 : index
    %1178 = vector.load %arg8[%c44_429, %c0_430] : memref<64x128xf32, #tpu.memory_space<vmem>>, vector<1x128xf32>
    %1179 = arith.mulf %1174, %1174 : vector<8x128xf32>
    %1180 = vector.broadcast %1178 : vector<1x128xf32> to vector<8x128xf32>
    %1181 = arith.mulf %1180, %1179 : vector<8x128xf32>
    %1182 = math.exp %1181 : vector<8x128xf32>
    %1183 = arith.mulf %1177, %1182 : vector<8x128xf32>
    %1184 = arith.addf %1154, %1183 : vector<8x128xf32>
    %1185 = vector.extract_strided_slice %507 {offsets = [0, 45], sizes = [8, 1], strides = [1, 1]} : vector<8x128xf32> to vector<8x1xf32>
    %c45 = arith.constant 45 : index
    %c0_431 = arith.constant 0 : index
    %1186 = vector.load %arg6[%c45, %c0_431] : memref<64x128xf32, #tpu.memory_space<vmem>>, vector<1x128xf32>
    %1187 = vector.broadcast %1185 : vector<8x1xf32> to vector<8x128xf32>
    %1188 = vector.broadcast %1186 : vector<1x128xf32> to vector<8x128xf32>
    %1189 = arith.subf %1187, %1188 : vector<8x128xf32>
    %c45_432 = arith.constant 45 : index
    %c0_433 = arith.constant 0 : index
    %1190 = vector.load %arg7[%c45_432, %c0_433] : memref<64x128xf32, #tpu.memory_space<vmem>>, vector<1x128xf32>
    %1191 = vector.broadcast %1190 : vector<1x128xf32> to vector<8x128xf32>
    %1192 = arith.mulf %1191, %1189 : vector<8x128xf32>
    %c45_434 = arith.constant 45 : index
    %c0_435 = arith.constant 0 : index
    %1193 = vector.load %arg8[%c45_434, %c0_435] : memref<64x128xf32, #tpu.memory_space<vmem>>, vector<1x128xf32>
    %1194 = arith.mulf %1189, %1189 : vector<8x128xf32>
    %1195 = vector.broadcast %1193 : vector<1x128xf32> to vector<8x128xf32>
    %1196 = arith.mulf %1195, %1194 : vector<8x128xf32>
    %1197 = math.exp %1196 : vector<8x128xf32>
    %1198 = arith.mulf %1192, %1197 : vector<8x128xf32>
    %1199 = arith.addf %1169, %1198 : vector<8x128xf32>
    %1200 = vector.extract_strided_slice %507 {offsets = [0, 46], sizes = [8, 1], strides = [1, 1]} : vector<8x128xf32> to vector<8x1xf32>
    %c46 = arith.constant 46 : index
    %c0_436 = arith.constant 0 : index
    %1201 = vector.load %arg6[%c46, %c0_436] : memref<64x128xf32, #tpu.memory_space<vmem>>, vector<1x128xf32>
    %1202 = vector.broadcast %1200 : vector<8x1xf32> to vector<8x128xf32>
    %1203 = vector.broadcast %1201 : vector<1x128xf32> to vector<8x128xf32>
    %1204 = arith.subf %1202, %1203 : vector<8x128xf32>
    %c46_437 = arith.constant 46 : index
    %c0_438 = arith.constant 0 : index
    %1205 = vector.load %arg7[%c46_437, %c0_438] : memref<64x128xf32, #tpu.memory_space<vmem>>, vector<1x128xf32>
    %1206 = vector.broadcast %1205 : vector<1x128xf32> to vector<8x128xf32>
    %1207 = arith.mulf %1206, %1204 : vector<8x128xf32>
    %c46_439 = arith.constant 46 : index
    %c0_440 = arith.constant 0 : index
    %1208 = vector.load %arg8[%c46_439, %c0_440] : memref<64x128xf32, #tpu.memory_space<vmem>>, vector<1x128xf32>
    %1209 = arith.mulf %1204, %1204 : vector<8x128xf32>
    %1210 = vector.broadcast %1208 : vector<1x128xf32> to vector<8x128xf32>
    %1211 = arith.mulf %1210, %1209 : vector<8x128xf32>
    %1212 = math.exp %1211 : vector<8x128xf32>
    %1213 = arith.mulf %1207, %1212 : vector<8x128xf32>
    %1214 = arith.addf %1184, %1213 : vector<8x128xf32>
    %1215 = vector.extract_strided_slice %507 {offsets = [0, 47], sizes = [8, 1], strides = [1, 1]} : vector<8x128xf32> to vector<8x1xf32>
    %c47 = arith.constant 47 : index
    %c0_441 = arith.constant 0 : index
    %1216 = vector.load %arg6[%c47, %c0_441] : memref<64x128xf32, #tpu.memory_space<vmem>>, vector<1x128xf32>
    %1217 = vector.broadcast %1215 : vector<8x1xf32> to vector<8x128xf32>
    %1218 = vector.broadcast %1216 : vector<1x128xf32> to vector<8x128xf32>
    %1219 = arith.subf %1217, %1218 : vector<8x128xf32>
    %c47_442 = arith.constant 47 : index
    %c0_443 = arith.constant 0 : index
    %1220 = vector.load %arg7[%c47_442, %c0_443] : memref<64x128xf32, #tpu.memory_space<vmem>>, vector<1x128xf32>
    %1221 = vector.broadcast %1220 : vector<1x128xf32> to vector<8x128xf32>
    %1222 = arith.mulf %1221, %1219 : vector<8x128xf32>
    %c47_444 = arith.constant 47 : index
    %c0_445 = arith.constant 0 : index
    %1223 = vector.load %arg8[%c47_444, %c0_445] : memref<64x128xf32, #tpu.memory_space<vmem>>, vector<1x128xf32>
    %1224 = arith.mulf %1219, %1219 : vector<8x128xf32>
    %1225 = vector.broadcast %1223 : vector<1x128xf32> to vector<8x128xf32>
    %1226 = arith.mulf %1225, %1224 : vector<8x128xf32>
    %1227 = math.exp %1226 : vector<8x128xf32>
    %1228 = arith.mulf %1222, %1227 : vector<8x128xf32>
    %1229 = arith.addf %1199, %1228 : vector<8x128xf32>
    %1230 = vector.extract_strided_slice %507 {offsets = [0, 48], sizes = [8, 1], strides = [1, 1]} : vector<8x128xf32> to vector<8x1xf32>
    %c48 = arith.constant 48 : index
    %c0_446 = arith.constant 0 : index
    %1231 = vector.load %arg6[%c48, %c0_446] : memref<64x128xf32, #tpu.memory_space<vmem>>, vector<1x128xf32>
    %1232 = vector.broadcast %1230 : vector<8x1xf32> to vector<8x128xf32>
    %1233 = vector.broadcast %1231 : vector<1x128xf32> to vector<8x128xf32>
    %1234 = arith.subf %1232, %1233 : vector<8x128xf32>
    %c48_447 = arith.constant 48 : index
    %c0_448 = arith.constant 0 : index
    %1235 = vector.load %arg7[%c48_447, %c0_448] : memref<64x128xf32, #tpu.memory_space<vmem>>, vector<1x128xf32>
    %1236 = vector.broadcast %1235 : vector<1x128xf32> to vector<8x128xf32>
    %1237 = arith.mulf %1236, %1234 : vector<8x128xf32>
    %c48_449 = arith.constant 48 : index
    %c0_450 = arith.constant 0 : index
    %1238 = vector.load %arg8[%c48_449, %c0_450] : memref<64x128xf32, #tpu.memory_space<vmem>>, vector<1x128xf32>
    %1239 = arith.mulf %1234, %1234 : vector<8x128xf32>
    %1240 = vector.broadcast %1238 : vector<1x128xf32> to vector<8x128xf32>
    %1241 = arith.mulf %1240, %1239 : vector<8x128xf32>
    %1242 = math.exp %1241 : vector<8x128xf32>
    %1243 = arith.mulf %1237, %1242 : vector<8x128xf32>
    %1244 = arith.addf %1214, %1243 : vector<8x128xf32>
    %1245 = vector.extract_strided_slice %507 {offsets = [0, 49], sizes = [8, 1], strides = [1, 1]} : vector<8x128xf32> to vector<8x1xf32>
    %c49 = arith.constant 49 : index
    %c0_451 = arith.constant 0 : index
    %1246 = vector.load %arg6[%c49, %c0_451] : memref<64x128xf32, #tpu.memory_space<vmem>>, vector<1x128xf32>
    %1247 = vector.broadcast %1245 : vector<8x1xf32> to vector<8x128xf32>
    %1248 = vector.broadcast %1246 : vector<1x128xf32> to vector<8x128xf32>
    %1249 = arith.subf %1247, %1248 : vector<8x128xf32>
    %c49_452 = arith.constant 49 : index
    %c0_453 = arith.constant 0 : index
    %1250 = vector.load %arg7[%c49_452, %c0_453] : memref<64x128xf32, #tpu.memory_space<vmem>>, vector<1x128xf32>
    %1251 = vector.broadcast %1250 : vector<1x128xf32> to vector<8x128xf32>
    %1252 = arith.mulf %1251, %1249 : vector<8x128xf32>
    %c49_454 = arith.constant 49 : index
    %c0_455 = arith.constant 0 : index
    %1253 = vector.load %arg8[%c49_454, %c0_455] : memref<64x128xf32, #tpu.memory_space<vmem>>, vector<1x128xf32>
    %1254 = arith.mulf %1249, %1249 : vector<8x128xf32>
    %1255 = vector.broadcast %1253 : vector<1x128xf32> to vector<8x128xf32>
    %1256 = arith.mulf %1255, %1254 : vector<8x128xf32>
    %1257 = math.exp %1256 : vector<8x128xf32>
    %1258 = arith.mulf %1252, %1257 : vector<8x128xf32>
    %1259 = arith.addf %1229, %1258 : vector<8x128xf32>
    %1260 = vector.extract_strided_slice %507 {offsets = [0, 50], sizes = [8, 1], strides = [1, 1]} : vector<8x128xf32> to vector<8x1xf32>
    %c50 = arith.constant 50 : index
    %c0_456 = arith.constant 0 : index
    %1261 = vector.load %arg6[%c50, %c0_456] : memref<64x128xf32, #tpu.memory_space<vmem>>, vector<1x128xf32>
    %1262 = vector.broadcast %1260 : vector<8x1xf32> to vector<8x128xf32>
    %1263 = vector.broadcast %1261 : vector<1x128xf32> to vector<8x128xf32>
    %1264 = arith.subf %1262, %1263 : vector<8x128xf32>
    %c50_457 = arith.constant 50 : index
    %c0_458 = arith.constant 0 : index
    %1265 = vector.load %arg7[%c50_457, %c0_458] : memref<64x128xf32, #tpu.memory_space<vmem>>, vector<1x128xf32>
    %1266 = vector.broadcast %1265 : vector<1x128xf32> to vector<8x128xf32>
    %1267 = arith.mulf %1266, %1264 : vector<8x128xf32>
    %c50_459 = arith.constant 50 : index
    %c0_460 = arith.constant 0 : index
    %1268 = vector.load %arg8[%c50_459, %c0_460] : memref<64x128xf32, #tpu.memory_space<vmem>>, vector<1x128xf32>
    %1269 = arith.mulf %1264, %1264 : vector<8x128xf32>
    %1270 = vector.broadcast %1268 : vector<1x128xf32> to vector<8x128xf32>
    %1271 = arith.mulf %1270, %1269 : vector<8x128xf32>
    %1272 = math.exp %1271 : vector<8x128xf32>
    %1273 = arith.mulf %1267, %1272 : vector<8x128xf32>
    %1274 = arith.addf %1244, %1273 : vector<8x128xf32>
    %1275 = vector.extract_strided_slice %507 {offsets = [0, 51], sizes = [8, 1], strides = [1, 1]} : vector<8x128xf32> to vector<8x1xf32>
    %c51 = arith.constant 51 : index
    %c0_461 = arith.constant 0 : index
    %1276 = vector.load %arg6[%c51, %c0_461] : memref<64x128xf32, #tpu.memory_space<vmem>>, vector<1x128xf32>
    %1277 = vector.broadcast %1275 : vector<8x1xf32> to vector<8x128xf32>
    %1278 = vector.broadcast %1276 : vector<1x128xf32> to vector<8x128xf32>
    %1279 = arith.subf %1277, %1278 : vector<8x128xf32>
    %c51_462 = arith.constant 51 : index
    %c0_463 = arith.constant 0 : index
    %1280 = vector.load %arg7[%c51_462, %c0_463] : memref<64x128xf32, #tpu.memory_space<vmem>>, vector<1x128xf32>
    %1281 = vector.broadcast %1280 : vector<1x128xf32> to vector<8x128xf32>
    %1282 = arith.mulf %1281, %1279 : vector<8x128xf32>
    %c51_464 = arith.constant 51 : index
    %c0_465 = arith.constant 0 : index
    %1283 = vector.load %arg8[%c51_464, %c0_465] : memref<64x128xf32, #tpu.memory_space<vmem>>, vector<1x128xf32>
    %1284 = arith.mulf %1279, %1279 : vector<8x128xf32>
    %1285 = vector.broadcast %1283 : vector<1x128xf32> to vector<8x128xf32>
    %1286 = arith.mulf %1285, %1284 : vector<8x128xf32>
    %1287 = math.exp %1286 : vector<8x128xf32>
    %1288 = arith.mulf %1282, %1287 : vector<8x128xf32>
    %1289 = arith.addf %1259, %1288 : vector<8x128xf32>
    %1290 = vector.extract_strided_slice %507 {offsets = [0, 52], sizes = [8, 1], strides = [1, 1]} : vector<8x128xf32> to vector<8x1xf32>
    %c52 = arith.constant 52 : index
    %c0_466 = arith.constant 0 : index
    %1291 = vector.load %arg6[%c52, %c0_466] : memref<64x128xf32, #tpu.memory_space<vmem>>, vector<1x128xf32>
    %1292 = vector.broadcast %1290 : vector<8x1xf32> to vector<8x128xf32>
    %1293 = vector.broadcast %1291 : vector<1x128xf32> to vector<8x128xf32>
    %1294 = arith.subf %1292, %1293 : vector<8x128xf32>
    %c52_467 = arith.constant 52 : index
    %c0_468 = arith.constant 0 : index
    %1295 = vector.load %arg7[%c52_467, %c0_468] : memref<64x128xf32, #tpu.memory_space<vmem>>, vector<1x128xf32>
    %1296 = vector.broadcast %1295 : vector<1x128xf32> to vector<8x128xf32>
    %1297 = arith.mulf %1296, %1294 : vector<8x128xf32>
    %c52_469 = arith.constant 52 : index
    %c0_470 = arith.constant 0 : index
    %1298 = vector.load %arg8[%c52_469, %c0_470] : memref<64x128xf32, #tpu.memory_space<vmem>>, vector<1x128xf32>
    %1299 = arith.mulf %1294, %1294 : vector<8x128xf32>
    %1300 = vector.broadcast %1298 : vector<1x128xf32> to vector<8x128xf32>
    %1301 = arith.mulf %1300, %1299 : vector<8x128xf32>
    %1302 = math.exp %1301 : vector<8x128xf32>
    %1303 = arith.mulf %1297, %1302 : vector<8x128xf32>
    %1304 = arith.addf %1274, %1303 : vector<8x128xf32>
    %1305 = vector.extract_strided_slice %507 {offsets = [0, 53], sizes = [8, 1], strides = [1, 1]} : vector<8x128xf32> to vector<8x1xf32>
    %c53 = arith.constant 53 : index
    %c0_471 = arith.constant 0 : index
    %1306 = vector.load %arg6[%c53, %c0_471] : memref<64x128xf32, #tpu.memory_space<vmem>>, vector<1x128xf32>
    %1307 = vector.broadcast %1305 : vector<8x1xf32> to vector<8x128xf32>
    %1308 = vector.broadcast %1306 : vector<1x128xf32> to vector<8x128xf32>
    %1309 = arith.subf %1307, %1308 : vector<8x128xf32>
    %c53_472 = arith.constant 53 : index
    %c0_473 = arith.constant 0 : index
    %1310 = vector.load %arg7[%c53_472, %c0_473] : memref<64x128xf32, #tpu.memory_space<vmem>>, vector<1x128xf32>
    %1311 = vector.broadcast %1310 : vector<1x128xf32> to vector<8x128xf32>
    %1312 = arith.mulf %1311, %1309 : vector<8x128xf32>
    %c53_474 = arith.constant 53 : index
    %c0_475 = arith.constant 0 : index
    %1313 = vector.load %arg8[%c53_474, %c0_475] : memref<64x128xf32, #tpu.memory_space<vmem>>, vector<1x128xf32>
    %1314 = arith.mulf %1309, %1309 : vector<8x128xf32>
    %1315 = vector.broadcast %1313 : vector<1x128xf32> to vector<8x128xf32>
    %1316 = arith.mulf %1315, %1314 : vector<8x128xf32>
    %1317 = math.exp %1316 : vector<8x128xf32>
    %1318 = arith.mulf %1312, %1317 : vector<8x128xf32>
    %1319 = arith.addf %1289, %1318 : vector<8x128xf32>
    %1320 = vector.extract_strided_slice %507 {offsets = [0, 54], sizes = [8, 1], strides = [1, 1]} : vector<8x128xf32> to vector<8x1xf32>
    %c54 = arith.constant 54 : index
    %c0_476 = arith.constant 0 : index
    %1321 = vector.load %arg6[%c54, %c0_476] : memref<64x128xf32, #tpu.memory_space<vmem>>, vector<1x128xf32>
    %1322 = vector.broadcast %1320 : vector<8x1xf32> to vector<8x128xf32>
    %1323 = vector.broadcast %1321 : vector<1x128xf32> to vector<8x128xf32>
    %1324 = arith.subf %1322, %1323 : vector<8x128xf32>
    %c54_477 = arith.constant 54 : index
    %c0_478 = arith.constant 0 : index
    %1325 = vector.load %arg7[%c54_477, %c0_478] : memref<64x128xf32, #tpu.memory_space<vmem>>, vector<1x128xf32>
    %1326 = vector.broadcast %1325 : vector<1x128xf32> to vector<8x128xf32>
    %1327 = arith.mulf %1326, %1324 : vector<8x128xf32>
    %c54_479 = arith.constant 54 : index
    %c0_480 = arith.constant 0 : index
    %1328 = vector.load %arg8[%c54_479, %c0_480] : memref<64x128xf32, #tpu.memory_space<vmem>>, vector<1x128xf32>
    %1329 = arith.mulf %1324, %1324 : vector<8x128xf32>
    %1330 = vector.broadcast %1328 : vector<1x128xf32> to vector<8x128xf32>
    %1331 = arith.mulf %1330, %1329 : vector<8x128xf32>
    %1332 = math.exp %1331 : vector<8x128xf32>
    %1333 = arith.mulf %1327, %1332 : vector<8x128xf32>
    %1334 = arith.addf %1304, %1333 : vector<8x128xf32>
    %1335 = vector.extract_strided_slice %507 {offsets = [0, 55], sizes = [8, 1], strides = [1, 1]} : vector<8x128xf32> to vector<8x1xf32>
    %c55 = arith.constant 55 : index
    %c0_481 = arith.constant 0 : index
    %1336 = vector.load %arg6[%c55, %c0_481] : memref<64x128xf32, #tpu.memory_space<vmem>>, vector<1x128xf32>
    %1337 = vector.broadcast %1335 : vector<8x1xf32> to vector<8x128xf32>
    %1338 = vector.broadcast %1336 : vector<1x128xf32> to vector<8x128xf32>
    %1339 = arith.subf %1337, %1338 : vector<8x128xf32>
    %c55_482 = arith.constant 55 : index
    %c0_483 = arith.constant 0 : index
    %1340 = vector.load %arg7[%c55_482, %c0_483] : memref<64x128xf32, #tpu.memory_space<vmem>>, vector<1x128xf32>
    %1341 = vector.broadcast %1340 : vector<1x128xf32> to vector<8x128xf32>
    %1342 = arith.mulf %1341, %1339 : vector<8x128xf32>
    %c55_484 = arith.constant 55 : index
    %c0_485 = arith.constant 0 : index
    %1343 = vector.load %arg8[%c55_484, %c0_485] : memref<64x128xf32, #tpu.memory_space<vmem>>, vector<1x128xf32>
    %1344 = arith.mulf %1339, %1339 : vector<8x128xf32>
    %1345 = vector.broadcast %1343 : vector<1x128xf32> to vector<8x128xf32>
    %1346 = arith.mulf %1345, %1344 : vector<8x128xf32>
    %1347 = math.exp %1346 : vector<8x128xf32>
    %1348 = arith.mulf %1342, %1347 : vector<8x128xf32>
    %1349 = arith.addf %1319, %1348 : vector<8x128xf32>
    %1350 = vector.extract_strided_slice %507 {offsets = [0, 56], sizes = [8, 1], strides = [1, 1]} : vector<8x128xf32> to vector<8x1xf32>
    %c56 = arith.constant 56 : index
    %c0_486 = arith.constant 0 : index
    %1351 = vector.load %arg6[%c56, %c0_486] : memref<64x128xf32, #tpu.memory_space<vmem>>, vector<1x128xf32>
    %1352 = vector.broadcast %1350 : vector<8x1xf32> to vector<8x128xf32>
    %1353 = vector.broadcast %1351 : vector<1x128xf32> to vector<8x128xf32>
    %1354 = arith.subf %1352, %1353 : vector<8x128xf32>
    %c56_487 = arith.constant 56 : index
    %c0_488 = arith.constant 0 : index
    %1355 = vector.load %arg7[%c56_487, %c0_488] : memref<64x128xf32, #tpu.memory_space<vmem>>, vector<1x128xf32>
    %1356 = vector.broadcast %1355 : vector<1x128xf32> to vector<8x128xf32>
    %1357 = arith.mulf %1356, %1354 : vector<8x128xf32>
    %c56_489 = arith.constant 56 : index
    %c0_490 = arith.constant 0 : index
    %1358 = vector.load %arg8[%c56_489, %c0_490] : memref<64x128xf32, #tpu.memory_space<vmem>>, vector<1x128xf32>
    %1359 = arith.mulf %1354, %1354 : vector<8x128xf32>
    %1360 = vector.broadcast %1358 : vector<1x128xf32> to vector<8x128xf32>
    %1361 = arith.mulf %1360, %1359 : vector<8x128xf32>
    %1362 = math.exp %1361 : vector<8x128xf32>
    %1363 = arith.mulf %1357, %1362 : vector<8x128xf32>
    %1364 = arith.addf %1334, %1363 : vector<8x128xf32>
    %1365 = vector.extract_strided_slice %507 {offsets = [0, 57], sizes = [8, 1], strides = [1, 1]} : vector<8x128xf32> to vector<8x1xf32>
    %c57 = arith.constant 57 : index
    %c0_491 = arith.constant 0 : index
    %1366 = vector.load %arg6[%c57, %c0_491] : memref<64x128xf32, #tpu.memory_space<vmem>>, vector<1x128xf32>
    %1367 = vector.broadcast %1365 : vector<8x1xf32> to vector<8x128xf32>
    %1368 = vector.broadcast %1366 : vector<1x128xf32> to vector<8x128xf32>
    %1369 = arith.subf %1367, %1368 : vector<8x128xf32>
    %c57_492 = arith.constant 57 : index
    %c0_493 = arith.constant 0 : index
    %1370 = vector.load %arg7[%c57_492, %c0_493] : memref<64x128xf32, #tpu.memory_space<vmem>>, vector<1x128xf32>
    %1371 = vector.broadcast %1370 : vector<1x128xf32> to vector<8x128xf32>
    %1372 = arith.mulf %1371, %1369 : vector<8x128xf32>
    %c57_494 = arith.constant 57 : index
    %c0_495 = arith.constant 0 : index
    %1373 = vector.load %arg8[%c57_494, %c0_495] : memref<64x128xf32, #tpu.memory_space<vmem>>, vector<1x128xf32>
    %1374 = arith.mulf %1369, %1369 : vector<8x128xf32>
    %1375 = vector.broadcast %1373 : vector<1x128xf32> to vector<8x128xf32>
    %1376 = arith.mulf %1375, %1374 : vector<8x128xf32>
    %1377 = math.exp %1376 : vector<8x128xf32>
    %1378 = arith.mulf %1372, %1377 : vector<8x128xf32>
    %1379 = arith.addf %1349, %1378 : vector<8x128xf32>
    %1380 = vector.extract_strided_slice %507 {offsets = [0, 58], sizes = [8, 1], strides = [1, 1]} : vector<8x128xf32> to vector<8x1xf32>
    %c58 = arith.constant 58 : index
    %c0_496 = arith.constant 0 : index
    %1381 = vector.load %arg6[%c58, %c0_496] : memref<64x128xf32, #tpu.memory_space<vmem>>, vector<1x128xf32>
    %1382 = vector.broadcast %1380 : vector<8x1xf32> to vector<8x128xf32>
    %1383 = vector.broadcast %1381 : vector<1x128xf32> to vector<8x128xf32>
    %1384 = arith.subf %1382, %1383 : vector<8x128xf32>
    %c58_497 = arith.constant 58 : index
    %c0_498 = arith.constant 0 : index
    %1385 = vector.load %arg7[%c58_497, %c0_498] : memref<64x128xf32, #tpu.memory_space<vmem>>, vector<1x128xf32>
    %1386 = vector.broadcast %1385 : vector<1x128xf32> to vector<8x128xf32>
    %1387 = arith.mulf %1386, %1384 : vector<8x128xf32>
    %c58_499 = arith.constant 58 : index
    %c0_500 = arith.constant 0 : index
    %1388 = vector.load %arg8[%c58_499, %c0_500] : memref<64x128xf32, #tpu.memory_space<vmem>>, vector<1x128xf32>
    %1389 = arith.mulf %1384, %1384 : vector<8x128xf32>
    %1390 = vector.broadcast %1388 : vector<1x128xf32> to vector<8x128xf32>
    %1391 = arith.mulf %1390, %1389 : vector<8x128xf32>
    %1392 = math.exp %1391 : vector<8x128xf32>
    %1393 = arith.mulf %1387, %1392 : vector<8x128xf32>
    %1394 = arith.addf %1364, %1393 : vector<8x128xf32>
    %1395 = vector.extract_strided_slice %507 {offsets = [0, 59], sizes = [8, 1], strides = [1, 1]} : vector<8x128xf32> to vector<8x1xf32>
    %c59 = arith.constant 59 : index
    %c0_501 = arith.constant 0 : index
    %1396 = vector.load %arg6[%c59, %c0_501] : memref<64x128xf32, #tpu.memory_space<vmem>>, vector<1x128xf32>
    %1397 = vector.broadcast %1395 : vector<8x1xf32> to vector<8x128xf32>
    %1398 = vector.broadcast %1396 : vector<1x128xf32> to vector<8x128xf32>
    %1399 = arith.subf %1397, %1398 : vector<8x128xf32>
    %c59_502 = arith.constant 59 : index
    %c0_503 = arith.constant 0 : index
    %1400 = vector.load %arg7[%c59_502, %c0_503] : memref<64x128xf32, #tpu.memory_space<vmem>>, vector<1x128xf32>
    %1401 = vector.broadcast %1400 : vector<1x128xf32> to vector<8x128xf32>
    %1402 = arith.mulf %1401, %1399 : vector<8x128xf32>
    %c59_504 = arith.constant 59 : index
    %c0_505 = arith.constant 0 : index
    %1403 = vector.load %arg8[%c59_504, %c0_505] : memref<64x128xf32, #tpu.memory_space<vmem>>, vector<1x128xf32>
    %1404 = arith.mulf %1399, %1399 : vector<8x128xf32>
    %1405 = vector.broadcast %1403 : vector<1x128xf32> to vector<8x128xf32>
    %1406 = arith.mulf %1405, %1404 : vector<8x128xf32>
    %1407 = math.exp %1406 : vector<8x128xf32>
    %1408 = arith.mulf %1402, %1407 : vector<8x128xf32>
    %1409 = arith.addf %1379, %1408 : vector<8x128xf32>
    %1410 = vector.extract_strided_slice %507 {offsets = [0, 60], sizes = [8, 1], strides = [1, 1]} : vector<8x128xf32> to vector<8x1xf32>
    %c60 = arith.constant 60 : index
    %c0_506 = arith.constant 0 : index
    %1411 = vector.load %arg6[%c60, %c0_506] : memref<64x128xf32, #tpu.memory_space<vmem>>, vector<1x128xf32>
    %1412 = vector.broadcast %1410 : vector<8x1xf32> to vector<8x128xf32>
    %1413 = vector.broadcast %1411 : vector<1x128xf32> to vector<8x128xf32>
    %1414 = arith.subf %1412, %1413 : vector<8x128xf32>
    %c60_507 = arith.constant 60 : index
    %c0_508 = arith.constant 0 : index
    %1415 = vector.load %arg7[%c60_507, %c0_508] : memref<64x128xf32, #tpu.memory_space<vmem>>, vector<1x128xf32>
    %1416 = vector.broadcast %1415 : vector<1x128xf32> to vector<8x128xf32>
    %1417 = arith.mulf %1416, %1414 : vector<8x128xf32>
    %c60_509 = arith.constant 60 : index
    %c0_510 = arith.constant 0 : index
    %1418 = vector.load %arg8[%c60_509, %c0_510] : memref<64x128xf32, #tpu.memory_space<vmem>>, vector<1x128xf32>
    %1419 = arith.mulf %1414, %1414 : vector<8x128xf32>
    %1420 = vector.broadcast %1418 : vector<1x128xf32> to vector<8x128xf32>
    %1421 = arith.mulf %1420, %1419 : vector<8x128xf32>
    %1422 = math.exp %1421 : vector<8x128xf32>
    %1423 = arith.mulf %1417, %1422 : vector<8x128xf32>
    %1424 = arith.addf %1394, %1423 : vector<8x128xf32>
    %1425 = vector.extract_strided_slice %507 {offsets = [0, 61], sizes = [8, 1], strides = [1, 1]} : vector<8x128xf32> to vector<8x1xf32>
    %c61 = arith.constant 61 : index
    %c0_511 = arith.constant 0 : index
    %1426 = vector.load %arg6[%c61, %c0_511] : memref<64x128xf32, #tpu.memory_space<vmem>>, vector<1x128xf32>
    %1427 = vector.broadcast %1425 : vector<8x1xf32> to vector<8x128xf32>
    %1428 = vector.broadcast %1426 : vector<1x128xf32> to vector<8x128xf32>
    %1429 = arith.subf %1427, %1428 : vector<8x128xf32>
    %c61_512 = arith.constant 61 : index
    %c0_513 = arith.constant 0 : index
    %1430 = vector.load %arg7[%c61_512, %c0_513] : memref<64x128xf32, #tpu.memory_space<vmem>>, vector<1x128xf32>
    %1431 = vector.broadcast %1430 : vector<1x128xf32> to vector<8x128xf32>
    %1432 = arith.mulf %1431, %1429 : vector<8x128xf32>
    %c61_514 = arith.constant 61 : index
    %c0_515 = arith.constant 0 : index
    %1433 = vector.load %arg8[%c61_514, %c0_515] : memref<64x128xf32, #tpu.memory_space<vmem>>, vector<1x128xf32>
    %1434 = arith.mulf %1429, %1429 : vector<8x128xf32>
    %1435 = vector.broadcast %1433 : vector<1x128xf32> to vector<8x128xf32>
    %1436 = arith.mulf %1435, %1434 : vector<8x128xf32>
    %1437 = math.exp %1436 : vector<8x128xf32>
    %1438 = arith.mulf %1432, %1437 : vector<8x128xf32>
    %1439 = arith.addf %1409, %1438 : vector<8x128xf32>
    %1440 = vector.extract_strided_slice %507 {offsets = [0, 62], sizes = [8, 1], strides = [1, 1]} : vector<8x128xf32> to vector<8x1xf32>
    %c62 = arith.constant 62 : index
    %c0_516 = arith.constant 0 : index
    %1441 = vector.load %arg6[%c62, %c0_516] : memref<64x128xf32, #tpu.memory_space<vmem>>, vector<1x128xf32>
    %1442 = vector.broadcast %1440 : vector<8x1xf32> to vector<8x128xf32>
    %1443 = vector.broadcast %1441 : vector<1x128xf32> to vector<8x128xf32>
    %1444 = arith.subf %1442, %1443 : vector<8x128xf32>
    %c62_517 = arith.constant 62 : index
    %c0_518 = arith.constant 0 : index
    %1445 = vector.load %arg7[%c62_517, %c0_518] : memref<64x128xf32, #tpu.memory_space<vmem>>, vector<1x128xf32>
    %1446 = vector.broadcast %1445 : vector<1x128xf32> to vector<8x128xf32>
    %1447 = arith.mulf %1446, %1444 : vector<8x128xf32>
    %c62_519 = arith.constant 62 : index
    %c0_520 = arith.constant 0 : index
    %1448 = vector.load %arg8[%c62_519, %c0_520] : memref<64x128xf32, #tpu.memory_space<vmem>>, vector<1x128xf32>
    %1449 = arith.mulf %1444, %1444 : vector<8x128xf32>
    %1450 = vector.broadcast %1448 : vector<1x128xf32> to vector<8x128xf32>
    %1451 = arith.mulf %1450, %1449 : vector<8x128xf32>
    %1452 = math.exp %1451 : vector<8x128xf32>
    %1453 = arith.mulf %1447, %1452 : vector<8x128xf32>
    %1454 = arith.addf %1424, %1453 : vector<8x128xf32>
    %1455 = vector.extract_strided_slice %507 {offsets = [0, 63], sizes = [8, 1], strides = [1, 1]} : vector<8x128xf32> to vector<8x1xf32>
    %c63 = arith.constant 63 : index
    %c0_521 = arith.constant 0 : index
    %1456 = vector.load %arg6[%c63, %c0_521] : memref<64x128xf32, #tpu.memory_space<vmem>>, vector<1x128xf32>
    %1457 = vector.broadcast %1455 : vector<8x1xf32> to vector<8x128xf32>
    %1458 = vector.broadcast %1456 : vector<1x128xf32> to vector<8x128xf32>
    %1459 = arith.subf %1457, %1458 : vector<8x128xf32>
    %c63_522 = arith.constant 63 : index
    %c0_523 = arith.constant 0 : index
    %1460 = vector.load %arg7[%c63_522, %c0_523] : memref<64x128xf32, #tpu.memory_space<vmem>>, vector<1x128xf32>
    %1461 = vector.broadcast %1460 : vector<1x128xf32> to vector<8x128xf32>
    %1462 = arith.mulf %1461, %1459 : vector<8x128xf32>
    %c63_524 = arith.constant 63 : index
    %c0_525 = arith.constant 0 : index
    %1463 = vector.load %arg8[%c63_524, %c0_525] : memref<64x128xf32, #tpu.memory_space<vmem>>, vector<1x128xf32>
    %1464 = arith.mulf %1459, %1459 : vector<8x128xf32>
    %1465 = vector.broadcast %1463 : vector<1x128xf32> to vector<8x128xf32>
    %1466 = arith.mulf %1465, %1464 : vector<8x128xf32>
    %1467 = math.exp %1466 : vector<8x128xf32>
    %1468 = arith.mulf %1462, %1467 : vector<8x128xf32>
    %1469 = arith.addf %1439, %1468 : vector<8x128xf32>
    %1470 = arith.addf %1454, %1469 : vector<8x128xf32>
    %cst_526 = arith.constant dense<0.000000e+00> : vector<128xf32>
    %1471 = vector.multi_reduction <add>, %1470, %cst_526 [0] : vector<8x128xf32> to vector<128xf32>
    %1472 = vector.shape_cast %1471 : vector<128xf32> to vector<1x128xf32>
    %cst_527 = arith.constant 8.000000e+00 : f32
    %1473 = vector.broadcast %cst_527 : f32 to vector<1x128xf32>
    %1474 = arith.divf %1472, %1473 : vector<1x128xf32>
    %1475 = vector.broadcast %1474 : vector<1x128xf32> to vector<8x128xf32>
    %1476 = arith.subf %1470, %1475 : vector<8x128xf32>
    %1477 = arith.mulf %1476, %1476 : vector<8x128xf32>
    %cst_528 = arith.constant dense<0.000000e+00> : vector<128xf32>
    %1478 = vector.multi_reduction <add>, %1477, %cst_528 [0] : vector<8x128xf32> to vector<128xf32>
    %1479 = vector.shape_cast %1478 : vector<128xf32> to vector<1x128xf32>
    %cst_529 = arith.constant 8.000000e+00 : f32
    %1480 = vector.broadcast %cst_529 : f32 to vector<1x128xf32>
    %1481 = arith.divf %1479, %1480 : vector<1x128xf32>
    %1482 = vector.broadcast %1474 : vector<1x128xf32> to vector<8x128xf32>
    %1483 = arith.subf %1470, %1482 : vector<8x128xf32>
    %cst_530 = arith.constant 9.99999974E-6 : f32
    %1484 = vector.broadcast %cst_530 : f32 to vector<1x128xf32>
    %1485 = arith.addf %1481, %1484 : vector<1x128xf32>
    %1486 = math.rsqrt %1485 : vector<1x128xf32>
    %1487 = vector.broadcast %1486 : vector<1x128xf32> to vector<8x128xf32>
    %1488 = arith.mulf %1483, %1487 : vector<8x128xf32>
    %c0_531 = arith.constant 0 : index
    %c0_532 = arith.constant 0 : index
    %1489 = vector.load %arg9[%c0_531, %c0_532] : memref<1x128xf32, #tpu.memory_space<vmem>>, vector<1x128xf32>
    %1490 = vector.broadcast %1489 : vector<1x128xf32> to vector<8x128xf32>
    %1491 = arith.mulf %1488, %1490 : vector<8x128xf32>
    %c0_533 = arith.constant 0 : index
    %c0_534 = arith.constant 0 : index
    %1492 = vector.load %arg10[%c0_533, %c0_534] : memref<1x128xf32, #tpu.memory_space<vmem>>, vector<1x128xf32>
    %1493 = vector.broadcast %1492 : vector<1x128xf32> to vector<8x128xf32>
    %1494 = arith.addf %1491, %1493 : vector<8x128xf32>
    %c0_535 = arith.constant 0 : index
    %c0_536 = arith.constant 0 : index
    %1495 = vector.load %arg11[%c0_535, %c0_536] : memref<8x128xf32, #tpu.memory_space<vmem>>, vector<8x128xf32>
    tpu.vector_store %arg11[%c0_535, %c0_536], %1494 {strides = array<i32>} : memref<8x128xf32, #tpu.memory_space<vmem>>, vector<8x128xf32>,
    return
  }
}

</mosaic_0001>

<llo_original>
// kernel: tpu_custom_call.1
$region0: #{tpu_custom_call.1}
  #allocation0 [shape = 'u32[]', space=smem, size = 0x4, offset = 0x4, fixed_abs, tag = 'smem constant byte address 0x4 - core index']
  #allocation1 [shape = 'u32[144,128]{1,0:T(1,128)}', space=vmem, size = 0x12000, scoped, tag = 'internal scratch']
  %s0 = inlined_call_operand.hbm [shape: f32[8,128], index: 0, kind: input, shape index: {}]
  %s1 = inlined_call_operand.hbm [shape: f32[32,128], index: 1, kind: input, shape index: {}]
  %s2 = inlined_call_operand.hbm [shape: f32[32,128], index: 2, kind: input, shape index: {}]
  %s3 = inlined_call_operand.hbm [shape: f32[32,128], index: 3, kind: input, shape index: {}]
  %s4 = inlined_call_operand.vmem [shape: f32[1,128], index: 4, kind: input, shape index: {}]
  %s5 = inlined_call_operand.vmem [shape: f32[1,128], index: 5, kind: input, shape index: {}]
  %s6 = inlined_call_operand.hbm [shape: f32[64,128], index: 6, kind: input, shape index: {}]
  %s7 = inlined_call_operand.hbm [shape: f32[64,128], index: 7, kind: input, shape index: {}]
  %s8 = inlined_call_operand.hbm [shape: f32[64,128], index: 8, kind: input, shape index: {}]
  %s9 = inlined_call_operand.vmem [shape: f32[1,128], index: 9, kind: input, shape index: {}]
  %s10 = inlined_call_operand.vmem [shape: f32[1,128], index: 10, kind: input, shape index: {}]
  %s11 = inlined_call_operand.hbm [shape: f32[8,128], index: 11, kind: output, shape index: {}]
  %s12 = sld [smem:[#allocation0]]
  $region82: #{tpu_custom_call.1} parent=0
    _
  %s14 = ssub.s32 1, %s12
  %s15 = scalar_select 0, %s14, %s12
  $region1: #{tpu_custom_call.1} parent=0
    #allocation2 [shape = 'u8[4096]{0}', space=vmem, size = 0x1000, scoped, tag = 'input window, operand 0, single buffered']
    #allocation3 [shape = 's32[1]{0}', space=sflag, size = 0x4, scoped, tag = 'scoped memory for tpu_custom_call.1']
    #allocation4 [shape = 's32[1]{0}', space=sflag, size = 0x4, scoped, tag = 'scoped memory for tpu_custom_call.1']
    #allocation5 [shape = 'u8[16384]{0}', space=vmem, size = 0x4000, scoped, tag = 'input window, operand 1, single buffered']
    #allocation6 [shape = 's32[1]{0}', space=sflag, size = 0x4, scoped, tag = 'scoped memory for tpu_custom_call.1']
    #allocation7 [shape = 'u8[16384]{0}', space=vmem, size = 0x4000, scoped, tag = 'input window, operand 2, single buffered']
    #allocation8 [shape = 'u8[16384]{0}', space=vmem, size = 0x4000, scoped, tag = 'input window, operand 3, single buffered']
    #allocation9 [shape = 's32[1]{0}', space=sflag, size = 0x4, scoped, tag = 'scoped memory for tpu_custom_call.1']
    #allocation10 [shape = 'u8[32768]{0}', space=vmem, size = 0x8000, scoped, tag = 'input window, operand 6, single buffered']
    #allocation11 [shape = 'u8[32768]{0}', space=vmem, size = 0x8000, scoped, tag = 'input window, operand 7, single buffered']
    #allocation12 [shape = 's32[1]{0}', space=sflag, size = 0x4, scoped, tag = 'scoped memory for tpu_custom_call.1']
    #allocation13 [shape = 'u8[32768]{0}', space=vmem, size = 0x8000, scoped, tag = 'input window, operand 8, single buffered']
    #allocation14 [shape = 'u8[4096]{0}', space=vmem, size = 0x1000, scoped, tag = 'output window, operand 0, single buffered']
    %16 = vsyncpa [#allocation3], 0
    %17 = vsyncpa [#allocation6], 0
    %18 = vsyncpa [#allocation9], 0
    %19 = vsyncpa [#allocation12], 0
    %20 = vsyncpa [#allocation4], 0
    // Predicated region
    $region2: #{tpu_custom_call.1} parent=1 // pred_check
      _
    $region3: #{tpu_custom_call.1} parent=1 // pred_check_branch
      %22 = sbr.rel (0) target = $region5
    $region4: #{tpu_custom_call.1} parent=1 // pred_region
      %s24 = ssub.s32 128, 128
      %25 = vsyncadd [#allocation3], %s24
      %s27 = sshll.u32 [#allocation2], 4
      %s28 = int_to_ptr.vmem [resolvable:$true] %s27
      %30 = dma.hbm_to_vmem [thread:$0]  %s0, 128, %s28, [#allocation3]
    $region5: #{tpu_custom_call.1} parent=1 // pred_fallthru
      _
    // Predicated region
    $region6: #{tpu_custom_call.1} parent=1 // pred_check
      _
    $region7: #{tpu_custom_call.1} parent=1 // pred_check_branch
      %32 = sbr.rel (0) target = $region9
    $region8: #{tpu_custom_call.1} parent=1 // pred_region
      %s34 = ssub.s32 512, 512
      %35 = vsyncadd [#allocation6], %s34
      %s36 = sshll.u32 [#allocation5], 4
      %s37 = int_to_ptr.vmem [resolvable:$true] %s36
      %42 = dma.hbm_to_vmem [thread:$0]  %s1, 512, %s37, [#allocation6], 128, 128, 8
    $region9: #{tpu_custom_call.1} parent=1 // pred_fallthru
      _
    // Predicated region
    $region10: #{tpu_custom_call.1} parent=1 // pred_check
      _
    $region11: #{tpu_custom_call.1} parent=1 // pred_check_branch
      %44 = sbr.rel (0) target = $region13
    $region12: #{tpu_custom_call.1} parent=1 // pred_region
      %s46 = ssub.s32 512, 512
      %47 = vsyncadd [#allocation6], %s46
      %s48 = sshll.u32 [#allocation7], 4
      %s49 = int_to_ptr.vmem [resolvable:$true] %s48
      %54 = dma.hbm_to_vmem [thread:$0]  %s2, 512, %s49, [#allocation6], 128, 128, 8
    $region13: #{tpu_custom_call.1} parent=1 // pred_fallthru
      _
    // Predicated region
    $region14: #{tpu_custom_call.1} parent=1 // pred_check
      _
    $region15: #{tpu_custom_call.1} parent=1 // pred_check_branch
      %56 = sbr.rel (0) target = $region17
    $region16: #{tpu_custom_call.1} parent=1 // pred_region
      %s58 = ssub.s32 512, 512
      %59 = vsyncadd [#allocation9], %s58
      %s60 = sshll.u32 [#allocation8], 4
      %s61 = int_to_ptr.vmem [resolvable:$true] %s60
      %66 = dma.hbm_to_vmem [thread:$0]  %s3, 512, %s61, [#allocation9], 128, 128, 8
    $region17: #{tpu_custom_call.1} parent=1 // pred_fallthru
      _
    // Predicated region
    $region18: #{tpu_custom_call.1} parent=1 // pred_check
      _
    $region19: #{tpu_custom_call.1} parent=1 // pred_check_branch
      %68 = sbr.rel (0) target = $region21
    $region20: #{tpu_custom_call.1} parent=1 // pred_region
      _
    $region21: #{tpu_custom_call.1} parent=1 // pred_fallthru
      _
    // Predicated region
    $region22: #{tpu_custom_call.1} parent=1 // pred_check
      _
    $region23: #{tpu_custom_call.1} parent=1 // pred_check_branch
      %70 = sbr.rel (0) target = $region25
    $region24: #{tpu_custom_call.1} parent=1 // pred_region
      _
    $region25: #{tpu_custom_call.1} parent=1 // pred_fallthru
      _
    // Predicated region
    $region26: #{tpu_custom_call.1} parent=1 // pred_check
      _
    $region27: #{tpu_custom_call.1} parent=1 // pred_check_branch
      %72 = sbr.rel (0) target = $region29
    $region28: #{tpu_custom_call.1} parent=1 // pred_region
      %s74 = ssub.s32 1024, 1024
      %75 = vsyncadd [#allocation9], %s74
      %s76 = sshll.u32 [#allocation10], 4
      %s77 = int_to_ptr.vmem [resolvable:$true] %s76
      %82 = dma.hbm_to_vmem [thread:$0]  %s6, 1024, %s77, [#allocation9], 128, 128, 8
    $region29: #{tpu_custom_call.1} parent=1 // pred_fallthru
      _
    // Predicated region
    $region30: #{tpu_custom_call.1} parent=1 // pred_check
      _
    $region31: #{tpu_custom_call.1} parent=1 // pred_check_branch
      %84 = sbr.rel (0) target = $region33
    $region32: #{tpu_custom_call.1} parent=1 // pred_region
      %s86 = ssub.s32 1024, 1024
      %87 = vsyncadd [#allocation12], %s86
      %s88 = sshll.u32 [#allocation11], 4
      %s89 = int_to_ptr.vmem [resolvable:$true] %s88
      %94 = dma.hbm_to_vmem [thread:$0]  %s7, 1024, %s89, [#allocation12], 128, 128, 8
    $region33: #{tpu_custom_call.1} parent=1 // pred_fallthru
      _
    // Predicated region
    $region34: #{tpu_custom_call.1} parent=1 // pred_check
      _
    $region35: #{tpu_custom_call.1} parent=1 // pred_check_branch
      %96 = sbr.rel (0) target = $region37
    $region36: #{tpu_custom_call.1} parent=1 // pred_region
      %s98 = ssub.s32 1024, 1024
      %99 = vsyncadd [#allocation12], %s98
      %s100 = sshll.u32 [#allocation13], 4
      %s101 = int_to_ptr.vmem [resolvable:$true] %s100
      %106 = dma.hbm_to_vmem [thread:$0]  %s8, 1024, %s101, [#allocation12], 128, 128, 8
    $region37: #{tpu_custom_call.1} parent=1 // pred_fallthru
      _
    // Predicated region
    $region38: #{tpu_custom_call.1} parent=1 // pred_check
      _
    $region39: #{tpu_custom_call.1} parent=1 // pred_check_branch
      %108 = sbr.rel (0) target = $region41
    $region40: #{tpu_custom_call.1} parent=1 // pred_region
      _
    $region41: #{tpu_custom_call.1} parent=1 // pred_fallthru
      _
    // Predicated region
    $region42: #{tpu_custom_call.1} parent=1 // pred_check
      _
    $region43: #{tpu_custom_call.1} parent=1 // pred_check_branch
      %110 = sbr.rel (0) target = $region45
    $region44: #{tpu_custom_call.1} parent=1 // pred_region
      _
    $region45: #{tpu_custom_call.1} parent=1 // pred_fallthru
      _
    // Predicated region
    $region46: #{tpu_custom_call.1} parent=1 // pred_check
      _
    $region47: #{tpu_custom_call.1} parent=1 // pred_check_branch
      %112 = sbr.rel (0) target = $region49
    $region48: #{tpu_custom_call.1} parent=1 // pred_region
      %113 = dma.done [#allocation3], 128
    $region49: #{tpu_custom_call.1} parent=1 // pred_fallthru
      _
    // Predicated region
    $region50: #{tpu_custom_call.1} parent=1 // pred_check
      _
    $region51: #{tpu_custom_call.1} parent=1 // pred_check_branch
      %115 = sbr.rel (0) target = $region53
    $region52: #{tpu_custom_call.1} parent=1 // pred_region
      %116 = dma.done [#allocation6], 512
    $region53: #{tpu_custom_call.1} parent=1 // pred_fallthru
      _
    // Predicated region
    $region54: #{tpu_custom_call.1} parent=1 // pred_check
      _
    $region55: #{tpu_custom_call.1} parent=1 // pred_check_branch
      %118 = sbr.rel (0) target = $region57
    $region56: #{tpu_custom_call.1} parent=1 // pred_region
      %119 = dma.done [#allocation6], 512
    $region57: #{tpu_custom_call.1} parent=1 // pred_fallthru
      _
    // Predicated region
    $region58: #{tpu_custom_call.1} parent=1 // pred_check
      _
    $region59: #{tpu_custom_call.1} parent=1 // pred_check_branch
      %121 = sbr.rel (0) target = $region61
    $region60: #{tpu_custom_call.1} parent=1 // pred_region
      %122 = dma.done [#allocation9], 512
    $region61: #{tpu_custom_call.1} parent=1 // pred_fallthru
      _
    // Predicated region
    $region62: #{tpu_custom_call.1} parent=1 // pred_check
      _
    $region63: #{tpu_custom_call.1} parent=1 // pred_check_branch
      %124 = sbr.rel (0) target = $region65
    $region64: #{tpu_custom_call.1} parent=1 // pred_region
      %125 = dma.done [#allocation9], 1024
    $region65: #{tpu_custom_call.1} parent=1 // pred_fallthru
      _
    // Predicated region
    $region66: #{tpu_custom_call.1} parent=1 // pred_check
      _
    $region67: #{tpu_custom_call.1} parent=1 // pred_check_branch
      %127 = sbr.rel (0) target = $region69
    $region68: #{tpu_custom_call.1} parent=1 // pred_region
      %128 = dma.done [#allocation12], 1024
    $region69: #{tpu_custom_call.1} parent=1 // pred_fallthru
      _
    // Predicated region
    $region70: #{tpu_custom_call.1} parent=1 // pred_check
      _
    $region71: #{tpu_custom_call.1} parent=1 // pred_check_branch
      %130 = sbr.rel (0) target = $region73
    $region72: #{tpu_custom_call.1} parent=1 // pred_region
      %131 = dma.done [#allocation12], 1024
    $region73: #{tpu_custom_call.1} parent=1 // pred_fallthru
      _
    %v132 = vld [vmem:[#allocation2] sm:$0xff]
    %v133 = vld [vmem:[#allocation5] sm:$0x1]
    %135 = vset.pattern.permute.xlu0 0
    %136 = vperm.xlu0 %135, %v132
    %v137 = vpop.permute.xlu0 %136
    %v139 = vlaneseq
    %v140 = vshrl.u32 %v139, 7
    %v141 = vsub.s32 0, %v140
    %v142 = vrot.slane %v133, %v141
    %v143 = vsub.f32 %v137, %v142
    %v144 = vld [vmem:[#allocation7] sm:$0x1]
    %v145 = vlaneseq
    %v146 = vshrl.u32 %v145, 7
    %v147 = vsub.s32 0, %v146
    %v148 = vrot.slane %v144, %v147
    %v149 = vmul.f32 %v148, %v143
    %v150 = vld [vmem:[#allocation8] sm:$0x1]
    %v151 = vmul.f32 %v143, %v143
    %v152 = vlaneseq
    %v153 = vshrl.u32 %v152, 7
    %v154 = vsub.s32 0, %v153
    %v155 = vrot.slane %v150, %v154
    %v156 = vmul.f32 %v155, %v151
    %v157 = vmul.f32 %v156, 1.442695
    %v158 = vpow.pop %v157
    %v159 = vmul.f32 %v149, %v158
    %v160 = vadd.f32 %v159, 0.0
    %v161 = vld [vmem:[#allocation5 + $0x1] sm:$0x1]
    %162 = vset.pattern.permute.xlu0 1
    %163 = vperm.xlu0 %162, %v132
    %v164 = vpop.permute.xlu0 %163
    %v166 = vlaneseq
    %v167 = vshrl.u32 %v166, 7
    %v168 = vsub.s32 0, %v167
    %v169 = vrot.slane %v161, %v168
    %v170 = vsub.f32 %v164, %v169
    %v171 = vld [vmem:[#allocation7 + $0x1] sm:$0x1]
    %v172 = vlaneseq
    %v173 = vshrl.u32 %v172, 7
    %v174 = vsub.s32 0, %v173
    %v175 = vrot.slane %v171, %v174
    %v176 = vmul.f32 %v175, %v170
    %v177 = vld [vmem:[#allocation8 + $0x1] sm:$0x1]
    %v178 = vmul.f32 %v170, %v170
    %v179 = vlaneseq
    %v180 = vshrl.u32 %v179, 7
    %v181 = vsub.s32 0, %v180
    %v182 = vrot.slane %v177, %v181
    %v183 = vmul.f32 %v182, %v178
    %v184 = vmul.f32 %v183, 1.442695
    %v185 = vpow.pop %v184
    %v186 = vmul.f32 %v176, %v185
    %v187 = vadd.f32 %v186, 0.0
    %v188 = vld [vmem:[#allocation5 + $0x2] sm:$0x1]
    %189 = vset.pattern.permute.xlu0 2
    %190 = vperm.xlu0 %189, %v132
    %v191 = vpop.permute.xlu0 %190
    %v193 = vlaneseq
    %v194 = vshrl.u32 %v193, 7
    %v195 = vsub.s32 0, %v194
    %v196 = vrot.slane %v188, %v195
    %v197 = vsub.f32 %v191, %v196
    %v198 = vld [vmem:[#allocation7 + $0x2] sm:$0x1]
    %v199 = vlaneseq
    %v200 = vshrl.u32 %v199, 7
    %v201 = vsub.s32 0, %v200
    %v202 = vrot.slane %v198, %v201
    %v203 = vmul.f32 %v202, %v197
    %v204 = vld [vmem:[#allocation8 + $0x2] sm:$0x1]
    %v205 = vmul.f32 %v197, %v197
    %v206 = vlaneseq
    %v207 = vshrl.u32 %v206, 7
    %v208 = vsub.s32 0, %v207
    %v209 = vrot.slane %v204, %v208
    %v210 = vmul.f32 %v209, %v205
    %v211 = vmul.f32 %v210, 1.442695
    %v212 = vpow.pop %v211
    %v213 = vmul.f32 %v203, %v212
    %v214 = vadd.f32 %v160, %v213
    %v215 = vld [vmem:[#allocation5 + $0x3] sm:$0x1]
    %216 = vset.pattern.permute.xlu0 3
    %217 = vperm.xlu0 %216, %v132
    %v218 = vpop.permute.xlu0 %217
    %v220 = vlaneseq
    %v221 = vshrl.u32 %v220, 7
    %v222 = vsub.s32 0, %v221
    %v223 = vrot.slane %v215, %v222
    %v224 = vsub.f32 %v218, %v223
    %v225 = vld [vmem:[#allocation7 + $0x3] sm:$0x1]
    %v226 = vlaneseq
    %v227 = vshrl.u32 %v226, 7
    %v228 = vsub.s32 0, %v227
    %v229 = vrot.slane %v225, %v228
    %v230 = vmul.f32 %v229, %v224
    %v231 = vld [vmem:[#allocation8 + $0x3] sm:$0x1]
    %v232 = vmul.f32 %v224, %v224
    %v233 = vlaneseq
    %v234 = vshrl.u32 %v233, 7
    %v235 = vsub.s32 0, %v234
    %v236 = vrot.slane %v231, %v235
    %v237 = vmul.f32 %v236, %v232
    %v238 = vmul.f32 %v237, 1.442695
    %v239 = vpow.pop %v238
    %v240 = vmul.f32 %v230, %v239
    %v241 = vadd.f32 %v187, %v240
    %v242 = vld [vmem:[#allocation5 + $0x4] sm:$0x1]
    %243 = vset.pattern.permute.xlu0 4
    %244 = vperm.xlu0 %243, %v132
    %v245 = vpop.permute.xlu0 %244
    %v247 = vlaneseq
    %v248 = vshrl.u32 %v247, 7
    %v249 = vsub.s32 0, %v248
    %v250 = vrot.slane %v242, %v249
    %v251 = vsub.f32 %v245, %v250
    %v252 = vld [vmem:[#allocation7 + $0x4] sm:$0x1]
    %v253 = vlaneseq
    %v254 = vshrl.u32 %v253, 7
    %v255 = vsub.s32 0, %v254
    %v256 = vrot.slane %v252, %v255
    %v257 = vmul.f32 %v256, %v251
    %v258 = vld [vmem:[#allocation8 + $0x4] sm:$0x1]
    %v259 = vmul.f32 %v251, %v251
    %v260 = vlaneseq
    %v261 = vshrl.u32 %v260, 7
    %v262 = vsub.s32 0, %v261
    %v263 = vrot.slane %v258, %v262
    %v264 = vmul.f32 %v263, %v259
    %v265 = vmul.f32 %v264, 1.442695
    %v266 = vpow.pop %v265
    %v267 = vmul.f32 %v257, %v266
    %v268 = vadd.f32 %v214, %v267
    %v269 = vld [vmem:[#allocation5 + $0x5] sm:$0x1]
    %270 = vset.pattern.permute.xlu0 5
    %271 = vperm.xlu0 %270, %v132
    %v272 = vpop.permute.xlu0 %271
    %v274 = vlaneseq
    %v275 = vshrl.u32 %v274, 7
    %v276 = vsub.s32 0, %v275
    %v277 = vrot.slane %v269, %v276
    %v278 = vsub.f32 %v272, %v277
    %v279 = vld [vmem:[#allocation7 + $0x5] sm:$0x1]
    %v280 = vlaneseq
    %v281 = vshrl.u32 %v280, 7
    %v282 = vsub.s32 0, %v281
    %v283 = vrot.slane %v279, %v282
    %v284 = vmul.f32 %v283, %v278
    %v285 = vld [vmem:[#allocation8 + $0x5] sm:$0x1]
    %v286 = vmul.f32 %v278, %v278
    %v287 = vlaneseq
    %v288 = vshrl.u32 %v287, 7
    %v289 = vsub.s32 0, %v288
    %v290 = vrot.slane %v285, %v289
    %v291 = vmul.f32 %v290, %v286
    %v292 = vmul.f32 %v291, 1.442695
    %v293 = vpow.pop %v292
    %v294 = vmul.f32 %v284, %v293
    %v295 = vadd.f32 %v241, %v294
    %v296 = vld [vmem:[#allocation5 + $0x6] sm:$0x1]
    %297 = vset.pattern.permute.xlu0 6
    %298 = vperm.xlu0 %297, %v132
    %v299 = vpop.permute.xlu0 %298
    %v301 = vlaneseq
    %v302 = vshrl.u32 %v301, 7
    %v303 = vsub.s32 0, %v302
    %v304 = vrot.slane %v296, %v303
    %v305 = vsub.f32 %v299, %v304
    %v306 = vld [vmem:[#allocation7 + $0x6] sm:$0x1]
    %v307 = vlaneseq
    %v308 = vshrl.u32 %v307, 7
    %v309 = vsub.s32 0, %v308
    %v310 = vrot.slane %v306, %v309
    %v311 = vmul.f32 %v310, %v305
    %v312 = vld [vmem:[#allocation8 + $0x6] sm:$0x1]
    %v313 = vmul.f32 %v305, %v305
    %v314 = vlaneseq
    %v315 = vshrl.u32 %v314, 7
    %v316 = vsub.s32 0, %v315
    %v317 = vrot.slane %v312, %v316
    %v318 = vmul.f32 %v317, %v313
    %v319 = vmul.f32 %v318, 1.442695
    %v320 = vpow.pop %v319
    %v321 = vmul.f32 %v311, %v320
    %v322 = vadd.f32 %v268, %v321
    %v323 = vld [vmem:[#allocation5 + $0x7] sm:$0x1]
    %324 = vset.pattern.permute.xlu0 7
    %325 = vperm.xlu0 %324, %v132
    %v326 = vpop.permute.xlu0 %325
    %v328 = vlaneseq
    %v329 = vshrl.u32 %v328, 7
    %v330 = vsub.s32 0, %v329
    %v331 = vrot.slane %v323, %v330
    %v332 = vsub.f32 %v326, %v331
    %v333 = vld [vmem:[#allocation7 + $0x7] sm:$0x1]
    %v334 = vlaneseq
    %v335 = vshrl.u32 %v334, 7
    %v336 = vsub.s32 0, %v335
    %v337 = vrot.slane %v333, %v336
    %v338 = vmul.f32 %v337, %v332
    %v339 = vld [vmem:[#allocation8 + $0x7] sm:$0x1]
    %v340 = vmul.f32 %v332, %v332
    %v341 = vlaneseq
    %v342 = vshrl.u32 %v341, 7
    %v343 = vsub.s32 0, %v342
    %v344 = vrot.slane %v339, %v343
    %v345 = vmul.f32 %v344, %v340
    %v346 = vmul.f32 %v345, 1.442695
    %v347 = vpow.pop %v346
    %v348 = vmul.f32 %v338, %v347
    %v349 = vadd.f32 %v295, %v348
    %v350 = vld [vmem:[#allocation5 + $0x8] sm:$0x1]
    %351 = vset.pattern.permute.xlu0 8
    %352 = vperm.xlu0 %351, %v132
    %v353 = vpop.permute.xlu0 %352
    %v355 = vlaneseq
    %v356 = vshrl.u32 %v355, 7
    %v357 = vsub.s32 0, %v356
    %v358 = vrot.slane %v350, %v357
    %v359 = vsub.f32 %v353, %v358
    %v360 = vld [vmem:[#allocation7 + $0x8] sm:$0x1]
    %v361 = vlaneseq
    %v362 = vshrl.u32 %v361, 7
    %v363 = vsub.s32 0, %v362
    %v364 = vrot.slane %v360, %v363
    %v365 = vmul.f32 %v364, %v359
    %v366 = vld [vmem:[#allocation8 + $0x8] sm:$0x1]
    %v367 = vmul.f32 %v359, %v359
    %v368 = vlaneseq
    %v369 = vshrl.u32 %v368, 7
    %v370 = vsub.s32 0, %v369
    %v371 = vrot.slane %v366, %v370
    %v372 = vmul.f32 %v371, %v367
    %v373 = vmul.f32 %v372, 1.442695
    %v374 = vpow.pop %v373
    %v375 = vmul.f32 %v365, %v374
    %v376 = vadd.f32 %v322, %v375
    %v377 = vld [vmem:[#allocation5 + $0x9] sm:$0x1]
    %378 = vset.pattern.permute.xlu0 9
    %379 = vperm.xlu0 %378, %v132
    %v380 = vpop.permute.xlu0 %379
    %v382 = vlaneseq
    %v383 = vshrl.u32 %v382, 7
    %v384 = vsub.s32 0, %v383
    %v385 = vrot.slane %v377, %v384
    %v386 = vsub.f32 %v380, %v385
    %v387 = vld [vmem:[#allocation7 + $0x9] sm:$0x1]
    %v388 = vlaneseq
    %v389 = vshrl.u32 %v388, 7
    %v390 = vsub.s32 0, %v389
    %v391 = vrot.slane %v387, %v390
    %v392 = vmul.f32 %v391, %v386
    %v393 = vld [vmem:[#allocation8 + $0x9] sm:$0x1]
    %v394 = vmul.f32 %v386, %v386
    %v395 = vlaneseq
    %v396 = vshrl.u32 %v395, 7
    %v397 = vsub.s32 0, %v396
    %v398 = vrot.slane %v393, %v397
    %v399 = vmul.f32 %v398, %v394
    %v400 = vmul.f32 %v399, 1.442695
    %v401 = vpow.pop %v400
    %v402 = vmul.f32 %v392, %v401
    %v403 = vadd.f32 %v349, %v402
    %v404 = vld [vmem:[#allocation5 + $0xa] sm:$0x1]
    %405 = vset.pattern.permute.xlu0 10
    %406 = vperm.xlu0 %405, %v132
    %v407 = vpop.permute.xlu0 %406
    %v409 = vlaneseq
    %v410 = vshrl.u32 %v409, 7
    %v411 = vsub.s32 0, %v410
    %v412 = vrot.slane %v404, %v411
    %v413 = vsub.f32 %v407, %v412
    %v414 = vld [vmem:[#allocation7 + $0xa] sm:$0x1]
    %v415 = vlaneseq
    %v416 = vshrl.u32 %v415, 7
    %v417 = vsub.s32 0, %v416
    %v418 = vrot.slane %v414, %v417
    %v419 = vmul.f32 %v418, %v413
    %v420 = vld [vmem:[#allocation8 + $0xa] sm:$0x1]
    %v421 = vmul.f32 %v413, %v413
    %v422 = vlaneseq
    %v423 = vshrl.u32 %v422, 7
    %v424 = vsub.s32 0, %v423
    %v425 = vrot.slane %v420, %v424
    %v426 = vmul.f32 %v425, %v421
    %v427 = vmul.f32 %v426, 1.442695
    %v428 = vpow.pop %v427
    %v429 = vmul.f32 %v419, %v428
    %v430 = vadd.f32 %v376, %v429
    %v431 = vld [vmem:[#allocation5 + $0xb] sm:$0x1]
    %432 = vset.pattern.permute.xlu0 11
    %433 = vperm.xlu0 %432, %v132
    %v434 = vpop.permute.xlu0 %433
    %v436 = vlaneseq
    %v437 = vshrl.u32 %v436, 7
    %v438 = vsub.s32 0, %v437
    %v439 = vrot.slane %v431, %v438
    %v440 = vsub.f32 %v434, %v439
    %v441 = vld [vmem:[#allocation7 + $0xb] sm:$0x1]
    %v442 = vlaneseq
    %v443 = vshrl.u32 %v442, 7
    %v444 = vsub.s32 0, %v443
    %v445 = vrot.slane %v441, %v444
    %v446 = vmul.f32 %v445, %v440
    %v447 = vld [vmem:[#allocation8 + $0xb] sm:$0x1]
    %v448 = vmul.f32 %v440, %v440
    %v449 = vlaneseq
    %v450 = vshrl.u32 %v449, 7
    %v451 = vsub.s32 0, %v450
    %v452 = vrot.slane %v447, %v451
    %v453 = vmul.f32 %v452, %v448
    %v454 = vmul.f32 %v453, 1.442695
    %v455 = vpow.pop %v454
    %v456 = vmul.f32 %v446, %v455
    %v457 = vadd.f32 %v403, %v456
    %v458 = vld [vmem:[#allocation5 + $0xc] sm:$0x1]
    %459 = vset.pattern.permute.xlu0 12
    %460 = vperm.xlu0 %459, %v132
    %v461 = vpop.permute.xlu0 %460
    %v463 = vlaneseq
    %v464 = vshrl.u32 %v463, 7
    %v465 = vsub.s32 0, %v464
    %v466 = vrot.slane %v458, %v465
    %v467 = vsub.f32 %v461, %v466
    %v468 = vld [vmem:[#allocation7 + $0xc] sm:$0x1]
    %v469 = vlaneseq
    %v470 = vshrl.u32 %v469, 7
    %v471 = vsub.s32 0, %v470
    %v472 = vrot.slane %v468, %v471
    %v473 = vmul.f32 %v472, %v467
    %v474 = vld [vmem:[#allocation8 + $0xc] sm:$0x1]
    %v475 = vmul.f32 %v467, %v467
    %v476 = vlaneseq
    %v477 = vshrl.u32 %v476, 7
    %v478 = vsub.s32 0, %v477
    %v479 = vrot.slane %v474, %v478
    %v480 = vmul.f32 %v479, %v475
    %v481 = vmul.f32 %v480, 1.442695
    %v482 = vpow.pop %v481
    %v483 = vmul.f32 %v473, %v482
    %v484 = vadd.f32 %v430, %v483
    %v485 = vld [vmem:[#allocation5 + $0xd] sm:$0x1]
    %486 = vset.pattern.permute.xlu0 13
    %487 = vperm.xlu0 %486, %v132
    %v488 = vpop.permute.xlu0 %487
    %v490 = vlaneseq
    %v491 = vshrl.u32 %v490, 7
    %v492 = vsub.s32 0, %v491
    %v493 = vrot.slane %v485, %v492
    %v494 = vsub.f32 %v488, %v493
    %v495 = vld [vmem:[#allocation7 + $0xd] sm:$0x1]
    %v496 = vlaneseq
    %v497 = vshrl.u32 %v496, 7
    %v498 = vsub.s32 0, %v497
    %v499 = vrot.slane %v495, %v498
    %v500 = vmul.f32 %v499, %v494
    %v501 = vld [vmem:[#allocation8 + $0xd] sm:$0x1]
    %v502 = vmul.f32 %v494, %v494
    %v503 = vlaneseq
    %v504 = vshrl.u32 %v503, 7
    %v505 = vsub.s32 0, %v504
    %v506 = vrot.slane %v501, %v505
    %v507 = vmul.f32 %v506, %v502
    %v508 = vmul.f32 %v507, 1.442695
    %v509 = vpow.pop %v508
    %v510 = vmul.f32 %v500, %v509
    %v511 = vadd.f32 %v457, %v510
    %v512 = vld [vmem:[#allocation5 + $0xe] sm:$0x1]
    %513 = vset.pattern.permute.xlu0 14
    %514 = vperm.xlu0 %513, %v132
    %v515 = vpop.permute.xlu0 %514
    %v517 = vlaneseq
    %v518 = vshrl.u32 %v517, 7
    %v519 = vsub.s32 0, %v518
    %v520 = vrot.slane %v512, %v519
    %v521 = vsub.f32 %v515, %v520
    %v522 = vld [vmem:[#allocation7 + $0xe] sm:$0x1]
    %v523 = vlaneseq
    %v524 = vshrl.u32 %v523, 7
    %v525 = vsub.s32 0, %v524
    %v526 = vrot.slane %v522, %v525
    %v527 = vmul.f32 %v526, %v521
    %v528 = vld [vmem:[#allocation8 + $0xe] sm:$0x1]
    %v529 = vmul.f32 %v521, %v521
    %v530 = vlaneseq
    %v531 = vshrl.u32 %v530, 7
    %v532 = vsub.s32 0, %v531
    %v533 = vrot.slane %v528, %v532
    %v534 = vmul.f32 %v533, %v529
    %v535 = vmul.f32 %v534, 1.442695
    %v536 = vpow.pop %v535
    %v537 = vmul.f32 %v527, %v536
    %v538 = vadd.f32 %v484, %v537
    %v539 = vld [vmem:[#allocation5 + $0xf] sm:$0x1]
    %540 = vset.pattern.permute.xlu0 15
    %541 = vperm.xlu0 %540, %v132
    %v542 = vpop.permute.xlu0 %541
    %v544 = vlaneseq
    %v545 = vshrl.u32 %v544, 7
    %v546 = vsub.s32 0, %v545
    %v547 = vrot.slane %v539, %v546
    %v548 = vsub.f32 %v542, %v547
    %v549 = vld [vmem:[#allocation7 + $0xf] sm:$0x1]
    %v550 = vlaneseq
    %v551 = vshrl.u32 %v550, 7
    %v552 = vsub.s32 0, %v551
    %v553 = vrot.slane %v549, %v552
    %v554 = vmul.f32 %v553, %v548
    %v555 = vld [vmem:[#allocation8 + $0xf] sm:$0x1]
    %v556 = vmul.f32 %v548, %v548
    %v557 = vlaneseq
    %v558 = vshrl.u32 %v557, 7
    %v559 = vsub.s32 0, %v558
    %v560 = vrot.slane %v555, %v559
    %v561 = vmul.f32 %v560, %v556
    %v562 = vmul.f32 %v561, 1.442695
    %v563 = vpow.pop %v562
    %v564 = vmul.f32 %v554, %v563
    %v565 = vadd.f32 %v511, %v564
    %v566 = vld [vmem:[#allocation5 + $0x10] sm:$0x1]
    %567 = vset.pattern.permute.xlu0 16
    %568 = vperm.xlu0 %567, %v132
    %v569 = vpop.permute.xlu0 %568
    %v571 = vlaneseq
    %v572 = vshrl.u32 %v571, 7
    %v573 = vsub.s32 0, %v572
    %v574 = vrot.slane %v566, %v573
    %v575 = vsub.f32 %v569, %v574
    %v576 = vld [vmem:[#allocation7 + $0x10] sm:$0x1]
    %v577 = vlaneseq
    %v578 = vshrl.u32 %v577, 7
    %v579 = vsub.s32 0, %v578
    %v580 = vrot.slane %v576, %v579
    %v581 = vmul.f32 %v580, %v575
    %v582 = vld [vmem:[#allocation8 + $0x10] sm:$0x1]
    %v583 = vmul.f32 %v575, %v575
    %v584 = vlaneseq
    %v585 = vshrl.u32 %v584, 7
    %v586 = vsub.s32 0, %v585
    %v587 = vrot.slane %v582, %v586
    %v588 = vmul.f32 %v587, %v583
    %v589 = vmul.f32 %v588, 1.442695
    %v590 = vpow.pop %v589
    %v591 = vmul.f32 %v581, %v590
    %v592 = vadd.f32 %v538, %v591
    %v593 = vld [vmem:[#allocation5 + $0x11] sm:$0x1]
    %594 = vset.pattern.permute.xlu0 17
    %595 = vperm.xlu0 %594, %v132
    %v596 = vpop.permute.xlu0 %595
    %v598 = vlaneseq
    %v599 = vshrl.u32 %v598, 7
    %v600 = vsub.s32 0, %v599
    %v601 = vrot.slane %v593, %v600
    %v602 = vsub.f32 %v596, %v601
    %v603 = vld [vmem:[#allocation7 + $0x11] sm:$0x1]
    %v604 = vlaneseq
    %v605 = vshrl.u32 %v604, 7
    %v606 = vsub.s32 0, %v605
    %v607 = vrot.slane %v603, %v606
    %v608 = vmul.f32 %v607, %v602
    %v609 = vld [vmem:[#allocation8 + $0x11] sm:$0x1]
    %v610 = vmul.f32 %v602, %v602
    %v611 = vlaneseq
    %v612 = vshrl.u32 %v611, 7
    %v613 = vsub.s32 0, %v612
    %v614 = vrot.slane %v609, %v613
    %v615 = vmul.f32 %v614, %v610
    %v616 = vmul.f32 %v615, 1.442695
    %v617 = vpow.pop %v616
    %v618 = vmul.f32 %v608, %v617
    %v619 = vadd.f32 %v565, %v618
    %v620 = vld [vmem:[#allocation5 + $0x12] sm:$0x1]
    %621 = vset.pattern.permute.xlu0 18
    %622 = vperm.xlu0 %621, %v132
    %v623 = vpop.permute.xlu0 %622
    %v625 = vlaneseq
    %v626 = vshrl.u32 %v625, 7
    %v627 = vsub.s32 0, %v626
    %v628 = vrot.slane %v620, %v627
    %v629 = vsub.f32 %v623, %v628
    %v630 = vld [vmem:[#allocation7 + $0x12] sm:$0x1]
    %v631 = vlaneseq
    %v632 = vshrl.u32 %v631, 7
    %v633 = vsub.s32 0, %v632
    %v634 = vrot.slane %v630, %v633
    %v635 = vmul.f32 %v634, %v629
    %v636 = vld [vmem:[#allocation8 + $0x12] sm:$0x1]
    %v637 = vmul.f32 %v629, %v629
    %v638 = vlaneseq
    %v639 = vshrl.u32 %v638, 7
    %v640 = vsub.s32 0, %v639
    %v641 = vrot.slane %v636, %v640
    %v642 = vmul.f32 %v641, %v637
    %v643 = vmul.f32 %v642, 1.442695
    %v644 = vpow.pop %v643
    %v645 = vmul.f32 %v635, %v644
    %v646 = vadd.f32 %v592, %v645
    %v647 = vld [vmem:[#allocation5 + $0x13] sm:$0x1]
    %648 = vset.pattern.permute.xlu0 19
    %649 = vperm.xlu0 %648, %v132
    %v650 = vpop.permute.xlu0 %649
    %v652 = vlaneseq
    %v653 = vshrl.u32 %v652, 7
    %v654 = vsub.s32 0, %v653
    %v655 = vrot.slane %v647, %v654
    %v656 = vsub.f32 %v650, %v655
    %v657 = vld [vmem:[#allocation7 + $0x13] sm:$0x1]
    %v658 = vlaneseq
    %v659 = vshrl.u32 %v658, 7
    %v660 = vsub.s32 0, %v659
    %v661 = vrot.slane %v657, %v660
    %v662 = vmul.f32 %v661, %v656
    %v663 = vld [vmem:[#allocation8 + $0x13] sm:$0x1]
    %v664 = vmul.f32 %v656, %v656
    %v665 = vlaneseq
    %v666 = vshrl.u32 %v665, 7
    %v667 = vsub.s32 0, %v666
    %v668 = vrot.slane %v663, %v667
    %v669 = vmul.f32 %v668, %v664
    %v670 = vmul.f32 %v669, 1.442695
    %v671 = vpow.pop %v670
    %v672 = vmul.f32 %v662, %v671
    %v673 = vadd.f32 %v619, %v672
    %v674 = vld [vmem:[#allocation5 + $0x14] sm:$0x1]
    %675 = vset.pattern.permute.xlu0 20
    %676 = vperm.xlu0 %675, %v132
    %v677 = vpop.permute.xlu0 %676
    %v679 = vlaneseq
    %v680 = vshrl.u32 %v679, 7
    %v681 = vsub.s32 0, %v680
    %v682 = vrot.slane %v674, %v681
    %v683 = vsub.f32 %v677, %v682
    %v684 = vld [vmem:[#allocation7 + $0x14] sm:$0x1]
    %v685 = vlaneseq
    %v686 = vshrl.u32 %v685, 7
    %v687 = vsub.s32 0, %v686
    %v688 = vrot.slane %v684, %v687
    %v689 = vmul.f32 %v688, %v683
    %v690 = vld [vmem:[#allocation8 + $0x14] sm:$0x1]
    %v691 = vmul.f32 %v683, %v683
    %v692 = vlaneseq
    %v693 = vshrl.u32 %v692, 7
    %v694 = vsub.s32 0, %v693
    %v695 = vrot.slane %v690, %v694
    %v696 = vmul.f32 %v695, %v691
    %v697 = vmul.f32 %v696, 1.442695
    %v698 = vpow.pop %v697
    %v699 = vmul.f32 %v689, %v698
    %v700 = vadd.f32 %v646, %v699
    %v701 = vld [vmem:[#allocation5 + $0x15] sm:$0x1]
    %702 = vset.pattern.permute.xlu0 21
    %703 = vperm.xlu0 %702, %v132
    %v704 = vpop.permute.xlu0 %703
    %v706 = vlaneseq
    %v707 = vshrl.u32 %v706, 7
    %v708 = vsub.s32 0, %v707
    %v709 = vrot.slane %v701, %v708
    %v710 = vsub.f32 %v704, %v709
    %v711 = vld [vmem:[#allocation7 + $0x15] sm:$0x1]
    %v712 = vlaneseq
    %v713 = vshrl.u32 %v712, 7
    %v714 = vsub.s32 0, %v713
    %v715 = vrot.slane %v711, %v714
    %v716 = vmul.f32 %v715, %v710
    %v717 = vld [vmem:[#allocation8 + $0x15] sm:$0x1]
    %v718 = vmul.f32 %v710, %v710
    %v719 = vlaneseq
    %v720 = vshrl.u32 %v719, 7
    %v721 = vsub.s32 0, %v720
    %v722 = vrot.slane %v717, %v721
    %v723 = vmul.f32 %v722, %v718
    %v724 = vmul.f32 %v723, 1.442695
    %v725 = vpow.pop %v724
    %v726 = vmul.f32 %v716, %v725
    %v727 = vadd.f32 %v673, %v726
    %v728 = vld [vmem:[#allocation5 + $0x16] sm:$0x1]
    %729 = vset.pattern.permute.xlu0 22
    %730 = vperm.xlu0 %729, %v132
    %v731 = vpop.permute.xlu0 %730
    %v733 = vlaneseq
    %v734 = vshrl.u32 %v733, 7
    %v735 = vsub.s32 0, %v734
    %v736 = vrot.slane %v728, %v735
    %v737 = vsub.f32 %v731, %v736
    %v738 = vld [vmem:[#allocation7 + $0x16] sm:$0x1]
    %v739 = vlaneseq
    %v740 = vshrl.u32 %v739, 7
    %v741 = vsub.s32 0, %v740
    %v742 = vrot.slane %v738, %v741
    %v743 = vmul.f32 %v742, %v737
    %v744 = vld [vmem:[#allocation8 + $0x16] sm:$0x1]
    %v745 = vmul.f32 %v737, %v737
    %v746 = vlaneseq
    %v747 = vshrl.u32 %v746, 7
    %v748 = vsub.s32 0, %v747
    %v749 = vrot.slane %v744, %v748
    %v750 = vmul.f32 %v749, %v745
    %v751 = vmul.f32 %v750, 1.442695
    %v752 = vpow.pop %v751
    %v753 = vmul.f32 %v743, %v752
    %v754 = vadd.f32 %v700, %v753
    %v755 = vld [vmem:[#allocation5 + $0x17] sm:$0x1]
    %756 = vset.pattern.permute.xlu0 23
    %757 = vperm.xlu0 %756, %v132
    %v758 = vpop.permute.xlu0 %757
    %v760 = vlaneseq
    %v761 = vshrl.u32 %v760, 7
    %v762 = vsub.s32 0, %v761
    %v763 = vrot.slane %v755, %v762
    %v764 = vsub.f32 %v758, %v763
    %v765 = vld [vmem:[#allocation7 + $0x17] sm:$0x1]
    %v766 = vlaneseq
    %v767 = vshrl.u32 %v766, 7
    %v768 = vsub.s32 0, %v767
    %v769 = vrot.slane %v765, %v768
    %v770 = vmul.f32 %v769, %v764
    %v771 = vld [vmem:[#allocation8 + $0x17] sm:$0x1]
    %v772 = vmul.f32 %v764, %v764
    %v773 = vlaneseq
    %v774 = vshrl.u32 %v773, 7
    %v775 = vsub.s32 0, %v774
    %v776 = vrot.slane %v771, %v775
    %v777 = vmul.f32 %v776, %v772
    %v778 = vmul.f32 %v777, 1.442695
    %v779 = vpow.pop %v778
    %v780 = vmul.f32 %v770, %v779
    %v781 = vadd.f32 %v727, %v780
    %v782 = vld [vmem:[#allocation5 + $0x18] sm:$0x1]
    %783 = vset.pattern.permute.xlu0 24
    %784 = vperm.xlu0 %783, %v132
    %v785 = vpop.permute.xlu0 %784
    %v787 = vlaneseq
    %v788 = vshrl.u32 %v787, 7
    %v789 = vsub.s32 0, %v788
    %v790 = vrot.slane %v782, %v789
    %v791 = vsub.f32 %v785, %v790
    %v792 = vld [vmem:[#allocation7 + $0x18] sm:$0x1]
    %v793 = vlaneseq
    %v794 = vshrl.u32 %v793, 7
    %v795 = vsub.s32 0, %v794
    %v796 = vrot.slane %v792, %v795
    %v797 = vmul.f32 %v796, %v791
    %v798 = vld [vmem:[#allocation8 + $0x18] sm:$0x1]
    %v799 = vmul.f32 %v791, %v791
    %v800 = vlaneseq
    %v801 = vshrl.u32 %v800, 7
    %v802 = vsub.s32 0, %v801
    %v803 = vrot.slane %v798, %v802
    %v804 = vmul.f32 %v803, %v799
    %v805 = vmul.f32 %v804, 1.442695
    %v806 = vpow.pop %v805
    %v807 = vmul.f32 %v797, %v806
    %v808 = vadd.f32 %v754, %v807
    %v809 = vld [vmem:[#allocation5 + $0x19] sm:$0x1]
    %810 = vset.pattern.permute.xlu0 25
    %811 = vperm.xlu0 %810, %v132
    %v812 = vpop.permute.xlu0 %811
    %v814 = vlaneseq
    %v815 = vshrl.u32 %v814, 7
    %v816 = vsub.s32 0, %v815
    %v817 = vrot.slane %v809, %v816
    %v818 = vsub.f32 %v812, %v817
    %v819 = vld [vmem:[#allocation7 + $0x19] sm:$0x1]
    %v820 = vlaneseq
    %v821 = vshrl.u32 %v820, 7
    %v822 = vsub.s32 0, %v821
    %v823 = vrot.slane %v819, %v822
    %v824 = vmul.f32 %v823, %v818
    %v825 = vld [vmem:[#allocation8 + $0x19] sm:$0x1]
    %v826 = vmul.f32 %v818, %v818
    %v827 = vlaneseq
    %v828 = vshrl.u32 %v827, 7
    %v829 = vsub.s32 0, %v828
    %v830 = vrot.slane %v825, %v829
    %v831 = vmul.f32 %v830, %v826
    %v832 = vmul.f32 %v831, 1.442695
    %v833 = vpow.pop %v832
    %v834 = vmul.f32 %v824, %v833
    %v835 = vadd.f32 %v781, %v834
    %v836 = vld [vmem:[#allocation5 + $0x1a] sm:$0x1]
    %837 = vset.pattern.permute.xlu0 26
    %838 = vperm.xlu0 %837, %v132
    %v839 = vpop.permute.xlu0 %838
    %v841 = vlaneseq
    %v842 = vshrl.u32 %v841, 7
    %v843 = vsub.s32 0, %v842
    %v844 = vrot.slane %v836, %v843
    %v845 = vsub.f32 %v839, %v844
    %v846 = vld [vmem:[#allocation7 + $0x1a] sm:$0x1]
    %v847 = vlaneseq
    %v848 = vshrl.u32 %v847, 7
    %v849 = vsub.s32 0, %v848
    %v850 = vrot.slane %v846, %v849
    %v851 = vmul.f32 %v850, %v845
    %v852 = vld [vmem:[#allocation8 + $0x1a] sm:$0x1]
    %v853 = vmul.f32 %v845, %v845
    %v854 = vlaneseq
    %v855 = vshrl.u32 %v854, 7
    %v856 = vsub.s32 0, %v855
    %v857 = vrot.slane %v852, %v856
    %v858 = vmul.f32 %v857, %v853
    %v859 = vmul.f32 %v858, 1.442695
    %v860 = vpow.pop %v859
    %v861 = vmul.f32 %v851, %v860
    %v862 = vadd.f32 %v808, %v861
    %v863 = vld [vmem:[#allocation5 + $0x1b] sm:$0x1]
    %864 = vset.pattern.permute.xlu0 27
    %865 = vperm.xlu0 %864, %v132
    %v866 = vpop.permute.xlu0 %865
    %v868 = vlaneseq
    %v869 = vshrl.u32 %v868, 7
    %v870 = vsub.s32 0, %v869
    %v871 = vrot.slane %v863, %v870
    %v872 = vsub.f32 %v866, %v871
    %v873 = vld [vmem:[#allocation7 + $0x1b] sm:$0x1]
    %v874 = vlaneseq
    %v875 = vshrl.u32 %v874, 7
    %v876 = vsub.s32 0, %v875
    %v877 = vrot.slane %v873, %v876
    %v878 = vmul.f32 %v877, %v872
    %v879 = vld [vmem:[#allocation8 + $0x1b] sm:$0x1]
    %v880 = vmul.f32 %v872, %v872
    %v881 = vlaneseq
    %v882 = vshrl.u32 %v881, 7
    %v883 = vsub.s32 0, %v882
    %v884 = vrot.slane %v879, %v883
    %v885 = vmul.f32 %v884, %v880
    %v886 = vmul.f32 %v885, 1.442695
    %v887 = vpow.pop %v886
    %v888 = vmul.f32 %v878, %v887
    %v889 = vadd.f32 %v835, %v888
    %v890 = vld [vmem:[#allocation5 + $0x1c] sm:$0x1]
    %891 = vset.pattern.permute.xlu0 28
    %892 = vperm.xlu0 %891, %v132
    %v893 = vpop.permute.xlu0 %892
    %v895 = vlaneseq
    %v896 = vshrl.u32 %v895, 7
    %v897 = vsub.s32 0, %v896
    %v898 = vrot.slane %v890, %v897
    %v899 = vsub.f32 %v893, %v898
    %v900 = vld [vmem:[#allocation7 + $0x1c] sm:$0x1]
    %v901 = vlaneseq
    %v902 = vshrl.u32 %v901, 7
    %v903 = vsub.s32 0, %v902
    %v904 = vrot.slane %v900, %v903
    %v905 = vmul.f32 %v904, %v899
    %v906 = vld [vmem:[#allocation8 + $0x1c] sm:$0x1]
    %v907 = vmul.f32 %v899, %v899
    %v908 = vlaneseq
    %v909 = vshrl.u32 %v908, 7
    %v910 = vsub.s32 0, %v909
    %v911 = vrot.slane %v906, %v910
    %v912 = vmul.f32 %v911, %v907
    %v913 = vmul.f32 %v912, 1.442695
    %v914 = vpow.pop %v913
    %v915 = vmul.f32 %v905, %v914
    %v916 = vadd.f32 %v862, %v915
    %v917 = vld [vmem:[#allocation5 + $0x1d] sm:$0x1]
    %918 = vset.pattern.permute.xlu0 29
    %919 = vperm.xlu0 %918, %v132
    %v920 = vpop.permute.xlu0 %919
    %v922 = vlaneseq
    %v923 = vshrl.u32 %v922, 7
    %v924 = vsub.s32 0, %v923
    %v925 = vrot.slane %v917, %v924
    %v926 = vsub.f32 %v920, %v925
    %v927 = vld [vmem:[#allocation7 + $0x1d] sm:$0x1]
    %v928 = vlaneseq
    %v929 = vshrl.u32 %v928, 7
    %v930 = vsub.s32 0, %v929
    %v931 = vrot.slane %v927, %v930
    %v932 = vmul.f32 %v931, %v926
    %v933 = vld [vmem:[#allocation8 + $0x1d] sm:$0x1]
    %v934 = vmul.f32 %v926, %v926
    %v935 = vlaneseq
    %v936 = vshrl.u32 %v935, 7
    %v937 = vsub.s32 0, %v936
    %v938 = vrot.slane %v933, %v937
    %v939 = vmul.f32 %v938, %v934
    %v940 = vmul.f32 %v939, 1.442695
    %v941 = vpow.pop %v940
    %v942 = vmul.f32 %v932, %v941
    %v943 = vadd.f32 %v889, %v942
    %v944 = vld [vmem:[#allocation5 + $0x1e] sm:$0x1]
    %945 = vset.pattern.permute.xlu0 30
    %946 = vperm.xlu0 %945, %v132
    %v947 = vpop.permute.xlu0 %946
    %v949 = vlaneseq
    %v950 = vshrl.u32 %v949, 7
    %v951 = vsub.s32 0, %v950
    %v952 = vrot.slane %v944, %v951
    %v953 = vsub.f32 %v947, %v952
    %v954 = vld [vmem:[#allocation7 + $0x1e] sm:$0x1]
    %v955 = vlaneseq
    %v956 = vshrl.u32 %v955, 7
    %v957 = vsub.s32 0, %v956
    %v958 = vrot.slane %v954, %v957
    %v959 = vmul.f32 %v958, %v953
    %v960 = vld [vmem:[#allocation8 + $0x1e] sm:$0x1]
    %v961 = vmul.f32 %v953, %v953
    %v962 = vlaneseq
    %v963 = vshrl.u32 %v962, 7
    %v964 = vsub.s32 0, %v963
    %v965 = vrot.slane %v960, %v964
    %v966 = vmul.f32 %v965, %v961
    %v967 = vmul.f32 %v966, 1.442695
    %v968 = vpow.pop %v967
    %v969 = vmul.f32 %v959, %v968
    %v970 = vadd.f32 %v916, %v969
    %v971 = vld [vmem:[#allocation5 + $0x1f] sm:$0x1]
    %972 = vset.pattern.permute.xlu0 31
    %973 = vperm.xlu0 %972, %v132
    %v974 = vpop.permute.xlu0 %973
    %v976 = vlaneseq
    %v977 = vshrl.u32 %v976, 7
    %v978 = vsub.s32 0, %v977
    %v979 = vrot.slane %v971, %v978
    %v980 = vsub.f32 %v974, %v979
    %v981 = vld [vmem:[#allocation7 + $0x1f] sm:$0x1]
    %v982 = vlaneseq
    %v983 = vshrl.u32 %v982, 7
    %v984 = vsub.s32 0, %v983
    %v985 = vrot.slane %v981, %v984
    %v986 = vmul.f32 %v985, %v980
    %v987 = vld [vmem:[#allocation8 + $0x1f] sm:$0x1]
    %v988 = vmul.f32 %v980, %v980
    %v989 = vlaneseq
    %v990 = vshrl.u32 %v989, 7
    %v991 = vsub.s32 0, %v990
    %v992 = vrot.slane %v987, %v991
    %v993 = vmul.f32 %v992, %v988
    %v994 = vmul.f32 %v993, 1.442695
    %v995 = vpow.pop %v994
    %v996 = vmul.f32 %v986, %v995
    %v997 = vadd.f32 %v943, %v996
    %v998 = vadd.f32 %v970, %v997
    %v999 = vrot.slane %v998, 4
    %v1000 = vadd.f32 %v998, %v999
    %v1001 = vrot.slane %v1000, 2
    %v1002 = vadd.f32 %v1000, %v1001
    %v1003 = vrot.slane %v1002, 1
    %v1004 = vadd.f32 %v1002, %v1003
    %v1005 = vrcp.pop 8.0
    %v1006 = vmul.f32 %v1004, %v1005
    %v1007 = vsub.f32 %v998, %v1006
    %v1008 = vmul.f32 %v1007, %v1007
    %v1009 = vrot.slane %v1008, 4
    %v1010 = vadd.f32 %v1008, %v1009
    %v1011 = vrot.slane %v1010, 2
    %v1012 = vadd.f32 %v1010, %v1011
    %v1013 = vrot.slane %v1012, 1
    %v1014 = vadd.f32 %v1012, %v1013
    %v1015 = vmul.f32 %v1014, %v1005
    %v1016 = vadd.f32 %v1015, 1e-05
    %v1017 = vrsqrt.pop %v1016
    %v1018 = vmul.f32 %v1007, %v1017
    %v1019 = vld [vmem:[%s4] sm:$0x1]
    %v1021 = vlaneseq
    %v1022 = vshrl.u32 %v1021, 7
    %v1023 = vsub.s32 0, %v1022
    %v1024 = vrot.slane %v1019, %v1023
    %v1026 = vmul.f32 %v1018, %v1024
    %v1027 = vld [vmem:[%s5] sm:$0x1]
    %v1029 = vlaneseq
    %v1030 = vshrl.u32 %v1029, 7
    %v1031 = vsub.s32 0, %v1030
    %v1032 = vrot.slane %v1027, %v1031
    %v1034 = vadd.f32 %v1026, %v1032
    %v1035 = vld [vmem:[#allocation10] sm:$0x1]
    %1037 = vset.pattern.permute.xlu0 0
    %1038 = vperm.xlu0 %1037, %v1034
    %v1039 = vpop.permute.xlu0 %1038
    %v1041 = vlaneseq
    %v1042 = vshrl.u32 %v1041, 7
    %v1043 = vsub.s32 0, %v1042
    %v1044 = vrot.slane %v1035, %v1043
    %v1045 = vsub.f32 %v1039, %v1044
    %v1046 = vld [vmem:[#allocation11] sm:$0x1]
    %v1047 = vlaneseq
    %v1048 = vshrl.u32 %v1047, 7
    %v1049 = vsub.s32 0, %v1048
    %v1050 = vrot.slane %v1046, %v1049
    %v1051 = vmul.f32 %v1050, %v1045
    %v1052 = vld [vmem:[#allocation13] sm:$0x1]
    %v1053 = vmul.f32 %v1045, %v1045
    %v1054 = vlaneseq
    %v1055 = vshrl.u32 %v1054, 7
    %v1056 = vsub.s32 0, %v1055
    %v1057 = vrot.slane %v1052, %v1056
    %v1058 = vmul.f32 %v1057, %v1053
    %v1059 = vmul.f32 %v1058, 1.442695
    %v1060 = vpow.pop %v1059
    %v1061 = vmul.f32 %v1051, %v1060
    %v1062 = vadd.f32 %v1061, 0.0
    %v1063 = vld [vmem:[#allocation10 + $0x1] sm:$0x1]
    %1064 = vset.pattern.permute.xlu0 1
    %1065 = vperm.xlu0 %1064, %v1034
    %v1066 = vpop.permute.xlu0 %1065
    %v1068 = vlaneseq
    %v1069 = vshrl.u32 %v1068, 7
    %v1070 = vsub.s32 0, %v1069
    %v1071 = vrot.slane %v1063, %v1070
    %v1072 = vsub.f32 %v1066, %v1071
    %v1073 = vld [vmem:[#allocation11 + $0x1] sm:$0x1]
    %v1074 = vlaneseq
    %v1075 = vshrl.u32 %v1074, 7
    %v1076 = vsub.s32 0, %v1075
    %v1077 = vrot.slane %v1073, %v1076
    %v1078 = vmul.f32 %v1077, %v1072
    %v1079 = vld [vmem:[#allocation13 + $0x1] sm:$0x1]
    %v1080 = vmul.f32 %v1072, %v1072
    %v1081 = vlaneseq
    %v1082 = vshrl.u32 %v1081, 7
    %v1083 = vsub.s32 0, %v1082
    %v1084 = vrot.slane %v1079, %v1083
    %v1085 = vmul.f32 %v1084, %v1080
    %v1086 = vmul.f32 %v1085, 1.442695
    %v1087 = vpow.pop %v1086
    %v1088 = vmul.f32 %v1078, %v1087
    %v1089 = vadd.f32 %v1088, 0.0
    %v1090 = vld [vmem:[#allocation10 + $0x2] sm:$0x1]
    %1091 = vset.pattern.permute.xlu0 2
    %1092 = vperm.xlu0 %1091, %v1034
    %v1093 = vpop.permute.xlu0 %1092
    %v1095 = vlaneseq
    %v1096 = vshrl.u32 %v1095, 7
    %v1097 = vsub.s32 0, %v1096
    %v1098 = vrot.slane %v1090, %v1097
    %v1099 = vsub.f32 %v1093, %v1098
    %v1100 = vld [vmem:[#allocation11 + $0x2] sm:$0x1]
    %v1101 = vlaneseq
    %v1102 = vshrl.u32 %v1101, 7
    %v1103 = vsub.s32 0, %v1102
    %v1104 = vrot.slane %v1100, %v1103
    %v1105 = vmul.f32 %v1104, %v1099
    %v1106 = vld [vmem:[#allocation13 + $0x2] sm:$0x1]
    %v1107 = vmul.f32 %v1099, %v1099
    %v1108 = vlaneseq
    %v1109 = vshrl.u32 %v1108, 7
    %v1110 = vsub.s32 0, %v1109
    %v1111 = vrot.slane %v1106, %v1110
    %v1112 = vmul.f32 %v1111, %v1107
    %v1113 = vmul.f32 %v1112, 1.442695
    %v1114 = vpow.pop %v1113
    %v1115 = vmul.f32 %v1105, %v1114
    %v1116 = vadd.f32 %v1062, %v1115
    %v1117 = vld [vmem:[#allocation10 + $0x3] sm:$0x1]
    %1118 = vset.pattern.permute.xlu0 3
    %1119 = vperm.xlu0 %1118, %v1034
    %v1120 = vpop.permute.xlu0 %1119
    %v1122 = vlaneseq
    %v1123 = vshrl.u32 %v1122, 7
    %v1124 = vsub.s32 0, %v1123
    %v1125 = vrot.slane %v1117, %v1124
    %v1126 = vsub.f32 %v1120, %v1125
    %v1127 = vld [vmem:[#allocation11 + $0x3] sm:$0x1]
    %v1128 = vlaneseq
    %v1129 = vshrl.u32 %v1128, 7
    %v1130 = vsub.s32 0, %v1129
    %v1131 = vrot.slane %v1127, %v1130
    %v1132 = vmul.f32 %v1131, %v1126
    %v1133 = vld [vmem:[#allocation13 + $0x3] sm:$0x1]
    %v1134 = vmul.f32 %v1126, %v1126
    %v1135 = vlaneseq
    %v1136 = vshrl.u32 %v1135, 7
    %v1137 = vsub.s32 0, %v1136
    %v1138 = vrot.slane %v1133, %v1137
    %v1139 = vmul.f32 %v1138, %v1134
    %v1140 = vmul.f32 %v1139, 1.442695
    %v1141 = vpow.pop %v1140
    %v1142 = vmul.f32 %v1132, %v1141
    %v1143 = vadd.f32 %v1089, %v1142
    %v1144 = vld [vmem:[#allocation10 + $0x4] sm:$0x1]
    %1145 = vset.pattern.permute.xlu0 4
    %1146 = vperm.xlu0 %1145, %v1034
    %v1147 = vpop.permute.xlu0 %1146
    %v1149 = vlaneseq
    %v1150 = vshrl.u32 %v1149, 7
    %v1151 = vsub.s32 0, %v1150
    %v1152 = vrot.slane %v1144, %v1151
    %v1153 = vsub.f32 %v1147, %v1152
    %v1154 = vld [vmem:[#allocation11 + $0x4] sm:$0x1]
    %v1155 = vlaneseq
    %v1156 = vshrl.u32 %v1155, 7
    %v1157 = vsub.s32 0, %v1156
    %v1158 = vrot.slane %v1154, %v1157
    %v1159 = vmul.f32 %v1158, %v1153
    %v1160 = vld [vmem:[#allocation13 + $0x4] sm:$0x1]
    %v1161 = vmul.f32 %v1153, %v1153
    %v1162 = vlaneseq
    %v1163 = vshrl.u32 %v1162, 7
    %v1164 = vsub.s32 0, %v1163
    %v1165 = vrot.slane %v1160, %v1164
    %v1166 = vmul.f32 %v1165, %v1161
    %v1167 = vmul.f32 %v1166, 1.442695
    %v1168 = vpow.pop %v1167
    %v1169 = vmul.f32 %v1159, %v1168
    %v1170 = vadd.f32 %v1116, %v1169
    %v1171 = vld [vmem:[#allocation10 + $0x5] sm:$0x1]
    %1172 = vset.pattern.permute.xlu0 5
    %1173 = vperm.xlu0 %1172, %v1034
    %v1174 = vpop.permute.xlu0 %1173
    %v1176 = vlaneseq
    %v1177 = vshrl.u32 %v1176, 7
    %v1178 = vsub.s32 0, %v1177
    %v1179 = vrot.slane %v1171, %v1178
    %v1180 = vsub.f32 %v1174, %v1179
    %v1181 = vld [vmem:[#allocation11 + $0x5] sm:$0x1]
    %v1182 = vlaneseq
    %v1183 = vshrl.u32 %v1182, 7
    %v1184 = vsub.s32 0, %v1183
    %v1185 = vrot.slane %v1181, %v1184
    %v1186 = vmul.f32 %v1185, %v1180
    %v1187 = vld [vmem:[#allocation13 + $0x5] sm:$0x1]
    %v1188 = vmul.f32 %v1180, %v1180
    %v1189 = vlaneseq
    %v1190 = vshrl.u32 %v1189, 7
    %v1191 = vsub.s32 0, %v1190
    %v1192 = vrot.slane %v1187, %v1191
    %v1193 = vmul.f32 %v1192, %v1188
    %v1194 = vmul.f32 %v1193, 1.442695
    %v1195 = vpow.pop %v1194
    %v1196 = vmul.f32 %v1186, %v1195
    %v1197 = vadd.f32 %v1143, %v1196
    %v1198 = vld [vmem:[#allocation10 + $0x6] sm:$0x1]
    %1199 = vset.pattern.permute.xlu0 6
    %1200 = vperm.xlu0 %1199, %v1034
    %v1201 = vpop.permute.xlu0 %1200
    %v1203 = vlaneseq
    %v1204 = vshrl.u32 %v1203, 7
    %v1205 = vsub.s32 0, %v1204
    %v1206 = vrot.slane %v1198, %v1205
    %v1207 = vsub.f32 %v1201, %v1206
    %v1208 = vld [vmem:[#allocation11 + $0x6] sm:$0x1]
    %v1209 = vlaneseq
    %v1210 = vshrl.u32 %v1209, 7
    %v1211 = vsub.s32 0, %v1210
    %v1212 = vrot.slane %v1208, %v1211
    %v1213 = vmul.f32 %v1212, %v1207
    %v1214 = vld [vmem:[#allocation13 + $0x6] sm:$0x1]
    %v1215 = vmul.f32 %v1207, %v1207
    %v1216 = vlaneseq
    %v1217 = vshrl.u32 %v1216, 7
    %v1218 = vsub.s32 0, %v1217
    %v1219 = vrot.slane %v1214, %v1218
    %v1220 = vmul.f32 %v1219, %v1215
    %v1221 = vmul.f32 %v1220, 1.442695
    %v1222 = vpow.pop %v1221
    %v1223 = vmul.f32 %v1213, %v1222
    %v1224 = vadd.f32 %v1170, %v1223
    %v1225 = vld [vmem:[#allocation10 + $0x7] sm:$0x1]
    %1226 = vset.pattern.permute.xlu0 7
    %1227 = vperm.xlu0 %1226, %v1034
    %v1228 = vpop.permute.xlu0 %1227
    %v1230 = vlaneseq
    %v1231 = vshrl.u32 %v1230, 7
    %v1232 = vsub.s32 0, %v1231
    %v1233 = vrot.slane %v1225, %v1232
    %v1234 = vsub.f32 %v1228, %v1233
    %v1235 = vld [vmem:[#allocation11 + $0x7] sm:$0x1]
    %v1236 = vlaneseq
    %v1237 = vshrl.u32 %v1236, 7
    %v1238 = vsub.s32 0, %v1237
    %v1239 = vrot.slane %v1235, %v1238
    %v1240 = vmul.f32 %v1239, %v1234
    %v1241 = vld [vmem:[#allocation13 + $0x7] sm:$0x1]
    %v1242 = vmul.f32 %v1234, %v1234
    %v1243 = vlaneseq
    %v1244 = vshrl.u32 %v1243, 7
    %v1245 = vsub.s32 0, %v1244
    %v1246 = vrot.slane %v1241, %v1245
    %v1247 = vmul.f32 %v1246, %v1242
    %v1248 = vmul.f32 %v1247, 1.442695
    %v1249 = vpow.pop %v1248
    %v1250 = vmul.f32 %v1240, %v1249
    %v1251 = vadd.f32 %v1197, %v1250
    %v1252 = vld [vmem:[#allocation10 + $0x8] sm:$0x1]
    %1253 = vset.pattern.permute.xlu0 8
    %1254 = vperm.xlu0 %1253, %v1034
    %v1255 = vpop.permute.xlu0 %1254
    %v1257 = vlaneseq
    %v1258 = vshrl.u32 %v1257, 7
    %v1259 = vsub.s32 0, %v1258
    %v1260 = vrot.slane %v1252, %v1259
    %v1261 = vsub.f32 %v1255, %v1260
    %v1262 = vld [vmem:[#allocation11 + $0x8] sm:$0x1]
    %v1263 = vlaneseq
    %v1264 = vshrl.u32 %v1263, 7
    %v1265 = vsub.s32 0, %v1264
    %v1266 = vrot.slane %v1262, %v1265
    %v1267 = vmul.f32 %v1266, %v1261
    %v1268 = vld [vmem:[#allocation13 + $0x8] sm:$0x1]
    %v1269 = vmul.f32 %v1261, %v1261
    %v1270 = vlaneseq
    %v1271 = vshrl.u32 %v1270, 7
    %v1272 = vsub.s32 0, %v1271
    %v1273 = vrot.slane %v1268, %v1272
    %v1274 = vmul.f32 %v1273, %v1269
    %v1275 = vmul.f32 %v1274, 1.442695
    %v1276 = vpow.pop %v1275
    %v1277 = vmul.f32 %v1267, %v1276
    %v1278 = vadd.f32 %v1224, %v1277
    %v1279 = vld [vmem:[#allocation10 + $0x9] sm:$0x1]
    %1280 = vset.pattern.permute.xlu0 9
    %1281 = vperm.xlu0 %1280, %v1034
    %v1282 = vpop.permute.xlu0 %1281
    %v1284 = vlaneseq
    %v1285 = vshrl.u32 %v1284, 7
    %v1286 = vsub.s32 0, %v1285
    %v1287 = vrot.slane %v1279, %v1286
    %v1288 = vsub.f32 %v1282, %v1287
    %v1289 = vld [vmem:[#allocation11 + $0x9] sm:$0x1]
    %v1290 = vlaneseq
    %v1291 = vshrl.u32 %v1290, 7
    %v1292 = vsub.s32 0, %v1291
    %v1293 = vrot.slane %v1289, %v1292
    %v1294 = vmul.f32 %v1293, %v1288
    %v1295 = vld [vmem:[#allocation13 + $0x9] sm:$0x1]
    %v1296 = vmul.f32 %v1288, %v1288
    %v1297 = vlaneseq
    %v1298 = vshrl.u32 %v1297, 7
    %v1299 = vsub.s32 0, %v1298
    %v1300 = vrot.slane %v1295, %v1299
    %v1301 = vmul.f32 %v1300, %v1296
    %v1302 = vmul.f32 %v1301, 1.442695
    %v1303 = vpow.pop %v1302
    %v1304 = vmul.f32 %v1294, %v1303
    %v1305 = vadd.f32 %v1251, %v1304
    %v1306 = vld [vmem:[#allocation10 + $0xa] sm:$0x1]
    %1307 = vset.pattern.permute.xlu0 10
    %1308 = vperm.xlu0 %1307, %v1034
    %v1309 = vpop.permute.xlu0 %1308
    %v1311 = vlaneseq
    %v1312 = vshrl.u32 %v1311, 7
    %v1313 = vsub.s32 0, %v1312
    %v1314 = vrot.slane %v1306, %v1313
    %v1315 = vsub.f32 %v1309, %v1314
    %v1316 = vld [vmem:[#allocation11 + $0xa] sm:$0x1]
    %v1317 = vlaneseq
    %v1318 = vshrl.u32 %v1317, 7
    %v1319 = vsub.s32 0, %v1318
    %v1320 = vrot.slane %v1316, %v1319
    %v1321 = vmul.f32 %v1320, %v1315
    %v1322 = vld [vmem:[#allocation13 + $0xa] sm:$0x1]
    %v1323 = vmul.f32 %v1315, %v1315
    %v1324 = vlaneseq
    %v1325 = vshrl.u32 %v1324, 7
    %v1326 = vsub.s32 0, %v1325
    %v1327 = vrot.slane %v1322, %v1326
    %v1328 = vmul.f32 %v1327, %v1323
    %v1329 = vmul.f32 %v1328, 1.442695
    %v1330 = vpow.pop %v1329
    %v1331 = vmul.f32 %v1321, %v1330
    %v1332 = vadd.f32 %v1278, %v1331
    %v1333 = vld [vmem:[#allocation10 + $0xb] sm:$0x1]
    %1334 = vset.pattern.permute.xlu0 11
    %1335 = vperm.xlu0 %1334, %v1034
    %v1336 = vpop.permute.xlu0 %1335
    %v1338 = vlaneseq
    %v1339 = vshrl.u32 %v1338, 7
    %v1340 = vsub.s32 0, %v1339
    %v1341 = vrot.slane %v1333, %v1340
    %v1342 = vsub.f32 %v1336, %v1341
    %v1343 = vld [vmem:[#allocation11 + $0xb] sm:$0x1]
    %v1344 = vlaneseq
    %v1345 = vshrl.u32 %v1344, 7
    %v1346 = vsub.s32 0, %v1345
    %v1347 = vrot.slane %v1343, %v1346
    %v1348 = vmul.f32 %v1347, %v1342
    %v1349 = vld [vmem:[#allocation13 + $0xb] sm:$0x1]
    %v1350 = vmul.f32 %v1342, %v1342
    %v1351 = vlaneseq
    %v1352 = vshrl.u32 %v1351, 7
    %v1353 = vsub.s32 0, %v1352
    %v1354 = vrot.slane %v1349, %v1353
    %v1355 = vmul.f32 %v1354, %v1350
    %v1356 = vmul.f32 %v1355, 1.442695
    %v1357 = vpow.pop %v1356
    %v1358 = vmul.f32 %v1348, %v1357
    %v1359 = vadd.f32 %v1305, %v1358
    %v1360 = vld [vmem:[#allocation10 + $0xc] sm:$0x1]
    %1361 = vset.pattern.permute.xlu0 12
    %1362 = vperm.xlu0 %1361, %v1034
    %v1363 = vpop.permute.xlu0 %1362
    %v1365 = vlaneseq
    %v1366 = vshrl.u32 %v1365, 7
    %v1367 = vsub.s32 0, %v1366
    %v1368 = vrot.slane %v1360, %v1367
    %v1369 = vsub.f32 %v1363, %v1368
    %v1370 = vld [vmem:[#allocation11 + $0xc] sm:$0x1]
    %v1371 = vlaneseq
    %v1372 = vshrl.u32 %v1371, 7
    %v1373 = vsub.s32 0, %v1372
    %v1374 = vrot.slane %v1370, %v1373
    %v1375 = vmul.f32 %v1374, %v1369
    %v1376 = vld [vmem:[#allocation13 + $0xc] sm:$0x1]
    %v1377 = vmul.f32 %v1369, %v1369
    %v1378 = vlaneseq
    %v1379 = vshrl.u32 %v1378, 7
    %v1380 = vsub.s32 0, %v1379
    %v1381 = vrot.slane %v1376, %v1380
    %v1382 = vmul.f32 %v1381, %v1377
    %v1383 = vmul.f32 %v1382, 1.442695
    %v1384 = vpow.pop %v1383
    %v1385 = vmul.f32 %v1375, %v1384
    %v1386 = vadd.f32 %v1332, %v1385
    %v1387 = vld [vmem:[#allocation10 + $0xd] sm:$0x1]
    %1388 = vset.pattern.permute.xlu0 13
    %1389 = vperm.xlu0 %1388, %v1034
    %v1390 = vpop.permute.xlu0 %1389
    %v1392 = vlaneseq
    %v1393 = vshrl.u32 %v1392, 7
    %v1394 = vsub.s32 0, %v1393
    %v1395 = vrot.slane %v1387, %v1394
    %v1396 = vsub.f32 %v1390, %v1395
    %v1397 = vld [vmem:[#allocation11 + $0xd] sm:$0x1]
    %v1398 = vlaneseq
    %v1399 = vshrl.u32 %v1398, 7
    %v1400 = vsub.s32 0, %v1399
    %v1401 = vrot.slane %v1397, %v1400
    %v1402 = vmul.f32 %v1401, %v1396
    %v1403 = vld [vmem:[#allocation13 + $0xd] sm:$0x1]
    %v1404 = vmul.f32 %v1396, %v1396
    %v1405 = vlaneseq
    %v1406 = vshrl.u32 %v1405, 7
    %v1407 = vsub.s32 0, %v1406
    %v1408 = vrot.slane %v1403, %v1407
    %v1409 = vmul.f32 %v1408, %v1404
    %v1410 = vmul.f32 %v1409, 1.442695
    %v1411 = vpow.pop %v1410
    %v1412 = vmul.f32 %v1402, %v1411
    %v1413 = vadd.f32 %v1359, %v1412
    %v1414 = vld [vmem:[#allocation10 + $0xe] sm:$0x1]
    %1415 = vset.pattern.permute.xlu0 14
    %1416 = vperm.xlu0 %1415, %v1034
    %v1417 = vpop.permute.xlu0 %1416
    %v1419 = vlaneseq
    %v1420 = vshrl.u32 %v1419, 7
    %v1421 = vsub.s32 0, %v1420
    %v1422 = vrot.slane %v1414, %v1421
    %v1423 = vsub.f32 %v1417, %v1422
    %v1424 = vld [vmem:[#allocation11 + $0xe] sm:$0x1]
    %v1425 = vlaneseq
    %v1426 = vshrl.u32 %v1425, 7
    %v1427 = vsub.s32 0, %v1426
    %v1428 = vrot.slane %v1424, %v1427
    %v1429 = vmul.f32 %v1428, %v1423
    %v1430 = vld [vmem:[#allocation13 + $0xe] sm:$0x1]
    %v1431 = vmul.f32 %v1423, %v1423
    %v1432 = vlaneseq
    %v1433 = vshrl.u32 %v1432, 7
    %v1434 = vsub.s32 0, %v1433
    %v1435 = vrot.slane %v1430, %v1434
    %v1436 = vmul.f32 %v1435, %v1431
    %v1437 = vmul.f32 %v1436, 1.442695
    %v1438 = vpow.pop %v1437
    %v1439 = vmul.f32 %v1429, %v1438
    %v1440 = vadd.f32 %v1386, %v1439
    %v1441 = vld [vmem:[#allocation10 + $0xf] sm:$0x1]
    %1442 = vset.pattern.permute.xlu0 15
    %1443 = vperm.xlu0 %1442, %v1034
    %v1444 = vpop.permute.xlu0 %1443
    %v1446 = vlaneseq
    %v1447 = vshrl.u32 %v1446, 7
    %v1448 = vsub.s32 0, %v1447
    %v1449 = vrot.slane %v1441, %v1448
    %v1450 = vsub.f32 %v1444, %v1449
    %v1451 = vld [vmem:[#allocation11 + $0xf] sm:$0x1]
    %v1452 = vlaneseq
    %v1453 = vshrl.u32 %v1452, 7
    %v1454 = vsub.s32 0, %v1453
    %v1455 = vrot.slane %v1451, %v1454
    %v1456 = vmul.f32 %v1455, %v1450
    %v1457 = vld [vmem:[#allocation13 + $0xf] sm:$0x1]
    %v1458 = vmul.f32 %v1450, %v1450
    %v1459 = vlaneseq
    %v1460 = vshrl.u32 %v1459, 7
    %v1461 = vsub.s32 0, %v1460
    %v1462 = vrot.slane %v1457, %v1461
    %v1463 = vmul.f32 %v1462, %v1458
    %v1464 = vmul.f32 %v1463, 1.442695
    %v1465 = vpow.pop %v1464
    %v1466 = vmul.f32 %v1456, %v1465
    %v1467 = vadd.f32 %v1413, %v1466
    %v1468 = vld [vmem:[#allocation10 + $0x10] sm:$0x1]
    %1469 = vset.pattern.permute.xlu0 16
    %1470 = vperm.xlu0 %1469, %v1034
    %v1471 = vpop.permute.xlu0 %1470
    %v1473 = vlaneseq
    %v1474 = vshrl.u32 %v1473, 7
    %v1475 = vsub.s32 0, %v1474
    %v1476 = vrot.slane %v1468, %v1475
    %v1477 = vsub.f32 %v1471, %v1476
    %v1478 = vld [vmem:[#allocation11 + $0x10] sm:$0x1]
    %v1479 = vlaneseq
    %v1480 = vshrl.u32 %v1479, 7
    %v1481 = vsub.s32 0, %v1480
    %v1482 = vrot.slane %v1478, %v1481
    %v1483 = vmul.f32 %v1482, %v1477
    %v1484 = vld [vmem:[#allocation13 + $0x10] sm:$0x1]
    %v1485 = vmul.f32 %v1477, %v1477
    %v1486 = vlaneseq
    %v1487 = vshrl.u32 %v1486, 7
    %v1488 = vsub.s32 0, %v1487
    %v1489 = vrot.slane %v1484, %v1488
    %v1490 = vmul.f32 %v1489, %v1485
    %v1491 = vmul.f32 %v1490, 1.442695
    %v1492 = vpow.pop %v1491
    %v1493 = vmul.f32 %v1483, %v1492
    %v1494 = vadd.f32 %v1440, %v1493
    %v1495 = vld [vmem:[#allocation10 + $0x11] sm:$0x1]
    %1496 = vset.pattern.permute.xlu0 17
    %1497 = vperm.xlu0 %1496, %v1034
    %v1498 = vpop.permute.xlu0 %1497
    %v1500 = vlaneseq
    %v1501 = vshrl.u32 %v1500, 7
    %v1502 = vsub.s32 0, %v1501
    %v1503 = vrot.slane %v1495, %v1502
    %v1504 = vsub.f32 %v1498, %v1503
    %v1505 = vld [vmem:[#allocation11 + $0x11] sm:$0x1]
    %v1506 = vlaneseq
    %v1507 = vshrl.u32 %v1506, 7
    %v1508 = vsub.s32 0, %v1507
    %v1509 = vrot.slane %v1505, %v1508
    %v1510 = vmul.f32 %v1509, %v1504
    %v1511 = vld [vmem:[#allocation13 + $0x11] sm:$0x1]
    %v1512 = vmul.f32 %v1504, %v1504
    %v1513 = vlaneseq
    %v1514 = vshrl.u32 %v1513, 7
    %v1515 = vsub.s32 0, %v1514
    %v1516 = vrot.slane %v1511, %v1515
    %v1517 = vmul.f32 %v1516, %v1512
    %v1518 = vmul.f32 %v1517, 1.442695
    %v1519 = vpow.pop %v1518
    %v1520 = vmul.f32 %v1510, %v1519
    %v1521 = vadd.f32 %v1467, %v1520
    %v1522 = vld [vmem:[#allocation10 + $0x12] sm:$0x1]
    %1523 = vset.pattern.permute.xlu0 18
    %1524 = vperm.xlu0 %1523, %v1034
    %v1525 = vpop.permute.xlu0 %1524
    %v1527 = vlaneseq
    %v1528 = vshrl.u32 %v1527, 7
    %v1529 = vsub.s32 0, %v1528
    %v1530 = vrot.slane %v1522, %v1529
    %v1531 = vsub.f32 %v1525, %v1530
    %v1532 = vld [vmem:[#allocation11 + $0x12] sm:$0x1]
    %v1533 = vlaneseq
    %v1534 = vshrl.u32 %v1533, 7
    %v1535 = vsub.s32 0, %v1534
    %v1536 = vrot.slane %v1532, %v1535
    %v1537 = vmul.f32 %v1536, %v1531
    %v1538 = vld [vmem:[#allocation13 + $0x12] sm:$0x1]
    %v1539 = vmul.f32 %v1531, %v1531
    %v1540 = vlaneseq
    %v1541 = vshrl.u32 %v1540, 7
    %v1542 = vsub.s32 0, %v1541
    %v1543 = vrot.slane %v1538, %v1542
    %v1544 = vmul.f32 %v1543, %v1539
    %v1545 = vmul.f32 %v1544, 1.442695
    %v1546 = vpow.pop %v1545
    %v1547 = vmul.f32 %v1537, %v1546
    %v1548 = vadd.f32 %v1494, %v1547
    %v1549 = vld [vmem:[#allocation10 + $0x13] sm:$0x1]
    %1550 = vset.pattern.permute.xlu0 19
    %1551 = vperm.xlu0 %1550, %v1034
    %v1552 = vpop.permute.xlu0 %1551
    %v1554 = vlaneseq
    %v1555 = vshrl.u32 %v1554, 7
    %v1556 = vsub.s32 0, %v1555
    %v1557 = vrot.slane %v1549, %v1556
    %v1558 = vsub.f32 %v1552, %v1557
    %v1559 = vld [vmem:[#allocation11 + $0x13] sm:$0x1]
    %v1560 = vlaneseq
    %v1561 = vshrl.u32 %v1560, 7
    %v1562 = vsub.s32 0, %v1561
    %v1563 = vrot.slane %v1559, %v1562
    %v1564 = vmul.f32 %v1563, %v1558
    %v1565 = vld [vmem:[#allocation13 + $0x13] sm:$0x1]
    %v1566 = vmul.f32 %v1558, %v1558
    %v1567 = vlaneseq
    %v1568 = vshrl.u32 %v1567, 7
    %v1569 = vsub.s32 0, %v1568
    %v1570 = vrot.slane %v1565, %v1569
    %v1571 = vmul.f32 %v1570, %v1566
    %v1572 = vmul.f32 %v1571, 1.442695
    %v1573 = vpow.pop %v1572
    %v1574 = vmul.f32 %v1564, %v1573
    %v1575 = vadd.f32 %v1521, %v1574
    %v1576 = vld [vmem:[#allocation10 + $0x14] sm:$0x1]
    %1577 = vset.pattern.permute.xlu0 20
    %1578 = vperm.xlu0 %1577, %v1034
    %v1579 = vpop.permute.xlu0 %1578
    %v1581 = vlaneseq
    %v1582 = vshrl.u32 %v1581, 7
    %v1583 = vsub.s32 0, %v1582
    %v1584 = vrot.slane %v1576, %v1583
    %v1585 = vsub.f32 %v1579, %v1584
    %v1586 = vld [vmem:[#allocation11 + $0x14] sm:$0x1]
    %v1587 = vlaneseq
    %v1588 = vshrl.u32 %v1587, 7
    %v1589 = vsub.s32 0, %v1588
    %v1590 = vrot.slane %v1586, %v1589
    %v1591 = vmul.f32 %v1590, %v1585
    %v1592 = vld [vmem:[#allocation13 + $0x14] sm:$0x1]
    %v1593 = vmul.f32 %v1585, %v1585
    %v1594 = vlaneseq
    %v1595 = vshrl.u32 %v1594, 7
    %v1596 = vsub.s32 0, %v1595
    %v1597 = vrot.slane %v1592, %v1596
    %v1598 = vmul.f32 %v1597, %v1593
    %v1599 = vmul.f32 %v1598, 1.442695
    %v1600 = vpow.pop %v1599
    %v1601 = vmul.f32 %v1591, %v1600
    %v1602 = vadd.f32 %v1548, %v1601
    %v1603 = vld [vmem:[#allocation10 + $0x15] sm:$0x1]
    %1604 = vset.pattern.permute.xlu0 21
    %1605 = vperm.xlu0 %1604, %v1034
    %v1606 = vpop.permute.xlu0 %1605
    %v1608 = vlaneseq
    %v1609 = vshrl.u32 %v1608, 7
    %v1610 = vsub.s32 0, %v1609
    %v1611 = vrot.slane %v1603, %v1610
    %v1612 = vsub.f32 %v1606, %v1611
    %v1613 = vld [vmem:[#allocation11 + $0x15] sm:$0x1]
    %v1614 = vlaneseq
    %v1615 = vshrl.u32 %v1614, 7
    %v1616 = vsub.s32 0, %v1615
    %v1617 = vrot.slane %v1613, %v1616
    %v1618 = vmul.f32 %v1617, %v1612
    %v1619 = vld [vmem:[#allocation13 + $0x15] sm:$0x1]
    %v1620 = vmul.f32 %v1612, %v1612
    %v1621 = vlaneseq
    %v1622 = vshrl.u32 %v1621, 7
    %v1623 = vsub.s32 0, %v1622
    %v1624 = vrot.slane %v1619, %v1623
    %v1625 = vmul.f32 %v1624, %v1620
    %v1626 = vmul.f32 %v1625, 1.442695
    %v1627 = vpow.pop %v1626
    %v1628 = vmul.f32 %v1618, %v1627
    %v1629 = vadd.f32 %v1575, %v1628
    %v1630 = vld [vmem:[#allocation10 + $0x16] sm:$0x1]
    %1631 = vset.pattern.permute.xlu0 22
    %1632 = vperm.xlu0 %1631, %v1034
    %v1633 = vpop.permute.xlu0 %1632
    %v1635 = vlaneseq
    %v1636 = vshrl.u32 %v1635, 7
    %v1637 = vsub.s32 0, %v1636
    %v1638 = vrot.slane %v1630, %v1637
    %v1639 = vsub.f32 %v1633, %v1638
    %v1640 = vld [vmem:[#allocation11 + $0x16] sm:$0x1]
    %v1641 = vlaneseq
    %v1642 = vshrl.u32 %v1641, 7
    %v1643 = vsub.s32 0, %v1642
    %v1644 = vrot.slane %v1640, %v1643
    %v1645 = vmul.f32 %v1644, %v1639
    %v1646 = vld [vmem:[#allocation13 + $0x16] sm:$0x1]
    %v1647 = vmul.f32 %v1639, %v1639
    %v1648 = vlaneseq
    %v1649 = vshrl.u32 %v1648, 7
    %v1650 = vsub.s32 0, %v1649
    %v1651 = vrot.slane %v1646, %v1650
    %v1652 = vmul.f32 %v1651, %v1647
    %v1653 = vmul.f32 %v1652, 1.442695
    %v1654 = vpow.pop %v1653
    %v1655 = vmul.f32 %v1645, %v1654
    %v1656 = vadd.f32 %v1602, %v1655
    %v1657 = vld [vmem:[#allocation10 + $0x17] sm:$0x1]
    %1658 = vset.pattern.permute.xlu0 23
    %1659 = vperm.xlu0 %1658, %v1034
    %v1660 = vpop.permute.xlu0 %1659
    %v1662 = vlaneseq
    %v1663 = vshrl.u32 %v1662, 7
    %v1664 = vsub.s32 0, %v1663
    %v1665 = vrot.slane %v1657, %v1664
    %v1666 = vsub.f32 %v1660, %v1665
    %v1667 = vld [vmem:[#allocation11 + $0x17] sm:$0x1]
    %v1668 = vlaneseq
    %v1669 = vshrl.u32 %v1668, 7
    %v1670 = vsub.s32 0, %v1669
    %v1671 = vrot.slane %v1667, %v1670
    %v1672 = vmul.f32 %v1671, %v1666
    %v1673 = vld [vmem:[#allocation13 + $0x17] sm:$0x1]
    %v1674 = vmul.f32 %v1666, %v1666
    %v1675 = vlaneseq
    %v1676 = vshrl.u32 %v1675, 7
    %v1677 = vsub.s32 0, %v1676
    %v1678 = vrot.slane %v1673, %v1677
    %v1679 = vmul.f32 %v1678, %v1674
    %v1680 = vmul.f32 %v1679, 1.442695
    %v1681 = vpow.pop %v1680
    %v1682 = vmul.f32 %v1672, %v1681
    %v1683 = vadd.f32 %v1629, %v1682
    %v1684 = vld [vmem:[#allocation10 + $0x18] sm:$0x1]
    %1685 = vset.pattern.permute.xlu0 24
    %1686 = vperm.xlu0 %1685, %v1034
    %v1687 = vpop.permute.xlu0 %1686
    %v1689 = vlaneseq
    %v1690 = vshrl.u32 %v1689, 7
    %v1691 = vsub.s32 0, %v1690
    %v1692 = vrot.slane %v1684, %v1691
    %v1693 = vsub.f32 %v1687, %v1692
    %v1694 = vld [vmem:[#allocation11 + $0x18] sm:$0x1]
    %v1695 = vlaneseq
    %v1696 = vshrl.u32 %v1695, 7
    %v1697 = vsub.s32 0, %v1696
    %v1698 = vrot.slane %v1694, %v1697
    %v1699 = vmul.f32 %v1698, %v1693
    %v1700 = vld [vmem:[#allocation13 + $0x18] sm:$0x1]
    %v1701 = vmul.f32 %v1693, %v1693
    %v1702 = vlaneseq
    %v1703 = vshrl.u32 %v1702, 7
    %v1704 = vsub.s32 0, %v1703
    %v1705 = vrot.slane %v1700, %v1704
    %v1706 = vmul.f32 %v1705, %v1701
    %v1707 = vmul.f32 %v1706, 1.442695
    %v1708 = vpow.pop %v1707
    %v1709 = vmul.f32 %v1699, %v1708
    %v1710 = vadd.f32 %v1656, %v1709
    %v1711 = vld [vmem:[#allocation10 + $0x19] sm:$0x1]
    %1712 = vset.pattern.permute.xlu0 25
    %1713 = vperm.xlu0 %1712, %v1034
    %v1714 = vpop.permute.xlu0 %1713
    %v1716 = vlaneseq
    %v1717 = vshrl.u32 %v1716, 7
    %v1718 = vsub.s32 0, %v1717
    %v1719 = vrot.slane %v1711, %v1718
    %v1720 = vsub.f32 %v1714, %v1719
    %v1721 = vld [vmem:[#allocation11 + $0x19] sm:$0x1]
    %v1722 = vlaneseq
    %v1723 = vshrl.u32 %v1722, 7
    %v1724 = vsub.s32 0, %v1723
    %v1725 = vrot.slane %v1721, %v1724
    %v1726 = vmul.f32 %v1725, %v1720
    %v1727 = vld [vmem:[#allocation13 + $0x19] sm:$0x1]
    %v1728 = vmul.f32 %v1720, %v1720
    %v1729 = vlaneseq
    %v1730 = vshrl.u32 %v1729, 7
    %v1731 = vsub.s32 0, %v1730
    %v1732 = vrot.slane %v1727, %v1731
    %v1733 = vmul.f32 %v1732, %v1728
    %v1734 = vmul.f32 %v1733, 1.442695
    %v1735 = vpow.pop %v1734
    %v1736 = vmul.f32 %v1726, %v1735
    %v1737 = vadd.f32 %v1683, %v1736
    %v1738 = vld [vmem:[#allocation10 + $0x1a] sm:$0x1]
    %1739 = vset.pattern.permute.xlu0 26
    %1740 = vperm.xlu0 %1739, %v1034
    %v1741 = vpop.permute.xlu0 %1740
    %v1743 = vlaneseq
    %v1744 = vshrl.u32 %v1743, 7
    %v1745 = vsub.s32 0, %v1744
    %v1746 = vrot.slane %v1738, %v1745
    %v1747 = vsub.f32 %v1741, %v1746
    %v1748 = vld [vmem:[#allocation11 + $0x1a] sm:$0x1]
    %v1749 = vlaneseq
    %v1750 = vshrl.u32 %v1749, 7
    %v1751 = vsub.s32 0, %v1750
    %v1752 = vrot.slane %v1748, %v1751
    %v1753 = vmul.f32 %v1752, %v1747
    %v1754 = vld [vmem:[#allocation13 + $0x1a] sm:$0x1]
    %v1755 = vmul.f32 %v1747, %v1747
    %v1756 = vlaneseq
    %v1757 = vshrl.u32 %v1756, 7
    %v1758 = vsub.s32 0, %v1757
    %v1759 = vrot.slane %v1754, %v1758
    %v1760 = vmul.f32 %v1759, %v1755
    %v1761 = vmul.f32 %v1760, 1.442695
    %v1762 = vpow.pop %v1761
    %v1763 = vmul.f32 %v1753, %v1762
    %v1764 = vadd.f32 %v1710, %v1763
    %v1765 = vld [vmem:[#allocation10 + $0x1b] sm:$0x1]
    %1766 = vset.pattern.permute.xlu0 27
    %1767 = vperm.xlu0 %1766, %v1034
    %v1768 = vpop.permute.xlu0 %1767
    %v1770 = vlaneseq
    %v1771 = vshrl.u32 %v1770, 7
    %v1772 = vsub.s32 0, %v1771
    %v1773 = vrot.slane %v1765, %v1772
    %v1774 = vsub.f32 %v1768, %v1773
    %v1775 = vld [vmem:[#allocation11 + $0x1b] sm:$0x1]
    %v1776 = vlaneseq
    %v1777 = vshrl.u32 %v1776, 7
    %v1778 = vsub.s32 0, %v1777
    %v1779 = vrot.slane %v1775, %v1778
    %v1780 = vmul.f32 %v1779, %v1774
    %v1781 = vld [vmem:[#allocation13 + $0x1b] sm:$0x1]
    %v1782 = vmul.f32 %v1774, %v1774
    %v1783 = vlaneseq
    %v1784 = vshrl.u32 %v1783, 7
    %v1785 = vsub.s32 0, %v1784
    %v1786 = vrot.slane %v1781, %v1785
    %v1787 = vmul.f32 %v1786, %v1782
    %v1788 = vmul.f32 %v1787, 1.442695
    %v1789 = vpow.pop %v1788
    %v1790 = vmul.f32 %v1780, %v1789
    %v1791 = vadd.f32 %v1737, %v1790
    %v1792 = vld [vmem:[#allocation10 + $0x1c] sm:$0x1]
    %1793 = vset.pattern.permute.xlu0 28
    %1794 = vperm.xlu0 %1793, %v1034
    %v1795 = vpop.permute.xlu0 %1794
    %v1797 = vlaneseq
    %v1798 = vshrl.u32 %v1797, 7
    %v1799 = vsub.s32 0, %v1798
    %v1800 = vrot.slane %v1792, %v1799
    %v1801 = vsub.f32 %v1795, %v1800
    %v1802 = vld [vmem:[#allocation11 + $0x1c] sm:$0x1]
    %v1803 = vlaneseq
    %v1804 = vshrl.u32 %v1803, 7
    %v1805 = vsub.s32 0, %v1804
    %v1806 = vrot.slane %v1802, %v1805
    %v1807 = vmul.f32 %v1806, %v1801
    %v1808 = vld [vmem:[#allocation13 + $0x1c] sm:$0x1]
    %v1809 = vmul.f32 %v1801, %v1801
    %v1810 = vlaneseq
    %v1811 = vshrl.u32 %v1810, 7
    %v1812 = vsub.s32 0, %v1811
    %v1813 = vrot.slane %v1808, %v1812
    %v1814 = vmul.f32 %v1813, %v1809
    %v1815 = vmul.f32 %v1814, 1.442695
    %v1816 = vpow.pop %v1815
    %v1817 = vmul.f32 %v1807, %v1816
    %v1818 = vadd.f32 %v1764, %v1817
    %v1819 = vld [vmem:[#allocation10 + $0x1d] sm:$0x1]
    %1820 = vset.pattern.permute.xlu0 29
    %1821 = vperm.xlu0 %1820, %v1034
    %v1822 = vpop.permute.xlu0 %1821
    %v1824 = vlaneseq
    %v1825 = vshrl.u32 %v1824, 7
    %v1826 = vsub.s32 0, %v1825
    %v1827 = vrot.slane %v1819, %v1826
    %v1828 = vsub.f32 %v1822, %v1827
    %v1829 = vld [vmem:[#allocation11 + $0x1d] sm:$0x1]
    %v1830 = vlaneseq
    %v1831 = vshrl.u32 %v1830, 7
    %v1832 = vsub.s32 0, %v1831
    %v1833 = vrot.slane %v1829, %v1832
    %v1834 = vmul.f32 %v1833, %v1828
    %v1835 = vld [vmem:[#allocation13 + $0x1d] sm:$0x1]
    %v1836 = vmul.f32 %v1828, %v1828
    %v1837 = vlaneseq
    %v1838 = vshrl.u32 %v1837, 7
    %v1839 = vsub.s32 0, %v1838
    %v1840 = vrot.slane %v1835, %v1839
    %v1841 = vmul.f32 %v1840, %v1836
    %v1842 = vmul.f32 %v1841, 1.442695
    %v1843 = vpow.pop %v1842
    %v1844 = vmul.f32 %v1834, %v1843
    %v1845 = vadd.f32 %v1791, %v1844
    %v1846 = vld [vmem:[#allocation10 + $0x1e] sm:$0x1]
    %1847 = vset.pattern.permute.xlu0 30
    %1848 = vperm.xlu0 %1847, %v1034
    %v1849 = vpop.permute.xlu0 %1848
    %v1851 = vlaneseq
    %v1852 = vshrl.u32 %v1851, 7
    %v1853 = vsub.s32 0, %v1852
    %v1854 = vrot.slane %v1846, %v1853
    %v1855 = vsub.f32 %v1849, %v1854
    %v1856 = vld [vmem:[#allocation11 + $0x1e] sm:$0x1]
    %v1857 = vlaneseq
    %v1858 = vshrl.u32 %v1857, 7
    %v1859 = vsub.s32 0, %v1858
    %v1860 = vrot.slane %v1856, %v1859
    %v1861 = vmul.f32 %v1860, %v1855
    %v1862 = vld [vmem:[#allocation13 + $0x1e] sm:$0x1]
    %v1863 = vmul.f32 %v1855, %v1855
    %v1864 = vlaneseq
    %v1865 = vshrl.u32 %v1864, 7
    %v1866 = vsub.s32 0, %v1865
    %v1867 = vrot.slane %v1862, %v1866
    %v1868 = vmul.f32 %v1867, %v1863
    %v1869 = vmul.f32 %v1868, 1.442695
    %v1870 = vpow.pop %v1869
    %v1871 = vmul.f32 %v1861, %v1870
    %v1872 = vadd.f32 %v1818, %v1871
    %v1873 = vld [vmem:[#allocation10 + $0x1f] sm:$0x1]
    %1874 = vset.pattern.permute.xlu0 31
    %1875 = vperm.xlu0 %1874, %v1034
    %v1876 = vpop.permute.xlu0 %1875
    %v1878 = vlaneseq
    %v1879 = vshrl.u32 %v1878, 7
    %v1880 = vsub.s32 0, %v1879
    %v1881 = vrot.slane %v1873, %v1880
    %v1882 = vsub.f32 %v1876, %v1881
    %v1883 = vld [vmem:[#allocation11 + $0x1f] sm:$0x1]
    %v1884 = vlaneseq
    %v1885 = vshrl.u32 %v1884, 7
    %v1886 = vsub.s32 0, %v1885
    %v1887 = vrot.slane %v1883, %v1886
    %v1888 = vmul.f32 %v1887, %v1882
    %v1889 = vld [vmem:[#allocation13 + $0x1f] sm:$0x1]
    %v1890 = vmul.f32 %v1882, %v1882
    %v1891 = vlaneseq
    %v1892 = vshrl.u32 %v1891, 7
    %v1893 = vsub.s32 0, %v1892
    %v1894 = vrot.slane %v1889, %v1893
    %v1895 = vmul.f32 %v1894, %v1890
    %v1896 = vmul.f32 %v1895, 1.442695
    %v1897 = vpow.pop %v1896
    %v1898 = vmul.f32 %v1888, %v1897
    %v1899 = vadd.f32 %v1845, %v1898
    %v1900 = vld [vmem:[#allocation10 + $0x20] sm:$0x1]
    %1901 = vset.pattern.permute.xlu0 32
    %1902 = vperm.xlu0 %1901, %v1034
    %v1903 = vpop.permute.xlu0 %1902
    %v1905 = vlaneseq
    %v1906 = vshrl.u32 %v1905, 7
    %v1907 = vsub.s32 0, %v1906
    %v1908 = vrot.slane %v1900, %v1907
    %v1909 = vsub.f32 %v1903, %v1908
    %v1910 = vld [vmem:[#allocation11 + $0x20] sm:$0x1]
    %v1911 = vlaneseq
    %v1912 = vshrl.u32 %v1911, 7
    %v1913 = vsub.s32 0, %v1912
    %v1914 = vrot.slane %v1910, %v1913
    %v1915 = vmul.f32 %v1914, %v1909
    %v1916 = vld [vmem:[#allocation13 + $0x20] sm:$0x1]
    %v1917 = vmul.f32 %v1909, %v1909
    %v1918 = vlaneseq
    %v1919 = vshrl.u32 %v1918, 7
    %v1920 = vsub.s32 0, %v1919
    %v1921 = vrot.slane %v1916, %v1920
    %v1922 = vmul.f32 %v1921, %v1917
    %v1923 = vmul.f32 %v1922, 1.442695
    %v1924 = vpow.pop %v1923
    %v1925 = vmul.f32 %v1915, %v1924
    %v1926 = vadd.f32 %v1872, %v1925
    %v1927 = vld [vmem:[#allocation10 + $0x21] sm:$0x1]
    %1928 = vset.pattern.permute.xlu0 33
    %1929 = vperm.xlu0 %1928, %v1034
    %v1930 = vpop.permute.xlu0 %1929
    %v1932 = vlaneseq
    %v1933 = vshrl.u32 %v1932, 7
    %v1934 = vsub.s32 0, %v1933
    %v1935 = vrot.slane %v1927, %v1934
    %v1936 = vsub.f32 %v1930, %v1935
    %v1937 = vld [vmem:[#allocation11 + $0x21] sm:$0x1]
    %v1938 = vlaneseq
    %v1939 = vshrl.u32 %v1938, 7
    %v1940 = vsub.s32 0, %v1939
    %v1941 = vrot.slane %v1937, %v1940
    %v1942 = vmul.f32 %v1941, %v1936
    %v1943 = vld [vmem:[#allocation13 + $0x21] sm:$0x1]
    %v1944 = vmul.f32 %v1936, %v1936
    %v1945 = vlaneseq
    %v1946 = vshrl.u32 %v1945, 7
    %v1947 = vsub.s32 0, %v1946
    %v1948 = vrot.slane %v1943, %v1947
    %v1949 = vmul.f32 %v1948, %v1944
    %v1950 = vmul.f32 %v1949, 1.442695
    %v1951 = vpow.pop %v1950
    %v1952 = vmul.f32 %v1942, %v1951
    %v1953 = vadd.f32 %v1899, %v1952
    %v1954 = vld [vmem:[#allocation10 + $0x22] sm:$0x1]
    %1955 = vset.pattern.permute.xlu0 34
    %1956 = vperm.xlu0 %1955, %v1034
    %v1957 = vpop.permute.xlu0 %1956
    %v1959 = vlaneseq
    %v1960 = vshrl.u32 %v1959, 7
    %v1961 = vsub.s32 0, %v1960
    %v1962 = vrot.slane %v1954, %v1961
    %v1963 = vsub.f32 %v1957, %v1962
    %v1964 = vld [vmem:[#allocation11 + $0x22] sm:$0x1]
    %v1965 = vlaneseq
    %v1966 = vshrl.u32 %v1965, 7
    %v1967 = vsub.s32 0, %v1966
    %v1968 = vrot.slane %v1964, %v1967
    %v1969 = vmul.f32 %v1968, %v1963
    %v1970 = vld [vmem:[#allocation13 + $0x22] sm:$0x1]
    %v1971 = vmul.f32 %v1963, %v1963
    %v1972 = vlaneseq
    %v1973 = vshrl.u32 %v1972, 7
    %v1974 = vsub.s32 0, %v1973
    %v1975 = vrot.slane %v1970, %v1974
    %v1976 = vmul.f32 %v1975, %v1971
    %v1977 = vmul.f32 %v1976, 1.442695
    %v1978 = vpow.pop %v1977
    %v1979 = vmul.f32 %v1969, %v1978
    %v1980 = vadd.f32 %v1926, %v1979
    %v1981 = vld [vmem:[#allocation10 + $0x23] sm:$0x1]
    %1982 = vset.pattern.permute.xlu0 35
    %1983 = vperm.xlu0 %1982, %v1034
    %v1984 = vpop.permute.xlu0 %1983
    %v1986 = vlaneseq
    %v1987 = vshrl.u32 %v1986, 7
    %v1988 = vsub.s32 0, %v1987
    %v1989 = vrot.slane %v1981, %v1988
    %v1990 = vsub.f32 %v1984, %v1989
    %v1991 = vld [vmem:[#allocation11 + $0x23] sm:$0x1]
    %v1992 = vlaneseq
    %v1993 = vshrl.u32 %v1992, 7
    %v1994 = vsub.s32 0, %v1993
    %v1995 = vrot.slane %v1991, %v1994
    %v1996 = vmul.f32 %v1995, %v1990
    %v1997 = vld [vmem:[#allocation13 + $0x23] sm:$0x1]
    %v1998 = vmul.f32 %v1990, %v1990
    %v1999 = vlaneseq
    %v2000 = vshrl.u32 %v1999, 7
    %v2001 = vsub.s32 0, %v2000
    %v2002 = vrot.slane %v1997, %v2001
    %v2003 = vmul.f32 %v2002, %v1998
    %v2004 = vmul.f32 %v2003, 1.442695
    %v2005 = vpow.pop %v2004
    %v2006 = vmul.f32 %v1996, %v2005
    %v2007 = vadd.f32 %v1953, %v2006
    %v2008 = vld [vmem:[#allocation10 + $0x24] sm:$0x1]
    %2009 = vset.pattern.permute.xlu0 36
    %2010 = vperm.xlu0 %2009, %v1034
    %v2011 = vpop.permute.xlu0 %2010
    %v2013 = vlaneseq
    %v2014 = vshrl.u32 %v2013, 7
    %v2015 = vsub.s32 0, %v2014
    %v2016 = vrot.slane %v2008, %v2015
    %v2017 = vsub.f32 %v2011, %v2016
    %v2018 = vld [vmem:[#allocation11 + $0x24] sm:$0x1]
    %v2019 = vlaneseq
    %v2020 = vshrl.u32 %v2019, 7
    %v2021 = vsub.s32 0, %v2020
    %v2022 = vrot.slane %v2018, %v2021
    %v2023 = vmul.f32 %v2022, %v2017
    %v2024 = vld [vmem:[#allocation13 + $0x24] sm:$0x1]
    %v2025 = vmul.f32 %v2017, %v2017
    %v2026 = vlaneseq
    %v2027 = vshrl.u32 %v2026, 7
    %v2028 = vsub.s32 0, %v2027
    %v2029 = vrot.slane %v2024, %v2028
    %v2030 = vmul.f32 %v2029, %v2025
    %v2031 = vmul.f32 %v2030, 1.442695
    %v2032 = vpow.pop %v2031
    %v2033 = vmul.f32 %v2023, %v2032
    %v2034 = vadd.f32 %v1980, %v2033
    %v2035 = vld [vmem:[#allocation10 + $0x25] sm:$0x1]
    %2036 = vset.pattern.permute.xlu0 37
    %2037 = vperm.xlu0 %2036, %v1034
    %v2038 = vpop.permute.xlu0 %2037
    %v2040 = vlaneseq
    %v2041 = vshrl.u32 %v2040, 7
    %v2042 = vsub.s32 0, %v2041
    %v2043 = vrot.slane %v2035, %v2042
    %v2044 = vsub.f32 %v2038, %v2043
    %v2045 = vld [vmem:[#allocation11 + $0x25] sm:$0x1]
    %v2046 = vlaneseq
    %v2047 = vshrl.u32 %v2046, 7
    %v2048 = vsub.s32 0, %v2047
    %v2049 = vrot.slane %v2045, %v2048
    %v2050 = vmul.f32 %v2049, %v2044
    %v2051 = vld [vmem:[#allocation13 + $0x25] sm:$0x1]
    %v2052 = vmul.f32 %v2044, %v2044
    %v2053 = vlaneseq
    %v2054 = vshrl.u32 %v2053, 7
    %v2055 = vsub.s32 0, %v2054
    %v2056 = vrot.slane %v2051, %v2055
    %v2057 = vmul.f32 %v2056, %v2052
    %v2058 = vmul.f32 %v2057, 1.442695
    %v2059 = vpow.pop %v2058
    %v2060 = vmul.f32 %v2050, %v2059
    %v2061 = vadd.f32 %v2007, %v2060
    %v2062 = vld [vmem:[#allocation10 + $0x26] sm:$0x1]
    %2063 = vset.pattern.permute.xlu0 38
    %2064 = vperm.xlu0 %2063, %v1034
    %v2065 = vpop.permute.xlu0 %2064
    %v2067 = vlaneseq
    %v2068 = vshrl.u32 %v2067, 7
    %v2069 = vsub.s32 0, %v2068
    %v2070 = vrot.slane %v2062, %v2069
    %v2071 = vsub.f32 %v2065, %v2070
    %v2072 = vld [vmem:[#allocation11 + $0x26] sm:$0x1]
    %v2073 = vlaneseq
    %v2074 = vshrl.u32 %v2073, 7
    %v2075 = vsub.s32 0, %v2074
    %v2076 = vrot.slane %v2072, %v2075
    %v2077 = vmul.f32 %v2076, %v2071
    %v2078 = vld [vmem:[#allocation13 + $0x26] sm:$0x1]
    %v2079 = vmul.f32 %v2071, %v2071
    %v2080 = vlaneseq
    %v2081 = vshrl.u32 %v2080, 7
    %v2082 = vsub.s32 0, %v2081
    %v2083 = vrot.slane %v2078, %v2082
    %v2084 = vmul.f32 %v2083, %v2079
    %v2085 = vmul.f32 %v2084, 1.442695
    %v2086 = vpow.pop %v2085
    %v2087 = vmul.f32 %v2077, %v2086
    %v2088 = vadd.f32 %v2034, %v2087
    %v2089 = vld [vmem:[#allocation10 + $0x27] sm:$0x1]
    %2090 = vset.pattern.permute.xlu0 39
    %2091 = vperm.xlu0 %2090, %v1034
    %v2092 = vpop.permute.xlu0 %2091
    %v2094 = vlaneseq
    %v2095 = vshrl.u32 %v2094, 7
    %v2096 = vsub.s32 0, %v2095
    %v2097 = vrot.slane %v2089, %v2096
    %v2098 = vsub.f32 %v2092, %v2097
    %v2099 = vld [vmem:[#allocation11 + $0x27] sm:$0x1]
    %v2100 = vlaneseq
    %v2101 = vshrl.u32 %v2100, 7
    %v2102 = vsub.s32 0, %v2101
    %v2103 = vrot.slane %v2099, %v2102
    %v2104 = vmul.f32 %v2103, %v2098
    %v2105 = vld [vmem:[#allocation13 + $0x27] sm:$0x1]
    %v2106 = vmul.f32 %v2098, %v2098
    %v2107 = vlaneseq
    %v2108 = vshrl.u32 %v2107, 7
    %v2109 = vsub.s32 0, %v2108
    %v2110 = vrot.slane %v2105, %v2109
    %v2111 = vmul.f32 %v2110, %v2106
    %v2112 = vmul.f32 %v2111, 1.442695
    %v2113 = vpow.pop %v2112
    %v2114 = vmul.f32 %v2104, %v2113
    %v2115 = vadd.f32 %v2061, %v2114
    %v2116 = vld [vmem:[#allocation10 + $0x28] sm:$0x1]
    %2117 = vset.pattern.permute.xlu0 40
    %2118 = vperm.xlu0 %2117, %v1034
    %v2119 = vpop.permute.xlu0 %2118
    %v2121 = vlaneseq
    %v2122 = vshrl.u32 %v2121, 7
    %v2123 = vsub.s32 0, %v2122
    %v2124 = vrot.slane %v2116, %v2123
    %v2125 = vsub.f32 %v2119, %v2124
    %v2126 = vld [vmem:[#allocation11 + $0x28] sm:$0x1]
    %v2127 = vlaneseq
    %v2128 = vshrl.u32 %v2127, 7
    %v2129 = vsub.s32 0, %v2128
    %v2130 = vrot.slane %v2126, %v2129
    %v2131 = vmul.f32 %v2130, %v2125
    %v2132 = vld [vmem:[#allocation13 + $0x28] sm:$0x1]
    %v2133 = vmul.f32 %v2125, %v2125
    %v2134 = vlaneseq
    %v2135 = vshrl.u32 %v2134, 7
    %v2136 = vsub.s32 0, %v2135
    %v2137 = vrot.slane %v2132, %v2136
    %v2138 = vmul.f32 %v2137, %v2133
    %v2139 = vmul.f32 %v2138, 1.442695
    %v2140 = vpow.pop %v2139
    %v2141 = vmul.f32 %v2131, %v2140
    %v2142 = vadd.f32 %v2088, %v2141
    %v2143 = vld [vmem:[#allocation10 + $0x29] sm:$0x1]
    %2144 = vset.pattern.permute.xlu0 41
    %2145 = vperm.xlu0 %2144, %v1034
    %v2146 = vpop.permute.xlu0 %2145
    %v2148 = vlaneseq
    %v2149 = vshrl.u32 %v2148, 7
    %v2150 = vsub.s32 0, %v2149
    %v2151 = vrot.slane %v2143, %v2150
    %v2152 = vsub.f32 %v2146, %v2151
    %v2153 = vld [vmem:[#allocation11 + $0x29] sm:$0x1]
    %v2154 = vlaneseq
    %v2155 = vshrl.u32 %v2154, 7
    %v2156 = vsub.s32 0, %v2155
    %v2157 = vrot.slane %v2153, %v2156
    %v2158 = vmul.f32 %v2157, %v2152
    %v2159 = vld [vmem:[#allocation13 + $0x29] sm:$0x1]
    %v2160 = vmul.f32 %v2152, %v2152
    %v2161 = vlaneseq
    %v2162 = vshrl.u32 %v2161, 7
    %v2163 = vsub.s32 0, %v2162
    %v2164 = vrot.slane %v2159, %v2163
    %v2165 = vmul.f32 %v2164, %v2160
    %v2166 = vmul.f32 %v2165, 1.442695
    %v2167 = vpow.pop %v2166
    %v2168 = vmul.f32 %v2158, %v2167
    %v2169 = vadd.f32 %v2115, %v2168
    %v2170 = vld [vmem:[#allocation10 + $0x2a] sm:$0x1]
    %2171 = vset.pattern.permute.xlu0 42
    %2172 = vperm.xlu0 %2171, %v1034
    %v2173 = vpop.permute.xlu0 %2172
    %v2175 = vlaneseq
    %v2176 = vshrl.u32 %v2175, 7
    %v2177 = vsub.s32 0, %v2176
    %v2178 = vrot.slane %v2170, %v2177
    %v2179 = vsub.f32 %v2173, %v2178
    %v2180 = vld [vmem:[#allocation11 + $0x2a] sm:$0x1]
    %v2181 = vlaneseq
    %v2182 = vshrl.u32 %v2181, 7
    %v2183 = vsub.s32 0, %v2182
    %v2184 = vrot.slane %v2180, %v2183
    %v2185 = vmul.f32 %v2184, %v2179
    %v2186 = vld [vmem:[#allocation13 + $0x2a] sm:$0x1]
    %v2187 = vmul.f32 %v2179, %v2179
    %v2188 = vlaneseq
    %v2189 = vshrl.u32 %v2188, 7
    %v2190 = vsub.s32 0, %v2189
    %v2191 = vrot.slane %v2186, %v2190
    %v2192 = vmul.f32 %v2191, %v2187
    %v2193 = vmul.f32 %v2192, 1.442695
    %v2194 = vpow.pop %v2193
    %v2195 = vmul.f32 %v2185, %v2194
    %v2196 = vadd.f32 %v2142, %v2195
    %v2197 = vld [vmem:[#allocation10 + $0x2b] sm:$0x1]
    %2198 = vset.pattern.permute.xlu0 43
    %2199 = vperm.xlu0 %2198, %v1034
    %v2200 = vpop.permute.xlu0 %2199
    %v2202 = vlaneseq
    %v2203 = vshrl.u32 %v2202, 7
    %v2204 = vsub.s32 0, %v2203
    %v2205 = vrot.slane %v2197, %v2204
    %v2206 = vsub.f32 %v2200, %v2205
    %v2207 = vld [vmem:[#allocation11 + $0x2b] sm:$0x1]
    %v2208 = vlaneseq
    %v2209 = vshrl.u32 %v2208, 7
    %v2210 = vsub.s32 0, %v2209
    %v2211 = vrot.slane %v2207, %v2210
    %v2212 = vmul.f32 %v2211, %v2206
    %v2213 = vld [vmem:[#allocation13 + $0x2b] sm:$0x1]
    %v2214 = vmul.f32 %v2206, %v2206
    %v2215 = vlaneseq
    %v2216 = vshrl.u32 %v2215, 7
    %v2217 = vsub.s32 0, %v2216
    %v2218 = vrot.slane %v2213, %v2217
    %v2219 = vmul.f32 %v2218, %v2214
    %v2220 = vmul.f32 %v2219, 1.442695
    %v2221 = vpow.pop %v2220
    %v2222 = vmul.f32 %v2212, %v2221
    %v2223 = vadd.f32 %v2169, %v2222
    %v2224 = vld [vmem:[#allocation10 + $0x2c] sm:$0x1]
    %2225 = vset.pattern.permute.xlu0 44
    %2226 = vperm.xlu0 %2225, %v1034
    %v2227 = vpop.permute.xlu0 %2226
    %v2229 = vlaneseq
    %v2230 = vshrl.u32 %v2229, 7
    %v2231 = vsub.s32 0, %v2230
    %v2232 = vrot.slane %v2224, %v2231
    %v2233 = vsub.f32 %v2227, %v2232
    %v2234 = vld [vmem:[#allocation11 + $0x2c] sm:$0x1]
    %v2235 = vlaneseq
    %v2236 = vshrl.u32 %v2235, 7
    %v2237 = vsub.s32 0, %v2236
    %v2238 = vrot.slane %v2234, %v2237
    %v2239 = vmul.f32 %v2238, %v2233
    %v2240 = vld [vmem:[#allocation13 + $0x2c] sm:$0x1]
    %v2241 = vmul.f32 %v2233, %v2233
    %v2242 = vlaneseq
    %v2243 = vshrl.u32 %v2242, 7
    %v2244 = vsub.s32 0, %v2243
    %v2245 = vrot.slane %v2240, %v2244
    %v2246 = vmul.f32 %v2245, %v2241
    %v2247 = vmul.f32 %v2246, 1.442695
    %v2248 = vpow.pop %v2247
    %v2249 = vmul.f32 %v2239, %v2248
    %v2250 = vadd.f32 %v2196, %v2249
    %v2251 = vld [vmem:[#allocation10 + $0x2d] sm:$0x1]
    %2252 = vset.pattern.permute.xlu0 45
    %2253 = vperm.xlu0 %2252, %v1034
    %v2254 = vpop.permute.xlu0 %2253
    %v2256 = vlaneseq
    %v2257 = vshrl.u32 %v2256, 7
    %v2258 = vsub.s32 0, %v2257
    %v2259 = vrot.slane %v2251, %v2258
    %v2260 = vsub.f32 %v2254, %v2259
    %v2261 = vld [vmem:[#allocation11 + $0x2d] sm:$0x1]
    %v2262 = vlaneseq
    %v2263 = vshrl.u32 %v2262, 7
    %v2264 = vsub.s32 0, %v2263
    %v2265 = vrot.slane %v2261, %v2264
    %v2266 = vmul.f32 %v2265, %v2260
    %v2267 = vld [vmem:[#allocation13 + $0x2d] sm:$0x1]
    %v2268 = vmul.f32 %v2260, %v2260
    %v2269 = vlaneseq
    %v2270 = vshrl.u32 %v2269, 7
    %v2271 = vsub.s32 0, %v2270
    %v2272 = vrot.slane %v2267, %v2271
    %v2273 = vmul.f32 %v2272, %v2268
    %v2274 = vmul.f32 %v2273, 1.442695
    %v2275 = vpow.pop %v2274
    %v2276 = vmul.f32 %v2266, %v2275
    %v2277 = vadd.f32 %v2223, %v2276
    %v2278 = vld [vmem:[#allocation10 + $0x2e] sm:$0x1]
    %2279 = vset.pattern.permute.xlu0 46
    %2280 = vperm.xlu0 %2279, %v1034
    %v2281 = vpop.permute.xlu0 %2280
    %v2283 = vlaneseq
    %v2284 = vshrl.u32 %v2283, 7
    %v2285 = vsub.s32 0, %v2284
    %v2286 = vrot.slane %v2278, %v2285
    %v2287 = vsub.f32 %v2281, %v2286
    %v2288 = vld [vmem:[#allocation11 + $0x2e] sm:$0x1]
    %v2289 = vlaneseq
    %v2290 = vshrl.u32 %v2289, 7
    %v2291 = vsub.s32 0, %v2290
    %v2292 = vrot.slane %v2288, %v2291
    %v2293 = vmul.f32 %v2292, %v2287
    %v2294 = vld [vmem:[#allocation13 + $0x2e] sm:$0x1]
    %v2295 = vmul.f32 %v2287, %v2287
    %v2296 = vlaneseq
    %v2297 = vshrl.u32 %v2296, 7
    %v2298 = vsub.s32 0, %v2297
    %v2299 = vrot.slane %v2294, %v2298
    %v2300 = vmul.f32 %v2299, %v2295
    %v2301 = vmul.f32 %v2300, 1.442695
    %v2302 = vpow.pop %v2301
    %v2303 = vmul.f32 %v2293, %v2302
    %v2304 = vadd.f32 %v2250, %v2303
    %v2305 = vld [vmem:[#allocation10 + $0x2f] sm:$0x1]
    %2306 = vset.pattern.permute.xlu0 47
    %2307 = vperm.xlu0 %2306, %v1034
    %v2308 = vpop.permute.xlu0 %2307
    %v2310 = vlaneseq
    %v2311 = vshrl.u32 %v2310, 7
    %v2312 = vsub.s32 0, %v2311
    %v2313 = vrot.slane %v2305, %v2312
    %v2314 = vsub.f32 %v2308, %v2313
    %v2315 = vld [vmem:[#allocation11 + $0x2f] sm:$0x1]
    %v2316 = vlaneseq
    %v2317 = vshrl.u32 %v2316, 7
    %v2318 = vsub.s32 0, %v2317
    %v2319 = vrot.slane %v2315, %v2318
    %v2320 = vmul.f32 %v2319, %v2314
    %v2321 = vld [vmem:[#allocation13 + $0x2f] sm:$0x1]
    %v2322 = vmul.f32 %v2314, %v2314
    %v2323 = vlaneseq
    %v2324 = vshrl.u32 %v2323, 7
    %v2325 = vsub.s32 0, %v2324
    %v2326 = vrot.slane %v2321, %v2325
    %v2327 = vmul.f32 %v2326, %v2322
    %v2328 = vmul.f32 %v2327, 1.442695
    %v2329 = vpow.pop %v2328
    %v2330 = vmul.f32 %v2320, %v2329
    %v2331 = vadd.f32 %v2277, %v2330
    %v2332 = vld [vmem:[#allocation10 + $0x30] sm:$0x1]
    %2333 = vset.pattern.permute.xlu0 48
    %2334 = vperm.xlu0 %2333, %v1034
    %v2335 = vpop.permute.xlu0 %2334
    %v2337 = vlaneseq
    %v2338 = vshrl.u32 %v2337, 7
    %v2339 = vsub.s32 0, %v2338
    %v2340 = vrot.slane %v2332, %v2339
    %v2341 = vsub.f32 %v2335, %v2340
    %v2342 = vld [vmem:[#allocation11 + $0x30] sm:$0x1]
    %v2343 = vlaneseq
    %v2344 = vshrl.u32 %v2343, 7
    %v2345 = vsub.s32 0, %v2344
    %v2346 = vrot.slane %v2342, %v2345
    %v2347 = vmul.f32 %v2346, %v2341
    %v2348 = vld [vmem:[#allocation13 + $0x30] sm:$0x1]
    %v2349 = vmul.f32 %v2341, %v2341
    %v2350 = vlaneseq
    %v2351 = vshrl.u32 %v2350, 7
    %v2352 = vsub.s32 0, %v2351
    %v2353 = vrot.slane %v2348, %v2352
    %v2354 = vmul.f32 %v2353, %v2349
    %v2355 = vmul.f32 %v2354, 1.442695
    %v2356 = vpow.pop %v2355
    %v2357 = vmul.f32 %v2347, %v2356
    %v2358 = vadd.f32 %v2304, %v2357
    %v2359 = vld [vmem:[#allocation10 + $0x31] sm:$0x1]
    %2360 = vset.pattern.permute.xlu0 49
    %2361 = vperm.xlu0 %2360, %v1034
    %v2362 = vpop.permute.xlu0 %2361
    %v2364 = vlaneseq
    %v2365 = vshrl.u32 %v2364, 7
    %v2366 = vsub.s32 0, %v2365
    %v2367 = vrot.slane %v2359, %v2366
    %v2368 = vsub.f32 %v2362, %v2367
    %v2369 = vld [vmem:[#allocation11 + $0x31] sm:$0x1]
    %v2370 = vlaneseq
    %v2371 = vshrl.u32 %v2370, 7
    %v2372 = vsub.s32 0, %v2371
    %v2373 = vrot.slane %v2369, %v2372
    %v2374 = vmul.f32 %v2373, %v2368
    %v2375 = vld [vmem:[#allocation13 + $0x31] sm:$0x1]
    %v2376 = vmul.f32 %v2368, %v2368
    %v2377 = vlaneseq
    %v2378 = vshrl.u32 %v2377, 7
    %v2379 = vsub.s32 0, %v2378
    %v2380 = vrot.slane %v2375, %v2379
    %v2381 = vmul.f32 %v2380, %v2376
    %v2382 = vmul.f32 %v2381, 1.442695
    %v2383 = vpow.pop %v2382
    %v2384 = vmul.f32 %v2374, %v2383
    %v2385 = vadd.f32 %v2331, %v2384
    %v2386 = vld [vmem:[#allocation10 + $0x32] sm:$0x1]
    %2387 = vset.pattern.permute.xlu0 50
    %2388 = vperm.xlu0 %2387, %v1034
    %v2389 = vpop.permute.xlu0 %2388
    %v2391 = vlaneseq
    %v2392 = vshrl.u32 %v2391, 7
    %v2393 = vsub.s32 0, %v2392
    %v2394 = vrot.slane %v2386, %v2393
    %v2395 = vsub.f32 %v2389, %v2394
    %v2396 = vld [vmem:[#allocation11 + $0x32] sm:$0x1]
    %v2397 = vlaneseq
    %v2398 = vshrl.u32 %v2397, 7
    %v2399 = vsub.s32 0, %v2398
    %v2400 = vrot.slane %v2396, %v2399
    %v2401 = vmul.f32 %v2400, %v2395
    %v2402 = vld [vmem:[#allocation13 + $0x32] sm:$0x1]
    %v2403 = vmul.f32 %v2395, %v2395
    %v2404 = vlaneseq
    %v2405 = vshrl.u32 %v2404, 7
    %v2406 = vsub.s32 0, %v2405
    %v2407 = vrot.slane %v2402, %v2406
    %v2408 = vmul.f32 %v2407, %v2403
    %v2409 = vmul.f32 %v2408, 1.442695
    %v2410 = vpow.pop %v2409
    %v2411 = vmul.f32 %v2401, %v2410
    %v2412 = vadd.f32 %v2358, %v2411
    %v2413 = vld [vmem:[#allocation10 + $0x33] sm:$0x1]
    %2414 = vset.pattern.permute.xlu0 51
    %2415 = vperm.xlu0 %2414, %v1034
    %v2416 = vpop.permute.xlu0 %2415
    %v2418 = vlaneseq
    %v2419 = vshrl.u32 %v2418, 7
    %v2420 = vsub.s32 0, %v2419
    %v2421 = vrot.slane %v2413, %v2420
    %v2422 = vsub.f32 %v2416, %v2421
    %v2423 = vld [vmem:[#allocation11 + $0x33] sm:$0x1]
    %v2424 = vlaneseq
    %v2425 = vshrl.u32 %v2424, 7
    %v2426 = vsub.s32 0, %v2425
    %v2427 = vrot.slane %v2423, %v2426
    %v2428 = vmul.f32 %v2427, %v2422
    %v2429 = vld [vmem:[#allocation13 + $0x33] sm:$0x1]
    %v2430 = vmul.f32 %v2422, %v2422
    %v2431 = vlaneseq
    %v2432 = vshrl.u32 %v2431, 7
    %v2433 = vsub.s32 0, %v2432
    %v2434 = vrot.slane %v2429, %v2433
    %v2435 = vmul.f32 %v2434, %v2430
    %v2436 = vmul.f32 %v2435, 1.442695
    %v2437 = vpow.pop %v2436
    %v2438 = vmul.f32 %v2428, %v2437
    %v2439 = vadd.f32 %v2385, %v2438
    %v2440 = vld [vmem:[#allocation10 + $0x34] sm:$0x1]
    %2441 = vset.pattern.permute.xlu0 52
    %2442 = vperm.xlu0 %2441, %v1034
    %v2443 = vpop.permute.xlu0 %2442
    %v2445 = vlaneseq
    %v2446 = vshrl.u32 %v2445, 7
    %v2447 = vsub.s32 0, %v2446
    %v2448 = vrot.slane %v2440, %v2447
    %v2449 = vsub.f32 %v2443, %v2448
    %v2450 = vld [vmem:[#allocation11 + $0x34] sm:$0x1]
    %v2451 = vlaneseq
    %v2452 = vshrl.u32 %v2451, 7
    %v2453 = vsub.s32 0, %v2452
    %v2454 = vrot.slane %v2450, %v2453
    %v2455 = vmul.f32 %v2454, %v2449
    %v2456 = vld [vmem:[#allocation13 + $0x34] sm:$0x1]
    %v2457 = vmul.f32 %v2449, %v2449
    %v2458 = vlaneseq
    %v2459 = vshrl.u32 %v2458, 7
    %v2460 = vsub.s32 0, %v2459
    %v2461 = vrot.slane %v2456, %v2460
    %v2462 = vmul.f32 %v2461, %v2457
    %v2463 = vmul.f32 %v2462, 1.442695
    %v2464 = vpow.pop %v2463
    %v2465 = vmul.f32 %v2455, %v2464
    %v2466 = vadd.f32 %v2412, %v2465
    %v2467 = vld [vmem:[#allocation10 + $0x35] sm:$0x1]
    %2468 = vset.pattern.permute.xlu0 53
    %2469 = vperm.xlu0 %2468, %v1034
    %v2470 = vpop.permute.xlu0 %2469
    %v2472 = vlaneseq
    %v2473 = vshrl.u32 %v2472, 7
    %v2474 = vsub.s32 0, %v2473
    %v2475 = vrot.slane %v2467, %v2474
    %v2476 = vsub.f32 %v2470, %v2475
    %v2477 = vld [vmem:[#allocation11 + $0x35] sm:$0x1]
    %v2478 = vlaneseq
    %v2479 = vshrl.u32 %v2478, 7
    %v2480 = vsub.s32 0, %v2479
    %v2481 = vrot.slane %v2477, %v2480
    %v2482 = vmul.f32 %v2481, %v2476
    %v2483 = vld [vmem:[#allocation13 + $0x35] sm:$0x1]
    %v2484 = vmul.f32 %v2476, %v2476
    %v2485 = vlaneseq
    %v2486 = vshrl.u32 %v2485, 7
    %v2487 = vsub.s32 0, %v2486
    %v2488 = vrot.slane %v2483, %v2487
    %v2489 = vmul.f32 %v2488, %v2484
    %v2490 = vmul.f32 %v2489, 1.442695
    %v2491 = vpow.pop %v2490
    %v2492 = vmul.f32 %v2482, %v2491
    %v2493 = vadd.f32 %v2439, %v2492
    %v2494 = vld [vmem:[#allocation10 + $0x36] sm:$0x1]
    %2495 = vset.pattern.permute.xlu0 54
    %2496 = vperm.xlu0 %2495, %v1034
    %v2497 = vpop.permute.xlu0 %2496
    %v2499 = vlaneseq
    %v2500 = vshrl.u32 %v2499, 7
    %v2501 = vsub.s32 0, %v2500
    %v2502 = vrot.slane %v2494, %v2501
    %v2503 = vsub.f32 %v2497, %v2502
    %v2504 = vld [vmem:[#allocation11 + $0x36] sm:$0x1]
    %v2505 = vlaneseq
    %v2506 = vshrl.u32 %v2505, 7
    %v2507 = vsub.s32 0, %v2506
    %v2508 = vrot.slane %v2504, %v2507
    %v2509 = vmul.f32 %v2508, %v2503
    %v2510 = vld [vmem:[#allocation13 + $0x36] sm:$0x1]
    %v2511 = vmul.f32 %v2503, %v2503
    %v2512 = vlaneseq
    %v2513 = vshrl.u32 %v2512, 7
    %v2514 = vsub.s32 0, %v2513
    %v2515 = vrot.slane %v2510, %v2514
    %v2516 = vmul.f32 %v2515, %v2511
    %v2517 = vmul.f32 %v2516, 1.442695
    %v2518 = vpow.pop %v2517
    %v2519 = vmul.f32 %v2509, %v2518
    %v2520 = vadd.f32 %v2466, %v2519
    %v2521 = vld [vmem:[#allocation10 + $0x37] sm:$0x1]
    %2522 = vset.pattern.permute.xlu0 55
    %2523 = vperm.xlu0 %2522, %v1034
    %v2524 = vpop.permute.xlu0 %2523
    %v2526 = vlaneseq
    %v2527 = vshrl.u32 %v2526, 7
    %v2528 = vsub.s32 0, %v2527
    %v2529 = vrot.slane %v2521, %v2528
    %v2530 = vsub.f32 %v2524, %v2529
    %v2531 = vld [vmem:[#allocation11 + $0x37] sm:$0x1]
    %v2532 = vlaneseq
    %v2533 = vshrl.u32 %v2532, 7
    %v2534 = vsub.s32 0, %v2533
    %v2535 = vrot.slane %v2531, %v2534
    %v2536 = vmul.f32 %v2535, %v2530
    %v2537 = vld [vmem:[#allocation13 + $0x37] sm:$0x1]
    %v2538 = vmul.f32 %v2530, %v2530
    %v2539 = vlaneseq
    %v2540 = vshrl.u32 %v2539, 7
    %v2541 = vsub.s32 0, %v2540
    %v2542 = vrot.slane %v2537, %v2541
    %v2543 = vmul.f32 %v2542, %v2538
    %v2544 = vmul.f32 %v2543, 1.442695
    %v2545 = vpow.pop %v2544
    %v2546 = vmul.f32 %v2536, %v2545
    %v2547 = vadd.f32 %v2493, %v2546
    %v2548 = vld [vmem:[#allocation10 + $0x38] sm:$0x1]
    %2549 = vset.pattern.permute.xlu0 56
    %2550 = vperm.xlu0 %2549, %v1034
    %v2551 = vpop.permute.xlu0 %2550
    %v2553 = vlaneseq
    %v2554 = vshrl.u32 %v2553, 7
    %v2555 = vsub.s32 0, %v2554
    %v2556 = vrot.slane %v2548, %v2555
    %v2557 = vsub.f32 %v2551, %v2556
    %v2558 = vld [vmem:[#allocation11 + $0x38] sm:$0x1]
    %v2559 = vlaneseq
    %v2560 = vshrl.u32 %v2559, 7
    %v2561 = vsub.s32 0, %v2560
    %v2562 = vrot.slane %v2558, %v2561
    %v2563 = vmul.f32 %v2562, %v2557
    %v2564 = vld [vmem:[#allocation13 + $0x38] sm:$0x1]
    %v2565 = vmul.f32 %v2557, %v2557
    %v2566 = vlaneseq
    %v2567 = vshrl.u32 %v2566, 7
    %v2568 = vsub.s32 0, %v2567
    %v2569 = vrot.slane %v2564, %v2568
    %v2570 = vmul.f32 %v2569, %v2565
    %v2571 = vmul.f32 %v2570, 1.442695
    %v2572 = vpow.pop %v2571
    %v2573 = vmul.f32 %v2563, %v2572
    %v2574 = vadd.f32 %v2520, %v2573
    %v2575 = vld [vmem:[#allocation10 + $0x39] sm:$0x1]
    %2576 = vset.pattern.permute.xlu0 57
    %2577 = vperm.xlu0 %2576, %v1034
    %v2578 = vpop.permute.xlu0 %2577
    %v2580 = vlaneseq
    %v2581 = vshrl.u32 %v2580, 7
    %v2582 = vsub.s32 0, %v2581
    %v2583 = vrot.slane %v2575, %v2582
    %v2584 = vsub.f32 %v2578, %v2583
    %v2585 = vld [vmem:[#allocation11 + $0x39] sm:$0x1]
    %v2586 = vlaneseq
    %v2587 = vshrl.u32 %v2586, 7
    %v2588 = vsub.s32 0, %v2587
    %v2589 = vrot.slane %v2585, %v2588
    %v2590 = vmul.f32 %v2589, %v2584
    %v2591 = vld [vmem:[#allocation13 + $0x39] sm:$0x1]
    %v2592 = vmul.f32 %v2584, %v2584
    %v2593 = vlaneseq
    %v2594 = vshrl.u32 %v2593, 7
    %v2595 = vsub.s32 0, %v2594
    %v2596 = vrot.slane %v2591, %v2595
    %v2597 = vmul.f32 %v2596, %v2592
    %v2598 = vmul.f32 %v2597, 1.442695
    %v2599 = vpow.pop %v2598
    %v2600 = vmul.f32 %v2590, %v2599
    %v2601 = vadd.f32 %v2547, %v2600
    %v2602 = vld [vmem:[#allocation10 + $0x3a] sm:$0x1]
    %2603 = vset.pattern.permute.xlu0 58
    %2604 = vperm.xlu0 %2603, %v1034
    %v2605 = vpop.permute.xlu0 %2604
    %v2607 = vlaneseq
    %v2608 = vshrl.u32 %v2607, 7
    %v2609 = vsub.s32 0, %v2608
    %v2610 = vrot.slane %v2602, %v2609
    %v2611 = vsub.f32 %v2605, %v2610
    %v2612 = vld [vmem:[#allocation11 + $0x3a] sm:$0x1]
    %v2613 = vlaneseq
    %v2614 = vshrl.u32 %v2613, 7
    %v2615 = vsub.s32 0, %v2614
    %v2616 = vrot.slane %v2612, %v2615
    %v2617 = vmul.f32 %v2616, %v2611
    %v2618 = vld [vmem:[#allocation13 + $0x3a] sm:$0x1]
    %v2619 = vmul.f32 %v2611, %v2611
    %v2620 = vlaneseq
    %v2621 = vshrl.u32 %v2620, 7
    %v2622 = vsub.s32 0, %v2621
    %v2623 = vrot.slane %v2618, %v2622
    %v2624 = vmul.f32 %v2623, %v2619
    %v2625 = vmul.f32 %v2624, 1.442695
    %v2626 = vpow.pop %v2625
    %v2627 = vmul.f32 %v2617, %v2626
    %v2628 = vadd.f32 %v2574, %v2627
    %v2629 = vld [vmem:[#allocation10 + $0x3b] sm:$0x1]
    %2630 = vset.pattern.permute.xlu0 59
    %2631 = vperm.xlu0 %2630, %v1034
    %v2632 = vpop.permute.xlu0 %2631
    %v2634 = vlaneseq
    %v2635 = vshrl.u32 %v2634, 7
    %v2636 = vsub.s32 0, %v2635
    %v2637 = vrot.slane %v2629, %v2636
    %v2638 = vsub.f32 %v2632, %v2637
    %v2639 = vld [vmem:[#allocation11 + $0x3b] sm:$0x1]
    %v2640 = vlaneseq
    %v2641 = vshrl.u32 %v2640, 7
    %v2642 = vsub.s32 0, %v2641
    %v2643 = vrot.slane %v2639, %v2642
    %v2644 = vmul.f32 %v2643, %v2638
    %v2645 = vld [vmem:[#allocation13 + $0x3b] sm:$0x1]
    %v2646 = vmul.f32 %v2638, %v2638
    %v2647 = vlaneseq
    %v2648 = vshrl.u32 %v2647, 7
    %v2649 = vsub.s32 0, %v2648
    %v2650 = vrot.slane %v2645, %v2649
    %v2651 = vmul.f32 %v2650, %v2646
    %v2652 = vmul.f32 %v2651, 1.442695
    %v2653 = vpow.pop %v2652
    %v2654 = vmul.f32 %v2644, %v2653
    %v2655 = vadd.f32 %v2601, %v2654
    %v2656 = vld [vmem:[#allocation10 + $0x3c] sm:$0x1]
    %2657 = vset.pattern.permute.xlu0 60
    %2658 = vperm.xlu0 %2657, %v1034
    %v2659 = vpop.permute.xlu0 %2658
    %v2661 = vlaneseq
    %v2662 = vshrl.u32 %v2661, 7
    %v2663 = vsub.s32 0, %v2662
    %v2664 = vrot.slane %v2656, %v2663
    %v2665 = vsub.f32 %v2659, %v2664
    %v2666 = vld [vmem:[#allocation11 + $0x3c] sm:$0x1]
    %v2667 = vlaneseq
    %v2668 = vshrl.u32 %v2667, 7
    %v2669 = vsub.s32 0, %v2668
    %v2670 = vrot.slane %v2666, %v2669
    %v2671 = vmul.f32 %v2670, %v2665
    %v2672 = vld [vmem:[#allocation13 + $0x3c] sm:$0x1]
    %v2673 = vmul.f32 %v2665, %v2665
    %v2674 = vlaneseq
    %v2675 = vshrl.u32 %v2674, 7
    %v2676 = vsub.s32 0, %v2675
    %v2677 = vrot.slane %v2672, %v2676
    %v2678 = vmul.f32 %v2677, %v2673
    %v2679 = vmul.f32 %v2678, 1.442695
    %v2680 = vpow.pop %v2679
    %v2681 = vmul.f32 %v2671, %v2680
    %v2682 = vadd.f32 %v2628, %v2681
    %v2683 = vld [vmem:[#allocation10 + $0x3d] sm:$0x1]
    %2684 = vset.pattern.permute.xlu0 61
    %2685 = vperm.xlu0 %2684, %v1034
    %v2686 = vpop.permute.xlu0 %2685
    %v2688 = vlaneseq
    %v2689 = vshrl.u32 %v2688, 7
    %v2690 = vsub.s32 0, %v2689
    %v2691 = vrot.slane %v2683, %v2690
    %v2692 = vsub.f32 %v2686, %v2691
    %v2693 = vld [vmem:[#allocation11 + $0x3d] sm:$0x1]
    %v2694 = vlaneseq
    %v2695 = vshrl.u32 %v2694, 7
    %v2696 = vsub.s32 0, %v2695
    %v2697 = vrot.slane %v2693, %v2696
    %v2698 = vmul.f32 %v2697, %v2692
    %v2699 = vld [vmem:[#allocation13 + $0x3d] sm:$0x1]
    %v2700 = vmul.f32 %v2692, %v2692
    %v2701 = vlaneseq
    %v2702 = vshrl.u32 %v2701, 7
    %v2703 = vsub.s32 0, %v2702
    %v2704 = vrot.slane %v2699, %v2703
    %v2705 = vmul.f32 %v2704, %v2700
    %v2706 = vmul.f32 %v2705, 1.442695
    %v2707 = vpow.pop %v2706
    %v2708 = vmul.f32 %v2698, %v2707
    %v2709 = vadd.f32 %v2655, %v2708
    %v2710 = vld [vmem:[#allocation10 + $0x3e] sm:$0x1]
    %2711 = vset.pattern.permute.xlu0 62
    %2712 = vperm.xlu0 %2711, %v1034
    %v2713 = vpop.permute.xlu0 %2712
    %v2715 = vlaneseq
    %v2716 = vshrl.u32 %v2715, 7
    %v2717 = vsub.s32 0, %v2716
    %v2718 = vrot.slane %v2710, %v2717
    %v2719 = vsub.f32 %v2713, %v2718
    %v2720 = vld [vmem:[#allocation11 + $0x3e] sm:$0x1]
    %v2721 = vlaneseq
    %v2722 = vshrl.u32 %v2721, 7
    %v2723 = vsub.s32 0, %v2722
    %v2724 = vrot.slane %v2720, %v2723
    %v2725 = vmul.f32 %v2724, %v2719
    %v2726 = vld [vmem:[#allocation13 + $0x3e] sm:$0x1]
    %v2727 = vmul.f32 %v2719, %v2719
    %v2728 = vlaneseq
    %v2729 = vshrl.u32 %v2728, 7
    %v2730 = vsub.s32 0, %v2729
    %v2731 = vrot.slane %v2726, %v2730
    %v2732 = vmul.f32 %v2731, %v2727
    %v2733 = vmul.f32 %v2732, 1.442695
    %v2734 = vpow.pop %v2733
    %v2735 = vmul.f32 %v2725, %v2734
    %v2736 = vadd.f32 %v2682, %v2735
    %v2737 = vld [vmem:[#allocation10 + $0x3f] sm:$0x1]
    %2738 = vset.pattern.permute.xlu0 63
    %2739 = vperm.xlu0 %2738, %v1034
    %v2740 = vpop.permute.xlu0 %2739
    %v2742 = vlaneseq
    %v2743 = vshrl.u32 %v2742, 7
    %v2744 = vsub.s32 0, %v2743
    %v2745 = vrot.slane %v2737, %v2744
    %v2746 = vsub.f32 %v2740, %v2745
    %v2747 = vld [vmem:[#allocation11 + $0x3f] sm:$0x1]
    %v2748 = vlaneseq
    %v2749 = vshrl.u32 %v2748, 7
    %v2750 = vsub.s32 0, %v2749
    %v2751 = vrot.slane %v2747, %v2750
    %v2752 = vmul.f32 %v2751, %v2746
    %v2753 = vld [vmem:[#allocation13 + $0x3f] sm:$0x1]
    %v2754 = vmul.f32 %v2746, %v2746
    %v2755 = vlaneseq
    %v2756 = vshrl.u32 %v2755, 7
    %v2757 = vsub.s32 0, %v2756
    %v2758 = vrot.slane %v2753, %v2757
    %v2759 = vmul.f32 %v2758, %v2754
    %v2760 = vmul.f32 %v2759, 1.442695
    %v2761 = vpow.pop %v2760
    %v2762 = vmul.f32 %v2752, %v2761
    %v2763 = vadd.f32 %v2709, %v2762
    %v2764 = vadd.f32 %v2736, %v2763
    %v2765 = vrot.slane %v2764, 4
    %v2766 = vadd.f32 %v2764, %v2765
    %v2767 = vrot.slane %v2766, 2
    %v2768 = vadd.f32 %v2766, %v2767
    %v2769 = vrot.slane %v2768, 1
    %v2770 = vadd.f32 %v2768, %v2769
    %v2771 = vmul.f32 %v2770, %v1005
    %v2772 = vsub.f32 %v2764, %v2771
    %v2773 = vmul.f32 %v2772, %v2772
    %v2774 = vrot.slane %v2773, 4
    %v2775 = vadd.f32 %v2773, %v2774
    %v2776 = vrot.slane %v2775, 2
    %v2777 = vadd.f32 %v2775, %v2776
    %v2778 = vrot.slane %v2777, 1
    %v2779 = vadd.f32 %v2777, %v2778
    %v2780 = vmul.f32 %v2779, %v1005
    %v2781 = vadd.f32 %v2780, 1e-05
    %v2782 = vrsqrt.pop %v2781
    %v2783 = vmul.f32 %v2772, %v2782
    %v2784 = vld [vmem:[%s9] sm:$0x1]
    %v2786 = vlaneseq
    %v2787 = vshrl.u32 %v2786, 7
    %v2788 = vsub.s32 0, %v2787
    %v2789 = vrot.slane %v2784, %v2788
    %v2791 = vmul.f32 %v2783, %v2789
    %v2792 = vld [vmem:[%s10] sm:$0x1]
    %v2794 = vlaneseq
    %v2795 = vshrl.u32 %v2794, 7
    %v2796 = vsub.s32 0, %v2795
    %v2797 = vrot.slane %v2792, %v2796
    %v2799 = vadd.f32 %v2791, %v2797
    %2800 = vst [vmem:[#allocation14] sm:$0xff] %v2799
    // Predicated region
    $region74: #{tpu_custom_call.1} parent=1 // pred_check
      _
    $region75: #{tpu_custom_call.1} parent=1 // pred_check_branch
      %2802 = sbr.rel (0) target = $region77
    $region76: #{tpu_custom_call.1} parent=1 // pred_region
      %s2804 = ssub.s32 128, 128
      %2805 = vsyncadd [#allocation4], %s2804
      %s2807 = sshll.u32 [#allocation14], 4
      %s2808 = int_to_ptr.vmem [resolvable:$true] %s2807
      %2810 = dma.vmem_to_hbm [thread:$0]  %s2808, 128, %s11, [#allocation4]
    $region77: #{tpu_custom_call.1} parent=1 // pred_fallthru
      _
    // Predicated region
    $region78: #{tpu_custom_call.1} parent=1 // pred_check
      _
    $region79: #{tpu_custom_call.1} parent=1 // pred_check_branch
      %2812 = sbr.rel (0) target = $region81
    $region80: #{tpu_custom_call.1} parent=1 // pred_region
      %2813 = dma.done [#allocation4], 128
    $region81: #{tpu_custom_call.1} parent=1 // pred_fallthru
      _
    %2814 = vsyncpa [#allocation3], 1
    %2815 = vsyncpa [#allocation6], 1
    %2816 = vsyncpa [#allocation9], 1
    %2817 = vsyncpa [#allocation12], 1
    %2818 = vsyncpa [#allocation4], 1

</llo_original>
